<compile_context>
chip_gen: v5e
topology: v5e:2x2
jax: 0.10.0
libtpu: 0.0.40
codegen_flags: <defaults>
</compile_context>

<pallas_src>
import functools
import math

import jax
import jax.numpy as jnp
from jax import lax
from jax.experimental import pallas as pl
from jax.experimental.pallas import tpu as pltpu


_LM = 8  # left column margin inside pad scratches -> sublane-aligned interior


# ---------------------------------------------------------------------------
# In-kernel helpers
# ---------------------------------------------------------------------------

def _zero_halo(pad_ref, *, rows, cols, p, c):
    """Zero only the p-wide halo strips around the interior
    [p:p+rows, _LM:_LM+cols, :] of a pad scratch (per grid step)."""
    z_row = jnp.zeros((p, cols + 2 * p, c), jnp.float32)
    pad_ref[0:p, _LM - p:_LM + cols + p, :] = z_row
    pad_ref[p + rows:p + rows + p, _LM - p:_LM + cols + p, :] = z_row
    z_col = jnp.zeros((rows, p, c), jnp.float32)
    pad_ref[p:p + rows, _LM - p:_LM, :] = z_col
    pad_ref[p:p + rows, _LM + cols:_LM + cols + p, :] = z_col


def _dw_from_pad(pad_ref, w_ref, *, k, p, stride, ho, wo):
    """k x k depthwise conv read straight from a halo-padded scratch whose
    interior sits at [p:p+H, _LM:_LM+W, :]; strided pl.ds taps for stride 2."""
    acc = None
    for t in range(k * k):
        di, dj = t // k, t % k
        si = pl.ds(di, ho) if stride == 1 else pl.ds(di, ho, stride)
        cj = _LM - p + dj
        sj = pl.ds(cj, wo) if stride == 1 else pl.ds(cj, wo, stride)
        term = pad_ref[si, sj, :] * w_ref[t]
        acc = term if acc is None else acc + term
    return acc


# ---------------------------------------------------------------------------
# Pallas kernels (grid over batch, one image per step)
# ---------------------------------------------------------------------------

def _ghost1_kernel(*refs, H, W, c1, hidden, stride, k):
    """GhostModule #1 (relu=True) with the optional stride-2 depthwise k x k
    conv + BN fused in (the full-res intermediate never leaves VMEM)."""
    it = iter(refs)
    x_ref = next(it)                       # (H, W, cin)
    wp_ref = next(it)                      # (cin, c1)
    sp_ref = next(it)                      # (1, c1)
    bp_ref = next(it)                      # (1, c1)
    wc_ref = next(it)                      # (9, 1, c1)
    sc_ref = next(it)                      # (1, c1)
    bc_ref = next(it)                      # (1, c1)
    if stride == 2:
        wd_ref = next(it)                  # (k*k, 1, hidden)
        sd_ref = next(it)                  # (1, hidden)
        bd_ref = next(it)                  # (1, hidden)
    o_ref = next(it)                       # (ho, wo, hidden)
    pad_c = next(it)                       # (H+2, _LM+W+1, c1)
    if stride == 2:
        pad_d = next(it)                   # (H+2p, _LM+W+p, hidden)

    cin = x_ref.shape[-1]

    # primary 1x1 conv + BN + ReLU
    x2d = x_ref[...].reshape(H * W, cin)
    x1 = jnp.dot(x2d, wp_ref[...], preferred_element_type=jnp.float32)
    x1 = jnp.maximum(x1 * sp_ref[...] + bp_ref[...], 0.0)
    x1_3d = x1.reshape(H, W, c1)

    # cheap depthwise 3x3 (stride 1) + BN + ReLU via halo scratch
    _zero_halo(pad_c, rows=H, cols=W, p=1, c=c1)
    pad_c[1:1 + H, _LM:_LM + W, :] = x1_3d            # aligned interior store
    acc = _dw_from_pad(pad_c, wc_ref, k=3, p=1, stride=1, ho=H, wo=W)
    x2 = jnp.maximum(acc * sc_ref[...] + bc_ref[...], 0.0)

    h = jnp.concatenate([x1_3d, x2], axis=-1)[:, :, :hidden]

    if stride == 1:
        o_ref[...] = h.astype(o_ref.dtype)
    else:
        # fused depthwise k x k, stride 2, + BN (no ReLU per spec)
        p = k // 2
        ho = (H - 1) // 2 + 1
        wo = (W - 1) // 2 + 1
        _zero_halo(pad_d, rows=H, cols=W, p=p, c=hidden)
        pad_d[p:p + H, _LM:_LM + W, :] = h
        accd = _dw_from_pad(pad_d, wd_ref, k=k, p=p, stride=2, ho=ho, wo=wo)
        y = accd * sd_ref[...] + bd_ref[...]
        o_ref[...] = y.astype(o_ref.dtype)


def _ghost2_kernel(*refs, ho, wo, c2, oup, H, W, stride, has_se, identity):
    """GhostModule #2 (relu=False) with the SE gate computed in-kernel and the
    residual (identity or full shortcut branch) fused into the final store."""
    it = iter(refs)
    h_ref = next(it)                       # (ho, wo, hidden)
    wp_ref = next(it)                      # (hidden, c2)
    sp_ref = next(it)                      # (1, c2)
    bp_ref = next(it)                      # (1, c2)
    wc_ref = next(it)                      # (9, 1, c2)
    sc_ref = next(it)                      # (1, c2)
    bc_ref = next(it)                      # (1, c2)
    if has_se:
        w1_ref = next(it)                  # (hidden, mid)
        b1_ref = next(it)                  # (1, mid)
        w2_ref = next(it)                  # (mid, hidden)
        b2_ref = next(it)                  # (1, hidden)
    x_ref = next(it)                       # identity: (ho,wo,oup) else (H,W,inp)
    if not identity:
        wsd_ref = next(it)                 # (9, 1, inp)
        ssd_ref = next(it)                 # (1, inp)
        bsd_ref = next(it)                 # (1, inp)
        wsp_ref = next(it)                 # (inp, oup)
        ssp_ref = next(it)                 # (1, oup)
        bsp_ref = next(it)                 # (1, oup)
    o_ref = next(it)                       # (ho, wo, oup)
    pad_c = next(it)                       # (ho+2, _LM+wo+1, c2)
    if not identity:
        pad_s = next(it)                   # (H+2, _LM+W+1, inp)

    hidden = h_ref.shape[-1]
    h2d = h_ref[...].reshape(ho * wo, hidden)

    if has_se:
        # SE fused: squeeze (mean over H,W) + two tiny FCs + clamp gate.
        # The gate commutes through the (linear) primary 1x1 conv, so we fold
        # it into the matmul input instead of materializing gated h.
        pooled = jnp.mean(h2d, axis=0, keepdims=True)                 # (1, hidden)
        hid = jnp.dot(pooled, w1_ref[...],
                      preferred_element_type=jnp.float32) + b1_ref[...]
        hid = jnp.maximum(hid, 0.0)
        gate = jnp.dot(hid, w2_ref[...],
                       preferred_element_type=jnp.float32) + b2_ref[...]
        gate = jnp.clip(gate, 0.0, 1.0)
        h2d = h2d * gate

    # primary 1x1 conv + BN (no ReLU)
    x1 = jnp.dot(h2d, wp_ref[...], preferred_element_type=jnp.float32)
    x1 = x1 * sp_ref[...] + bp_ref[...]
    x1_3d = x1.reshape(ho, wo, c2)

    # cheap depthwise 3x3 + BN (no ReLU)
    _zero_halo(pad_c, rows=ho, cols=wo, p=1, c=c2)
    pad_c[1:1 + ho, _LM:_LM + wo, :] = x1_3d
    acc = _dw_from_pad(pad_c, wc_ref, k=3, p=1, stride=1, ho=ho, wo=wo)
    x2 = acc * sc_ref[...] + bc_ref[...]

    out = jnp.concatenate([x1_3d, x2], axis=-1)[:, :, :oup]

    # residual, fused
    if identity:
        out = out + x_ref[...]
    else:
        cin = x_ref.shape[-1]
        _zero_halo(pad_s, rows=H, cols=W, p=1, c=cin)
        pad_s[1:1 + H, _LM:_LM + W, :] = x_ref[...]
        asc = _dw_from_pad(pad_s, wsd_ref, k=3, p=1, stride=stride, ho=ho, wo=wo)
        t1 = jnp.maximum(asc * ssd_ref[...] + bsd_ref[...], 0.0)     # relu=True
        t2 = jnp.dot(t1.reshape(ho * wo, cin), wsp_ref[...],
                     preferred_element_type=jnp.float32)
        t2 = t2 * ssp_ref[...] + bsp_ref[...]
        out = out + t2.reshape(ho, wo, oup)

    o_ref[...] = out.astype(o_ref.dtype)


# ---------------------------------------------------------------------------
# Wrappers (grid over batch, parallel)
# ---------------------------------------------------------------------------

def _parallel():
    return pltpu.CompilerParams(dimension_semantics=("parallel",))


def _rep(shape):
    """BlockSpec for a weight replicated across the batch grid."""
    zeros = (0,) * len(shape)
    return pl.BlockSpec(shape, lambda b, _z=zeros: _z)


def ghost1_call(x, g1, dw=None, *, hidden, stride, k):
    n, H, W, cin = x.shape
    c1 = g1['wp'].shape[-1]
    ho = (H - 1) // stride + 1
    wo = (W - 1) // stride + 1
    wc = g1['wc'].reshape(9, 1, c1)

    inputs = [x, g1['wp'], g1['sp'], g1['bp'], wc, g1['sc'], g1['bc']]
    in_specs = [
        pl.BlockSpec((None, H, W, cin), lambda b: (b, 0, 0, 0)),
        _rep((cin, c1)), _rep((1, c1)), _rep((1, c1)),
        _rep((9, 1, c1)), _rep((1, c1)), _rep((1, c1)),
    ]
    scratch = [pltpu.VMEM((H + 2, _LM + W + 1, c1), jnp.float32)]
    if stride == 2:
        p = k // 2
        wd = dw['w'].reshape(k * k, 1, hidden)
        inputs += [wd, dw['s'], dw['b']]
        in_specs += [_rep((k * k, 1, hidden)), _rep((1, hidden)), _rep((1, hidden))]
        scratch.append(pltpu.VMEM((H + 2 * p, _LM + W + p, hidden), jnp.float32))

    kernel = functools.partial(_ghost1_kernel, H=H, W=W, c1=c1, hidden=hidden,
                               stride=stride, k=k)
    return pl.pallas_call(
        kernel,
        out_shape=jax.ShapeDtypeStruct((n, ho, wo, hidden), jnp.float32),
        grid=(n,),
        in_specs=in_specs,
        out_specs=pl.BlockSpec((None, ho, wo, hidden), lambda b: (b, 0, 0, 0)),
        scratch_shapes=scratch,
        compiler_params=_parallel(),
    )(*inputs)


def ghost2_call(h, x, g2, se=None, sc=None, *, oup, stride, identity):
    n, ho, wo, hidden = h.shape
    _, H, W, cin = x.shape
    c2 = g2['wp'].shape[-1]
    wc = g2['wc'].reshape(9, 1, c2)
    has_se = se is not None

    inputs = [h, g2['wp'], g2['sp'], g2['bp'], wc, g2['sc'], g2['bc']]
    in_specs = [
        pl.BlockSpec((None, ho, wo, hidden), lambda b: (b, 0, 0, 0)),
        _rep((hidden, c2)), _rep((1, c2)), _rep((1, c2)),
        _rep((9, 1, c2)), _rep((1, c2)), _rep((1, c2)),
    ]
    if has_se:
        mid = se['w1'].shape[-1]
        inputs += [se['w1'], se['b1'], se['w2'], se['b2']]
        in_specs += [_rep((hidden, mid)), _rep((1, mid)),
                     _rep((mid, hidden)), _rep((1, hidden))]
    inputs.append(x)
    in_specs.append(pl.BlockSpec((None, H, W, cin), lambda b: (b, 0, 0, 0)))

    scratch = [pltpu.VMEM((ho + 2, _LM + wo + 1, c2), jnp.float32)]
    if not identity:
        wsd = sc['w_dw'].reshape(9, 1, cin)
        inputs += [wsd, sc['s_dw'], sc['b_dw'], sc['w_pw'], sc['s_pw'], sc['b_pw']]
        in_specs += [_rep((9, 1, cin)), _rep((1, cin)), _rep((1, cin)),
                     _rep((cin, oup)), _rep((1, oup)), _rep((1, oup))]
        scratch.append(pltpu.VMEM((H + 2, _LM + W + 1, cin), jnp.float32))

    kernel = functools.partial(_ghost2_kernel, ho=ho, wo=wo, c2=c2, oup=oup,
                               H=H, W=W, stride=stride, has_se=has_se,
                               identity=identity)
    return pl.pallas_call(
        kernel,
        out_shape=jax.ShapeDtypeStruct((n, ho, wo, oup), jnp.float32),
        grid=(n,),
        in_specs=in_specs,
        out_specs=pl.BlockSpec((None, ho, wo, oup), lambda b: (b, 0, 0, 0)),
        scratch_shapes=scratch,
        compiler_params=_parallel(),
    )(*inputs)


# ---------------------------------------------------------------------------
# GhostBottleneck forward (exactly 2 pallas_calls)
# ---------------------------------------------------------------------------

def ghost_bottleneck(x, params, cfg):
    """x: (N, H, W, inp) NHWC -> (N, H/stride, W/stride, oup)."""
    inp = x.shape[-1]
    stride, use_se, oup, k = cfg['stride'], cfg['use_se'], cfg['oup'], cfg['k']
    hidden = cfg['hidden']
    identity = (stride == 1 and inp == oup)

    dw = None
    if stride == 2:
        dw = dict(w=params['w_dw'], s=params['s_dw'], b=params['b_dw'])
    h = ghost1_call(x, params['ghost1'], dw, hidden=hidden, stride=stride, k=k)

    se = params['se'] if use_se else None
    sc = None
    if not identity:
        sc = dict(w_dw=params['w_sc_dw'], s_dw=params['s_sc_dw'],
                  b_dw=params['b_sc_dw'], w_pw=params['w_sc_pw'],
                  s_pw=params['s_sc_pw'], b_pw=params['b_sc_pw'])
    return ghost2_call(h, x, params['ghost2'], se, sc, oup=oup, stride=stride,
                       identity=identity)


def ghost_bottleneck_nchw(x_nchw, params, cfg):
    x = jnp.transpose(x_nchw, (0, 2, 3, 1)).astype(jnp.float32)
    y = ghost_bottleneck(x, params, cfg)
    return jnp.transpose(y, (0, 3, 1, 2))


# ---------------------------------------------------------------------------
# Deterministic synthetic parameters
# ---------------------------------------------------------------------------

def _init_bn(key, c):
    k1, k2 = jax.random.split(key)
    scale = 1.0 + 0.05 * jax.random.normal(k1, (1, c), jnp.float32)
    shift = 0.05 * jax.random.normal(k2, (1, c), jnp.float32)
    return scale, shift


def _init_ghost(key, inp, oup):
    c1 = int(math.ceil(oup / 2))
    ks = jax.random.split(key, 4)
    sp, bp = _init_bn(ks[1], c1)
    sc, bc = _init_bn(ks[3], c1)
    return dict(
        wp=(1.0 / math.sqrt(inp)) * jax.random.normal(ks[0], (inp, c1), jnp.float32),
        sp=sp, bp=bp,
        wc=(1.0 / 3.0) * jax.random.normal(ks[2], (3, 3, c1), jnp.float32),
        sc=sc, bc=bc)


def init_bottleneck(key, cfg):
    inp, hidden, oup = cfg['inp'], cfg['hidden'], cfg['oup']
    k, stride, use_se = cfg['k'], cfg['stride'], cfg['use_se']
    ks = jax.random.split(key, 8)
    p = {'ghost1': _init_ghost(ks[0], inp, hidden),
         'ghost2': _init_ghost(ks[1], hidden, oup)}
    if stride == 2:
        p['w_dw'] = (1.0 / k) * jax.random.normal(ks[2], (k, k, hidden), jnp.float32)
        p['s_dw'], p['b_dw'] = _init_bn(ks[3], hidden)
    if use_se:
        mid = hidden // 4
        kk = jax.random.split(ks[4], 2)
        p['se'] = dict(
            w1=(1.0 / math.sqrt(hidden)) * jax.random.normal(kk[0], (hidden, mid), jnp.float32),
            b1=0.1 * jnp.ones((1, mid), jnp.float32),
            w2=(1.0 / math.sqrt(mid)) * jax.random.normal(kk[1], (mid, hidden), jnp.float32),
            b2=0.1 * jnp.ones((1, hidden), jnp.float32))
    if not (stride == 1 and inp == oup):
        p['w_sc_dw'] = (1.0 / 3.0) * jax.random.normal(ks[5], (3, 3, inp), jnp.float32)
        p['s_sc_dw'], p['b_sc_dw'] = _init_bn(ks[6], inp)
        kk = jax.random.split(ks[7], 2)
        p['w_sc_pw'] = (1.0 / math.sqrt(inp)) * jax.random.normal(kk[0], (inp, oup), jnp.float32)
        p['s_sc_pw'], p['b_sc_pw'] = _init_bn(kk[1], oup)
    return p


# ---------------------------------------------------------------------------
# Pure-JAX reference (for correctness check)
# ---------------------------------------------------------------------------

def _dw_ref(x, w, stride):
    k, _, c = w.shape
    pad = k // 2
    return lax.conv_general_dilated(
        x, w.reshape(k, k, 1, c), window_strides=(stride, stride),
        padding=[(pad, pad), (pad, pad)],
        dimension_numbers=('NHWC', 'HWIO', 'NHWC'),
        feature_group_count=c, precision=lax.Precision.HIGHEST)


def _bn_ref(x, s, b):
    shp = (1,) * (x.ndim - 1) + (-1,)
    return x * s.reshape(shp) + b.reshape(shp)


def _ghost_ref(x, p, relu, oup):
    x1 = jnp.einsum('nhwc,cd->nhwd', x, p['wp'], precision=lax.Precision.HIGHEST)
    x1 = _bn_ref(x1, p['sp'], p['bp'])
    if relu:
        x1 = jnp.maximum(x1, 0.0)
    x2 = _bn_ref(_dw_ref(x1, p['wc'], 1), p['sc'], p['bc'])
    if relu:
        x2 = jnp.maximum(x2, 0.0)
    return jnp.concatenate([x1, x2], axis=-1)[..., :oup]


def ghost_bottleneck_ref(x, params, cfg):
    stride, use_se, oup = cfg['stride'], cfg['use_se'], cfg['oup']
    hidden = cfg['hidden']
    inp = x.shape[-1]
    h = _ghost_ref(x, params['ghost1'], True, hidden)
    if stride == 2:
        h = _bn_ref(_dw_ref(h, params['w_dw'], 2), params['s_dw'], params['b_dw'])
    if use_se:
        se = params['se']
        pooled = jnp.mean(h, axis=(1, 2))
        hid = jnp.maximum(
            jnp.matmul(pooled, se['w1'], precision=lax.Precision.HIGHEST) + se['b1'], 0.0)
        gate = jnp.clip(
            jnp.matmul(hid, se['w2'], precision=lax.Precision.HIGHEST) + se['b2'], 0.0, 1.0)
        h = h * gate[:, None, None, :]
    h = _ghost_ref(h, params['ghost2'], False, oup)
    if stride == 1 and inp == oup:
        sc = x
    else:
        t = jnp.maximum(_bn_ref(_dw_ref(x, params['w_sc_dw'], stride),
                                params['s_sc_dw'], params['b_sc_dw']), 0.0)
        sc = _bn_ref(jnp.einsum('nhwc,cd->nhwd', t, params['w_sc_pw'],
                                precision=lax.Precision.HIGHEST),
                     params['s_sc_pw'], params['b_sc_pw'])
    return h + sc


# ---------------------------------------------------------------------------
# Driver
# ---------------------------------------------------------------------------

if __name__ == "__main__":
    root = jax.random.PRNGKey(0)
    N, H, W = 2, 16, 16
    # Exercise every branch of GhostBottleneck: identity / conv shortcut,
    # stride 1 / 2, SE on / off, kernel 3 / 5.
    configs = [
        dict(inp=16, hidden=16,  oup=16, k=3, stride=1, use_se=False),
        dict(inp=16, hidden=48,  oup=24, k=3, stride=2, use_se=False),
        dict(inp=24, hidden=72,  oup=40, k=5, stride=2, use_se=True),
        dict(inp=40, hidden=120, oup=40, k=3, stride=1, use_se=True),
    ]
    keys = jax.random.split(root, 2 * len(configs))
    for i, cfg in enumerate(configs):
        pkey, xkey = keys[2 * i], keys[2 * i + 1]
        params = init_bottleneck(pkey, cfg)
        x_nchw = jax.random.normal(xkey, (N, cfg['inp'], H, W), jnp.float32)

        fwd = jax.jit(functools.partial(ghost_bottleneck_nchw, cfg=cfg))
        out = jax.block_until_ready(fwd(x_nchw, params))

        ho = H // cfg['stride']
        assert out.shape == (N, cfg['oup'], ho, ho), (i, out.shape)
        assert bool(jnp.all(jnp.isfinite(out))), f"config {i}: non-finite output"

        x_nhwc = jnp.transpose(x_nchw, (0, 2, 3, 1))
        ref = jnp.transpose(ghost_bottleneck_ref(x_nhwc, params, cfg), (0, 3, 1, 2))
        err = float(jnp.max(jnp.abs(out - ref)))
        assert err < 3e-2, f"config {i}: max abs err {err}"

    print("KERNEL_OK")
</pallas_src>

<mosaic_0001>
module attributes {stable_mosaic.version = 11 : i64} {
  func.func @_ghost2_kernel(%arg0: i32, %arg1: memref<1x16x16x16xf32, #tpu.memory_space<vmem>>, %arg2: memref<16x8xf32, #tpu.memory_space<vmem>>, %arg3: memref<1x8xf32, #tpu.memory_space<vmem>>, %arg4: memref<1x8xf32, #tpu.memory_space<vmem>>, %arg5: memref<9x1x8xf32, #tpu.memory_space<vmem>>, %arg6: memref<1x8xf32, #tpu.memory_space<vmem>>, %arg7: memref<1x8xf32, #tpu.memory_space<vmem>>, %arg8: memref<1x16x16x16xf32, #tpu.memory_space<vmem>>, %arg9: memref<1x16x16x16xf32, #tpu.memory_space<vmem>>, %arg10: memref<18x25x8xf32, #tpu.memory_space<vmem>>) attributes {dimension_semantics = [#tpu.dimension_semantics<parallel>], iteration_bounds = array<i64: 2>, scalar_prefetch = 0 : i64, scratch_operands = 1 : i64, tpu.core_type = #tpu.core_type<tc>, window_params = [{transform_indices = @transform_0, window_bounds = array<i64: 1, 16, 16, 16>}, {pipeline_mode = #tpu.pipeline_mode<synchronous>, transform_indices = @transform_1, window_bounds = array<i64: 16, 8>}, {pipeline_mode = #tpu.pipeline_mode<synchronous>, transform_indices = @transform_2, window_bounds = array<i64: 1, 8>}, {pipeline_mode = #tpu.pipeline_mode<synchronous>, transform_indices = @transform_3, window_bounds = array<i64: 1, 8>}, {pipeline_mode = #tpu.pipeline_mode<synchronous>, transform_indices = @transform_4, window_bounds = array<i64: 9, 1, 8>}, {pipeline_mode = #tpu.pipeline_mode<synchronous>, transform_indices = @transform_5, window_bounds = array<i64: 1, 8>}, {pipeline_mode = #tpu.pipeline_mode<synchronous>, transform_indices = @transform_6, window_bounds = array<i64: 1, 8>}, {transform_indices = @transform_7, window_bounds = array<i64: 1, 16, 16, 16>}, {transform_indices = @transform_8, window_bounds = array<i64: 1, 16, 16, 16>}]} {
    %c0 = arith.constant 0 : index
    %c0_0 = arith.constant 0 : index
    %c0_1 = arith.constant 0 : index
    %c0_2 = arith.constant 0 : index
    %0 = vector.load %arg1[%c0, %c0_0, %c0_1, %c0_2] : memref<1x16x16x16xf32, #tpu.memory_space<vmem>>, vector<1x16x16x16xf32>
    %1 = vector.shape_cast %0 : vector<1x16x16x16xf32> to vector<16x16x16xf32>
    %2 = vector.shape_cast %1 : vector<16x16x16xf32> to vector<256x16xf32>
    %c0_3 = arith.constant 0 : index
    %c0_4 = arith.constant 0 : index
    %3 = vector.load %arg2[%c0_3, %c0_4] : memref<16x8xf32, #tpu.memory_space<vmem>>, vector<16x8xf32>
    %cst = arith.constant dense<0.000000e+00> : vector<256x8xf32>
    %4 = tpu.matmul %2, %3, %cst {dimension_numbers = #tpu.dot_dimension_numbers<[1], [0], [0], [1], [0, 0, 1, 1], [], []>} : vector<256x16xf32>, vector<16x8xf32>, vector<256x8xf32> -> vector<256x8xf32>
    %c0_5 = arith.constant 0 : index
    %c0_6 = arith.constant 0 : index
    %5 = vector.load %arg3[%c0_5, %c0_6] : memref<1x8xf32, #tpu.memory_space<vmem>>, vector<1x8xf32>
    %6 = vector.broadcast %5 : vector<1x8xf32> to vector<256x8xf32>
    %7 = arith.mulf %4, %6 : vector<256x8xf32>
    %c0_7 = arith.constant 0 : index
    %c0_8 = arith.constant 0 : index
    %8 = vector.load %arg4[%c0_7, %c0_8] : memref<1x8xf32, #tpu.memory_space<vmem>>, vector<1x8xf32>
    %9 = vector.broadcast %8 : vector<1x8xf32> to vector<256x8xf32>
    %10 = arith.addf %7, %9 : vector<256x8xf32>
    %11 = vector.shape_cast %10 : vector<256x8xf32> to vector<16x16x8xf32>
    %cst_9 = arith.constant 0.000000e+00 : f32
    %12 = vector.broadcast %cst_9 : f32 to vector<1x18x8xf32>
    %c0_10 = arith.constant 0 : index
    %c7 = arith.constant 7 : index
    %c0_11 = arith.constant 0 : index
    %13 = vector.load %arg10[%c0_10, %c7, %c0_11] : memref<18x25x8xf32, #tpu.memory_space<vmem>>, vector<1x18x8xf32>
    tpu.vector_store %arg10[%c0_10, %c7, %c0_11], %12 {strides = array<i32>} : memref<18x25x8xf32, #tpu.memory_space<vmem>>, vector<1x18x8xf32>,
    %c17 = arith.constant 17 : index
    %c7_12 = arith.constant 7 : index
    %c0_13 = arith.constant 0 : index
    %14 = vector.load %arg10[%c17, %c7_12, %c0_13] : memref<18x25x8xf32, #tpu.memory_space<vmem>>, vector<1x18x8xf32>
    tpu.vector_store %arg10[%c17, %c7_12, %c0_13], %12 {strides = array<i32>} : memref<18x25x8xf32, #tpu.memory_space<vmem>>, vector<1x18x8xf32>,
    %cst_14 = arith.constant 0.000000e+00 : f32
    %15 = vector.broadcast %cst_14 : f32 to vector<16x1x8xf32>
    %c1 = arith.constant 1 : index
    %c7_15 = arith.constant 7 : index
    %c0_16 = arith.constant 0 : index
    %16 = vector.load %arg10[%c1, %c7_15, %c0_16] : memref<18x25x8xf32, #tpu.memory_space<vmem>>, vector<16x1x8xf32>
    tpu.vector_store %arg10[%c1, %c7_15, %c0_16], %15 {strides = array<i32>} : memref<18x25x8xf32, #tpu.memory_space<vmem>>, vector<16x1x8xf32>,
    %c1_17 = arith.constant 1 : index
    %c24 = arith.constant 24 : index
    %c0_18 = arith.constant 0 : index
    %17 = vector.load %arg10[%c1_17, %c24, %c0_18] : memref<18x25x8xf32, #tpu.memory_space<vmem>>, vector<16x1x8xf32>
    tpu.vector_store %arg10[%c1_17, %c24, %c0_18], %15 {strides = array<i32>} : memref<18x25x8xf32, #tpu.memory_space<vmem>>, vector<16x1x8xf32>,
    %c1_19 = arith.constant 1 : index
    %c8 = arith.constant 8 : index
    %c0_20 = arith.constant 0 : index
    %18 = vector.load %arg10[%c1_19, %c8, %c0_20] : memref<18x25x8xf32, #tpu.memory_space<vmem>>, vector<16x16x8xf32>
    tpu.vector_store %arg10[%c1_19, %c8, %c0_20], %11 {strides = array<i32>} : memref<18x25x8xf32, #tpu.memory_space<vmem>>, vector<16x16x8xf32>,
    %c0_21 = arith.constant 0 : index
    %c7_22 = arith.constant 7 : index
    %c0_23 = arith.constant 0 : index
    %19 = vector.load %arg10[%c0_21, %c7_22, %c0_23] : memref<18x25x8xf32, #tpu.memory_space<vmem>>, vector<16x16x8xf32>
    %c0_24 = arith.constant 0 : index
    %c0_25 = arith.constant 0 : index
    %c0_26 = arith.constant 0 : index
    %20 = vector.load %arg5[%c0_24, %c0_25, %c0_26] : memref<9x1x8xf32, #tpu.memory_space<vmem>>, vector<1x1x8xf32>
    %21 = vector.shape_cast %20 : vector<1x1x8xf32> to vector<1x8xf32>
    %22 = vector.shape_cast %21 : vector<1x8xf32> to vector<1x1x8xf32>
    %23 = vector.broadcast %22 : vector<1x1x8xf32> to vector<16x16x8xf32>
    %24 = arith.mulf %19, %23 : vector<16x16x8xf32>
    %c0_27 = arith.constant 0 : index
    %c8_28 = arith.constant 8 : index
    %c0_29 = arith.constant 0 : index
    %25 = vector.load %arg10[%c0_27, %c8_28, %c0_29] : memref<18x25x8xf32, #tpu.memory_space<vmem>>, vector<16x16x8xf32>
    %c1_30 = arith.constant 1 : index
    %c0_31 = arith.constant 0 : index
    %c0_32 = arith.constant 0 : index
    %26 = vector.load %arg5[%c1_30, %c0_31, %c0_32] : memref<9x1x8xf32, #tpu.memory_space<vmem>>, vector<1x1x8xf32>
    %27 = vector.shape_cast %26 : vector<1x1x8xf32> to vector<1x8xf32>
    %28 = vector.shape_cast %27 : vector<1x8xf32> to vector<1x1x8xf32>
    %29 = vector.broadcast %28 : vector<1x1x8xf32> to vector<16x16x8xf32>
    %30 = arith.mulf %25, %29 : vector<16x16x8xf32>
    %31 = arith.addf %24, %30 : vector<16x16x8xf32>
    %c0_33 = arith.constant 0 : index
    %c9 = arith.constant 9 : index
    %c0_34 = arith.constant 0 : index
    %32 = vector.load %arg10[%c0_33, %c9, %c0_34] : memref<18x25x8xf32, #tpu.memory_space<vmem>>, vector<16x16x8xf32>
    %c2 = arith.constant 2 : index
    %c0_35 = arith.constant 0 : index
    %c0_36 = arith.constant 0 : index
    %33 = vector.load %arg5[%c2, %c0_35, %c0_36] : memref<9x1x8xf32, #tpu.memory_space<vmem>>, vector<1x1x8xf32>
    %34 = vector.shape_cast %33 : vector<1x1x8xf32> to vector<1x8xf32>
    %35 = vector.shape_cast %34 : vector<1x8xf32> to vector<1x1x8xf32>
    %36 = vector.broadcast %35 : vector<1x1x8xf32> to vector<16x16x8xf32>
    %37 = arith.mulf %32, %36 : vector<16x16x8xf32>
    %38 = arith.addf %31, %37 : vector<16x16x8xf32>
    %c1_37 = arith.constant 1 : index
    %c7_38 = arith.constant 7 : index
    %c0_39 = arith.constant 0 : index
    %39 = vector.load %arg10[%c1_37, %c7_38, %c0_39] : memref<18x25x8xf32, #tpu.memory_space<vmem>>, vector<16x16x8xf32>
    %c3 = arith.constant 3 : index
    %c0_40 = arith.constant 0 : index
    %c0_41 = arith.constant 0 : index
    %40 = vector.load %arg5[%c3, %c0_40, %c0_41] : memref<9x1x8xf32, #tpu.memory_space<vmem>>, vector<1x1x8xf32>
    %41 = vector.shape_cast %40 : vector<1x1x8xf32> to vector<1x8xf32>
    %42 = vector.shape_cast %41 : vector<1x8xf32> to vector<1x1x8xf32>
    %43 = vector.broadcast %42 : vector<1x1x8xf32> to vector<16x16x8xf32>
    %44 = arith.mulf %39, %43 : vector<16x16x8xf32>
    %45 = arith.addf %38, %44 : vector<16x16x8xf32>
    %c1_42 = arith.constant 1 : index
    %c8_43 = arith.constant 8 : index
    %c0_44 = arith.constant 0 : index
    %46 = vector.load %arg10[%c1_42, %c8_43, %c0_44] : memref<18x25x8xf32, #tpu.memory_space<vmem>>, vector<16x16x8xf32>
    %c4 = arith.constant 4 : index
    %c0_45 = arith.constant 0 : index
    %c0_46 = arith.constant 0 : index
    %47 = vector.load %arg5[%c4, %c0_45, %c0_46] : memref<9x1x8xf32, #tpu.memory_space<vmem>>, vector<1x1x8xf32>
    %48 = vector.shape_cast %47 : vector<1x1x8xf32> to vector<1x8xf32>
    %49 = vector.shape_cast %48 : vector<1x8xf32> to vector<1x1x8xf32>
    %50 = vector.broadcast %49 : vector<1x1x8xf32> to vector<16x16x8xf32>
    %51 = arith.mulf %46, %50 : vector<16x16x8xf32>
    %52 = arith.addf %45, %51 : vector<16x16x8xf32>
    %c1_47 = arith.constant 1 : index
    %c9_48 = arith.constant 9 : index
    %c0_49 = arith.constant 0 : index
    %53 = vector.load %arg10[%c1_47, %c9_48, %c0_49] : memref<18x25x8xf32, #tpu.memory_space<vmem>>, vector<16x16x8xf32>
    %c5 = arith.constant 5 : index
    %c0_50 = arith.constant 0 : index
    %c0_51 = arith.constant 0 : index
    %54 = vector.load %arg5[%c5, %c0_50, %c0_51] : memref<9x1x8xf32, #tpu.memory_space<vmem>>, vector<1x1x8xf32>
    %55 = vector.shape_cast %54 : vector<1x1x8xf32> to vector<1x8xf32>
    %56 = vector.shape_cast %55 : vector<1x8xf32> to vector<1x1x8xf32>
    %57 = vector.broadcast %56 : vector<1x1x8xf32> to vector<16x16x8xf32>
    %58 = arith.mulf %53, %57 : vector<16x16x8xf32>
    %59 = arith.addf %52, %58 : vector<16x16x8xf32>
    %c2_52 = arith.constant 2 : index
    %c7_53 = arith.constant 7 : index
    %c0_54 = arith.constant 0 : index
    %60 = vector.load %arg10[%c2_52, %c7_53, %c0_54] : memref<18x25x8xf32, #tpu.memory_space<vmem>>, vector<16x16x8xf32>
    %c6 = arith.constant 6 : index
    %c0_55 = arith.constant 0 : index
    %c0_56 = arith.constant 0 : index
    %61 = vector.load %arg5[%c6, %c0_55, %c0_56] : memref<9x1x8xf32, #tpu.memory_space<vmem>>, vector<1x1x8xf32>
    %62 = vector.shape_cast %61 : vector<1x1x8xf32> to vector<1x8xf32>
    %63 = vector.shape_cast %62 : vector<1x8xf32> to vector<1x1x8xf32>
    %64 = vector.broadcast %63 : vector<1x1x8xf32> to vector<16x16x8xf32>
    %65 = arith.mulf %60, %64 : vector<16x16x8xf32>
    %66 = arith.addf %59, %65 : vector<16x16x8xf32>
    %c2_57 = arith.constant 2 : index
    %c8_58 = arith.constant 8 : index
    %c0_59 = arith.constant 0 : index
    %67 = vector.load %arg10[%c2_57, %c8_58, %c0_59] : memref<18x25x8xf32, #tpu.memory_space<vmem>>, vector<16x16x8xf32>
    %c7_60 = arith.constant 7 : index
    %c0_61 = arith.constant 0 : index
    %c0_62 = arith.constant 0 : index
    %68 = vector.load %arg5[%c7_60, %c0_61, %c0_62] : memref<9x1x8xf32, #tpu.memory_space<vmem>>, vector<1x1x8xf32>
    %69 = vector.shape_cast %68 : vector<1x1x8xf32> to vector<1x8xf32>
    %70 = vector.shape_cast %69 : vector<1x8xf32> to vector<1x1x8xf32>
    %71 = vector.broadcast %70 : vector<1x1x8xf32> to vector<16x16x8xf32>
    %72 = arith.mulf %67, %71 : vector<16x16x8xf32>
    %73 = arith.addf %66, %72 : vector<16x16x8xf32>
    %c2_63 = arith.constant 2 : index
    %c9_64 = arith.constant 9 : index
    %c0_65 = arith.constant 0 : index
    %74 = vector.load %arg10[%c2_63, %c9_64, %c0_65] : memref<18x25x8xf32, #tpu.memory_space<vmem>>, vector<16x16x8xf32>
    %c8_66 = arith.constant 8 : index
    %c0_67 = arith.constant 0 : index
    %c0_68 = arith.constant 0 : index
    %75 = vector.load %arg5[%c8_66, %c0_67, %c0_68] : memref<9x1x8xf32, #tpu.memory_space<vmem>>, vector<1x1x8xf32>
    %76 = vector.shape_cast %75 : vector<1x1x8xf32> to vector<1x8xf32>
    %77 = vector.shape_cast %76 : vector<1x8xf32> to vector<1x1x8xf32>
    %78 = vector.broadcast %77 : vector<1x1x8xf32> to vector<16x16x8xf32>
    %79 = arith.mulf %74, %78 : vector<16x16x8xf32>
    %80 = arith.addf %73, %79 : vector<16x16x8xf32>
    %c0_69 = arith.constant 0 : index
    %c0_70 = arith.constant 0 : index
    %81 = vector.load %arg6[%c0_69, %c0_70] : memref<1x8xf32, #tpu.memory_space<vmem>>, vector<1x8xf32>
    %82 = vector.shape_cast %81 : vector<1x8xf32> to vector<1x1x8xf32>
    %83 = vector.broadcast %82 : vector<1x1x8xf32> to vector<16x16x8xf32>
    %84 = arith.mulf %80, %83 : vector<16x16x8xf32>
    %c0_71 = arith.constant 0 : index
    %c0_72 = arith.constant 0 : index
    %85 = vector.load %arg7[%c0_71, %c0_72] : memref<1x8xf32, #tpu.memory_space<vmem>>, vector<1x8xf32>
    %86 = vector.shape_cast %85 : vector<1x8xf32> to vector<1x1x8xf32>
    %87 = vector.broadcast %86 : vector<1x1x8xf32> to vector<16x16x8xf32>
    %88 = arith.addf %84, %87 : vector<16x16x8xf32>
    %89 = tpu.concatenate %11, %88 in 2 : vector<16x16x8xf32>, vector<16x16x8xf32> -> vector<16x16x16xf32>
    %c0_73 = arith.constant 0 : index
    %c0_74 = arith.constant 0 : index
    %c0_75 = arith.constant 0 : index
    %c0_76 = arith.constant 0 : index
    %90 = vector.load %arg8[%c0_73, %c0_74, %c0_75, %c0_76] : memref<1x16x16x16xf32, #tpu.memory_space<vmem>>, vector<1x16x16x16xf32>
    %91 = vector.shape_cast %90 : vector<1x16x16x16xf32> to vector<16x16x16xf32>
    %92 = arith.addf %89, %91 : vector<16x16x16xf32>
    %c0_77 = arith.constant 0 : index
    %c0_78 = arith.constant 0 : index
    %c0_79 = arith.constant 0 : index
    %c0_80 = arith.constant 0 : index
    %93 = vector.load %arg9[%c0_77, %c0_78, %c0_79, %c0_80] : memref<1x16x16x16xf32, #tpu.memory_space<vmem>>, vector<1x16x16x16xf32>
    %94 = vector.shape_cast %93 : vector<1x16x16x16xf32> to vector<16x16x16xf32>
    %95 = vector.shape_cast %92 : vector<16x16x16xf32> to vector<1x16x16x16xf32>
    tpu.vector_store %arg9[%c0_77, %c0_78, %c0_79, %c0_80], %95 {strides = array<i32>} : memref<1x16x16x16xf32, #tpu.memory_space<vmem>>, vector<1x16x16x16xf32>,
    return
  }
  func.func @transform_0(%arg0: i32) -> (i32, i32, i32, i32) {
    %c0_i32 = arith.constant 0 : i32
    %c0_i32_0 = arith.constant 0 : i32
    %c0_i32_1 = arith.constant 0 : i32
    %c0_i32_2 = arith.constant 0 : i32
    return %arg0, %c0_i32, %c0_i32_0, %c0_i32_1 : i32, i32, i32, i32
  }
  func.func @transform_1(%arg0: i32) -> (i32, i32) {
    %c0_i32 = arith.constant 0 : i32
    %c0_i32_0 = arith.constant 0 : i32
    %c0_i32_1 = arith.constant 0 : i32
    return %c0_i32, %c0_i32_0 : i32, i32
  }
  func.func @transform_2(%arg0: i32) -> (i32, i32) {
    %c0_i32 = arith.constant 0 : i32
    %c0_i32_0 = arith.constant 0 : i32
    %c0_i32_1 = arith.constant 0 : i32
    return %c0_i32, %c0_i32_0 : i32, i32
  }
  func.func @transform_3(%arg0: i32) -> (i32, i32) {
    %c0_i32 = arith.constant 0 : i32
    %c0_i32_0 = arith.constant 0 : i32
    %c0_i32_1 = arith.constant 0 : i32
    return %c0_i32, %c0_i32_0 : i32, i32
  }
  func.func @transform_4(%arg0: i32) -> (i32, i32, i32) {
    %c0_i32 = arith.constant 0 : i32
    %c0_i32_0 = arith.constant 0 : i32
    %c0_i32_1 = arith.constant 0 : i32
    %c0_i32_2 = arith.constant 0 : i32
    return %c0_i32, %c0_i32_0, %c0_i32_1 : i32, i32, i32
  }
  func.func @transform_5(%arg0: i32) -> (i32, i32) {
    %c0_i32 = arith.constant 0 : i32
    %c0_i32_0 = arith.constant 0 : i32
    %c0_i32_1 = arith.constant 0 : i32
    return %c0_i32, %c0_i32_0 : i32, i32
  }
  func.func @transform_6(%arg0: i32) -> (i32, i32) {
    %c0_i32 = arith.constant 0 : i32
    %c0_i32_0 = arith.constant 0 : i32
    %c0_i32_1 = arith.constant 0 : i32
    return %c0_i32, %c0_i32_0 : i32, i32
  }
  func.func @transform_7(%arg0: i32) -> (i32, i32, i32, i32) {
    %c0_i32 = arith.constant 0 : i32
    %c0_i32_0 = arith.constant 0 : i32
    %c0_i32_1 = arith.constant 0 : i32
    %c0_i32_2 = arith.constant 0 : i32
    return %arg0, %c0_i32, %c0_i32_0, %c0_i32_1 : i32, i32, i32, i32
  }
  func.func @transform_8(%arg0: i32) -> (i32, i32, i32, i32) {
    %c0_i32 = arith.constant 0 : i32
    %c0_i32_0 = arith.constant 0 : i32
    %c0_i32_1 = arith.constant 0 : i32
    %c0_i32_2 = arith.constant 0 : i32
    return %arg0, %c0_i32, %c0_i32_0, %c0_i32_1 : i32, i32, i32, i32
  }
}

module attributes {stable_mosaic.version = 11 : i64} {
  func.func @_ghost1_kernel(%arg0: i32, %arg1: memref<1x16x16x16xf32, #tpu.memory_space<vmem>>, %arg2: memref<16x8xf32, #tpu.memory_space<vmem>>, %arg3: memref<1x8xf32, #tpu.memory_space<vmem>>, %arg4: memref<1x8xf32, #tpu.memory_space<vmem>>, %arg5: memref<9x1x8xf32, #tpu.memory_space<vmem>>, %arg6: memref<1x8xf32, #tpu.memory_space<vmem>>, %arg7: memref<1x8xf32, #tpu.memory_space<vmem>>, %arg8: memref<1x16x16x16xf32, #tpu.memory_space<vmem>>, %arg9: memref<18x25x8xf32, #tpu.memory_space<vmem>>) attributes {dimension_semantics = [#tpu.dimension_semantics<parallel>], iteration_bounds = array<i64: 2>, scalar_prefetch = 0 : i64, scratch_operands = 1 : i64, tpu.core_type = #tpu.core_type<tc>, window_params = [{transform_indices = @transform_0, window_bounds = array<i64: 1, 16, 16, 16>}, {pipeline_mode = #tpu.pipeline_mode<synchronous>, transform_indices = @transform_1, window_bounds = array<i64: 16, 8>}, {pipeline_mode = #tpu.pipeline_mode<synchronous>, transform_indices = @transform_2, window_bounds = array<i64: 1, 8>}, {pipeline_mode = #tpu.pipeline_mode<synchronous>, transform_indices = @transform_3, window_bounds = array<i64: 1, 8>}, {pipeline_mode = #tpu.pipeline_mode<synchronous>, transform_indices = @transform_4, window_bounds = array<i64: 9, 1, 8>}, {pipeline_mode = #tpu.pipeline_mode<synchronous>, transform_indices = @transform_5, window_bounds = array<i64: 1, 8>}, {pipeline_mode = #tpu.pipeline_mode<synchronous>, transform_indices = @transform_6, window_bounds = array<i64: 1, 8>}, {transform_indices = @transform_7, window_bounds = array<i64: 1, 16, 16, 16>}]} {
    %c0 = arith.constant 0 : index
    %c0_0 = arith.constant 0 : index
    %c0_1 = arith.constant 0 : index
    %c0_2 = arith.constant 0 : index
    %0 = vector.load %arg1[%c0, %c0_0, %c0_1, %c0_2] : memref<1x16x16x16xf32, #tpu.memory_space<vmem>>, vector<1x16x16x16xf32>
    %1 = vector.shape_cast %0 : vector<1x16x16x16xf32> to vector<16x16x16xf32>
    %2 = vector.shape_cast %1 : vector<16x16x16xf32> to vector<256x16xf32>
    %c0_3 = arith.constant 0 : index
    %c0_4 = arith.constant 0 : index
    %3 = vector.load %arg2[%c0_3, %c0_4] : memref<16x8xf32, #tpu.memory_space<vmem>>, vector<16x8xf32>
    %cst = arith.constant dense<0.000000e+00> : vector<256x8xf32>
    %4 = tpu.matmul %2, %3, %cst {dimension_numbers = #tpu.dot_dimension_numbers<[1], [0], [0], [1], [0, 0, 1, 1], [], []>} : vector<256x16xf32>, vector<16x8xf32>, vector<256x8xf32> -> vector<256x8xf32>
    %c0_5 = arith.constant 0 : index
    %c0_6 = arith.constant 0 : index
    %5 = vector.load %arg3[%c0_5, %c0_6] : memref<1x8xf32, #tpu.memory_space<vmem>>, vector<1x8xf32>
    %6 = vector.broadcast %5 : vector<1x8xf32> to vector<256x8xf32>
    %7 = arith.mulf %4, %6 : vector<256x8xf32>
    %c0_7 = arith.constant 0 : index
    %c0_8 = arith.constant 0 : index
    %8 = vector.load %arg4[%c0_7, %c0_8] : memref<1x8xf32, #tpu.memory_space<vmem>>, vector<1x8xf32>
    %9 = vector.broadcast %8 : vector<1x8xf32> to vector<256x8xf32>
    %10 = arith.addf %7, %9 : vector<256x8xf32>
    %cst_9 = arith.constant 0.000000e+00 : f32
    %11 = vector.broadcast %cst_9 : f32 to vector<256x8xf32>
    %12 = arith.maximumf %10, %11 : vector<256x8xf32>
    %13 = vector.shape_cast %12 : vector<256x8xf32> to vector<16x16x8xf32>
    %cst_10 = arith.constant 0.000000e+00 : f32
    %14 = vector.broadcast %cst_10 : f32 to vector<1x18x8xf32>
    %c0_11 = arith.constant 0 : index
    %c7 = arith.constant 7 : index
    %c0_12 = arith.constant 0 : index
    %15 = vector.load %arg9[%c0_11, %c7, %c0_12] : memref<18x25x8xf32, #tpu.memory_space<vmem>>, vector<1x18x8xf32>
    tpu.vector_store %arg9[%c0_11, %c7, %c0_12], %14 {strides = array<i32>} : memref<18x25x8xf32, #tpu.memory_space<vmem>>, vector<1x18x8xf32>,
    %c17 = arith.constant 17 : index
    %c7_13 = arith.constant 7 : index
    %c0_14 = arith.constant 0 : index
    %16 = vector.load %arg9[%c17, %c7_13, %c0_14] : memref<18x25x8xf32, #tpu.memory_space<vmem>>, vector<1x18x8xf32>
    tpu.vector_store %arg9[%c17, %c7_13, %c0_14], %14 {strides = array<i32>} : memref<18x25x8xf32, #tpu.memory_space<vmem>>, vector<1x18x8xf32>,
    %cst_15 = arith.constant 0.000000e+00 : f32
    %17 = vector.broadcast %cst_15 : f32 to vector<16x1x8xf32>
    %c1 = arith.constant 1 : index
    %c7_16 = arith.constant 7 : index
    %c0_17 = arith.constant 0 : index
    %18 = vector.load %arg9[%c1, %c7_16, %c0_17] : memref<18x25x8xf32, #tpu.memory_space<vmem>>, vector<16x1x8xf32>
    tpu.vector_store %arg9[%c1, %c7_16, %c0_17], %17 {strides = array<i32>} : memref<18x25x8xf32, #tpu.memory_space<vmem>>, vector<16x1x8xf32>,
    %c1_18 = arith.constant 1 : index
    %c24 = arith.constant 24 : index
    %c0_19 = arith.constant 0 : index
    %19 = vector.load %arg9[%c1_18, %c24, %c0_19] : memref<18x25x8xf32, #tpu.memory_space<vmem>>, vector<16x1x8xf32>
    tpu.vector_store %arg9[%c1_18, %c24, %c0_19], %17 {strides = array<i32>} : memref<18x25x8xf32, #tpu.memory_space<vmem>>, vector<16x1x8xf32>,
    %c1_20 = arith.constant 1 : index
    %c8 = arith.constant 8 : index
    %c0_21 = arith.constant 0 : index
    %20 = vector.load %arg9[%c1_20, %c8, %c0_21] : memref<18x25x8xf32, #tpu.memory_space<vmem>>, vector<16x16x8xf32>
    tpu.vector_store %arg9[%c1_20, %c8, %c0_21], %13 {strides = array<i32>} : memref<18x25x8xf32, #tpu.memory_space<vmem>>, vector<16x16x8xf32>,
    %c0_22 = arith.constant 0 : index
    %c7_23 = arith.constant 7 : index
    %c0_24 = arith.constant 0 : index
    %21 = vector.load %arg9[%c0_22, %c7_23, %c0_24] : memref<18x25x8xf32, #tpu.memory_space<vmem>>, vector<16x16x8xf32>
    %c0_25 = arith.constant 0 : index
    %c0_26 = arith.constant 0 : index
    %c0_27 = arith.constant 0 : index
    %22 = vector.load %arg5[%c0_25, %c0_26, %c0_27] : memref<9x1x8xf32, #tpu.memory_space<vmem>>, vector<1x1x8xf32>
    %23 = vector.shape_cast %22 : vector<1x1x8xf32> to vector<1x8xf32>
    %24 = vector.shape_cast %23 : vector<1x8xf32> to vector<1x1x8xf32>
    %25 = vector.broadcast %24 : vector<1x1x8xf32> to vector<16x16x8xf32>
    %26 = arith.mulf %21, %25 : vector<16x16x8xf32>
    %c0_28 = arith.constant 0 : index
    %c8_29 = arith.constant 8 : index
    %c0_30 = arith.constant 0 : index
    %27 = vector.load %arg9[%c0_28, %c8_29, %c0_30] : memref<18x25x8xf32, #tpu.memory_space<vmem>>, vector<16x16x8xf32>
    %c1_31 = arith.constant 1 : index
    %c0_32 = arith.constant 0 : index
    %c0_33 = arith.constant 0 : index
    %28 = vector.load %arg5[%c1_31, %c0_32, %c0_33] : memref<9x1x8xf32, #tpu.memory_space<vmem>>, vector<1x1x8xf32>
    %29 = vector.shape_cast %28 : vector<1x1x8xf32> to vector<1x8xf32>
    %30 = vector.shape_cast %29 : vector<1x8xf32> to vector<1x1x8xf32>
    %31 = vector.broadcast %30 : vector<1x1x8xf32> to vector<16x16x8xf32>
    %32 = arith.mulf %27, %31 : vector<16x16x8xf32>
    %33 = arith.addf %26, %32 : vector<16x16x8xf32>
    %c0_34 = arith.constant 0 : index
    %c9 = arith.constant 9 : index
    %c0_35 = arith.constant 0 : index
    %34 = vector.load %arg9[%c0_34, %c9, %c0_35] : memref<18x25x8xf32, #tpu.memory_space<vmem>>, vector<16x16x8xf32>
    %c2 = arith.constant 2 : index
    %c0_36 = arith.constant 0 : index
    %c0_37 = arith.constant 0 : index
    %35 = vector.load %arg5[%c2, %c0_36, %c0_37] : memref<9x1x8xf32, #tpu.memory_space<vmem>>, vector<1x1x8xf32>
    %36 = vector.shape_cast %35 : vector<1x1x8xf32> to vector<1x8xf32>
    %37 = vector.shape_cast %36 : vector<1x8xf32> to vector<1x1x8xf32>
    %38 = vector.broadcast %37 : vector<1x1x8xf32> to vector<16x16x8xf32>
    %39 = arith.mulf %34, %38 : vector<16x16x8xf32>
    %40 = arith.addf %33, %39 : vector<16x16x8xf32>
    %c1_38 = arith.constant 1 : index
    %c7_39 = arith.constant 7 : index
    %c0_40 = arith.constant 0 : index
    %41 = vector.load %arg9[%c1_38, %c7_39, %c0_40] : memref<18x25x8xf32, #tpu.memory_space<vmem>>, vector<16x16x8xf32>
    %c3 = arith.constant 3 : index
    %c0_41 = arith.constant 0 : index
    %c0_42 = arith.constant 0 : index
    %42 = vector.load %arg5[%c3, %c0_41, %c0_42] : memref<9x1x8xf32, #tpu.memory_space<vmem>>, vector<1x1x8xf32>
    %43 = vector.shape_cast %42 : vector<1x1x8xf32> to vector<1x8xf32>
    %44 = vector.shape_cast %43 : vector<1x8xf32> to vector<1x1x8xf32>
    %45 = vector.broadcast %44 : vector<1x1x8xf32> to vector<16x16x8xf32>
    %46 = arith.mulf %41, %45 : vector<16x16x8xf32>
    %47 = arith.addf %40, %46 : vector<16x16x8xf32>
    %c1_43 = arith.constant 1 : index
    %c8_44 = arith.constant 8 : index
    %c0_45 = arith.constant 0 : index
    %48 = vector.load %arg9[%c1_43, %c8_44, %c0_45] : memref<18x25x8xf32, #tpu.memory_space<vmem>>, vector<16x16x8xf32>
    %c4 = arith.constant 4 : index
    %c0_46 = arith.constant 0 : index
    %c0_47 = arith.constant 0 : index
    %49 = vector.load %arg5[%c4, %c0_46, %c0_47] : memref<9x1x8xf32, #tpu.memory_space<vmem>>, vector<1x1x8xf32>
    %50 = vector.shape_cast %49 : vector<1x1x8xf32> to vector<1x8xf32>
    %51 = vector.shape_cast %50 : vector<1x8xf32> to vector<1x1x8xf32>
    %52 = vector.broadcast %51 : vector<1x1x8xf32> to vector<16x16x8xf32>
    %53 = arith.mulf %48, %52 : vector<16x16x8xf32>
    %54 = arith.addf %47, %53 : vector<16x16x8xf32>
    %c1_48 = arith.constant 1 : index
    %c9_49 = arith.constant 9 : index
    %c0_50 = arith.constant 0 : index
    %55 = vector.load %arg9[%c1_48, %c9_49, %c0_50] : memref<18x25x8xf32, #tpu.memory_space<vmem>>, vector<16x16x8xf32>
    %c5 = arith.constant 5 : index
    %c0_51 = arith.constant 0 : index
    %c0_52 = arith.constant 0 : index
    %56 = vector.load %arg5[%c5, %c0_51, %c0_52] : memref<9x1x8xf32, #tpu.memory_space<vmem>>, vector<1x1x8xf32>
    %57 = vector.shape_cast %56 : vector<1x1x8xf32> to vector<1x8xf32>
    %58 = vector.shape_cast %57 : vector<1x8xf32> to vector<1x1x8xf32>
    %59 = vector.broadcast %58 : vector<1x1x8xf32> to vector<16x16x8xf32>
    %60 = arith.mulf %55, %59 : vector<16x16x8xf32>
    %61 = arith.addf %54, %60 : vector<16x16x8xf32>
    %c2_53 = arith.constant 2 : index
    %c7_54 = arith.constant 7 : index
    %c0_55 = arith.constant 0 : index
    %62 = vector.load %arg9[%c2_53, %c7_54, %c0_55] : memref<18x25x8xf32, #tpu.memory_space<vmem>>, vector<16x16x8xf32>
    %c6 = arith.constant 6 : index
    %c0_56 = arith.constant 0 : index
    %c0_57 = arith.constant 0 : index
    %63 = vector.load %arg5[%c6, %c0_56, %c0_57] : memref<9x1x8xf32, #tpu.memory_space<vmem>>, vector<1x1x8xf32>
    %64 = vector.shape_cast %63 : vector<1x1x8xf32> to vector<1x8xf32>
    %65 = vector.shape_cast %64 : vector<1x8xf32> to vector<1x1x8xf32>
    %66 = vector.broadcast %65 : vector<1x1x8xf32> to vector<16x16x8xf32>
    %67 = arith.mulf %62, %66 : vector<16x16x8xf32>
    %68 = arith.addf %61, %67 : vector<16x16x8xf32>
    %c2_58 = arith.constant 2 : index
    %c8_59 = arith.constant 8 : index
    %c0_60 = arith.constant 0 : index
    %69 = vector.load %arg9[%c2_58, %c8_59, %c0_60] : memref<18x25x8xf32, #tpu.memory_space<vmem>>, vector<16x16x8xf32>
    %c7_61 = arith.constant 7 : index
    %c0_62 = arith.constant 0 : index
    %c0_63 = arith.constant 0 : index
    %70 = vector.load %arg5[%c7_61, %c0_62, %c0_63] : memref<9x1x8xf32, #tpu.memory_space<vmem>>, vector<1x1x8xf32>
    %71 = vector.shape_cast %70 : vector<1x1x8xf32> to vector<1x8xf32>
    %72 = vector.shape_cast %71 : vector<1x8xf32> to vector<1x1x8xf32>
    %73 = vector.broadcast %72 : vector<1x1x8xf32> to vector<16x16x8xf32>
    %74 = arith.mulf %69, %73 : vector<16x16x8xf32>
    %75 = arith.addf %68, %74 : vector<16x16x8xf32>
    %c2_64 = arith.constant 2 : index
    %c9_65 = arith.constant 9 : index
    %c0_66 = arith.constant 0 : index
    %76 = vector.load %arg9[%c2_64, %c9_65, %c0_66] : memref<18x25x8xf32, #tpu.memory_space<vmem>>, vector<16x16x8xf32>
    %c8_67 = arith.constant 8 : index
    %c0_68 = arith.constant 0 : index
    %c0_69 = arith.constant 0 : index
    %77 = vector.load %arg5[%c8_67, %c0_68, %c0_69] : memref<9x1x8xf32, #tpu.memory_space<vmem>>, vector<1x1x8xf32>
    %78 = vector.shape_cast %77 : vector<1x1x8xf32> to vector<1x8xf32>
    %79 = vector.shape_cast %78 : vector<1x8xf32> to vector<1x1x8xf32>
    %80 = vector.broadcast %79 : vector<1x1x8xf32> to vector<16x16x8xf32>
    %81 = arith.mulf %76, %80 : vector<16x16x8xf32>
    %82 = arith.addf %75, %81 : vector<16x16x8xf32>
    %c0_70 = arith.constant 0 : index
    %c0_71 = arith.constant 0 : index
    %83 = vector.load %arg6[%c0_70, %c0_71] : memref<1x8xf32, #tpu.memory_space<vmem>>, vector<1x8xf32>
    %84 = vector.shape_cast %83 : vector<1x8xf32> to vector<1x1x8xf32>
    %85 = vector.broadcast %84 : vector<1x1x8xf32> to vector<16x16x8xf32>
    %86 = arith.mulf %82, %85 : vector<16x16x8xf32>
    %c0_72 = arith.constant 0 : index
    %c0_73 = arith.constant 0 : index
    %87 = vector.load %arg7[%c0_72, %c0_73] : memref<1x8xf32, #tpu.memory_space<vmem>>, vector<1x8xf32>
    %88 = vector.shape_cast %87 : vector<1x8xf32> to vector<1x1x8xf32>
    %89 = vector.broadcast %88 : vector<1x1x8xf32> to vector<16x16x8xf32>
    %90 = arith.addf %86, %89 : vector<16x16x8xf32>
    %cst_74 = arith.constant 0.000000e+00 : f32
    %91 = vector.broadcast %cst_74 : f32 to vector<16x16x8xf32>
    %92 = arith.maximumf %90, %91 : vector<16x16x8xf32>
    %93 = tpu.concatenate %13, %92 in 2 : vector<16x16x8xf32>, vector<16x16x8xf32> -> vector<16x16x16xf32>
    %c0_75 = arith.constant 0 : index
    %c0_76 = arith.constant 0 : index
    %c0_77 = arith.constant 0 : index
    %c0_78 = arith.constant 0 : index
    %94 = vector.load %arg8[%c0_75, %c0_76, %c0_77, %c0_78] : memref<1x16x16x16xf32, #tpu.memory_space<vmem>>, vector<1x16x16x16xf32>
    %95 = vector.shape_cast %94 : vector<1x16x16x16xf32> to vector<16x16x16xf32>
    %96 = vector.shape_cast %93 : vector<16x16x16xf32> to vector<1x16x16x16xf32>
    tpu.vector_store %arg8[%c0_75, %c0_76, %c0_77, %c0_78], %96 {strides = array<i32>} : memref<1x16x16x16xf32, #tpu.memory_space<vmem>>, vector<1x16x16x16xf32>,
    return
  }
  func.func @transform_0(%arg0: i32) -> (i32, i32, i32, i32) {
    %c0_i32 = arith.constant 0 : i32
    %c0_i32_0 = arith.constant 0 : i32
    %c0_i32_1 = arith.constant 0 : i32
    %c0_i32_2 = arith.constant 0 : i32
    return %arg0, %c0_i32, %c0_i32_0, %c0_i32_1 : i32, i32, i32, i32
  }
  func.func @transform_1(%arg0: i32) -> (i32, i32) {
    %c0_i32 = arith.constant 0 : i32
    %c0_i32_0 = arith.constant 0 : i32
    %c0_i32_1 = arith.constant 0 : i32
    return %c0_i32, %c0_i32_0 : i32, i32
  }
  func.func @transform_2(%arg0: i32) -> (i32, i32) {
    %c0_i32 = arith.constant 0 : i32
    %c0_i32_0 = arith.constant 0 : i32
    %c0_i32_1 = arith.constant 0 : i32
    return %c0_i32, %c0_i32_0 : i32, i32
  }
  func.func @transform_3(%arg0: i32) -> (i32, i32) {
    %c0_i32 = arith.constant 0 : i32
    %c0_i32_0 = arith.constant 0 : i32
    %c0_i32_1 = arith.constant 0 : i32
    return %c0_i32, %c0_i32_0 : i32, i32
  }
  func.func @transform_4(%arg0: i32) -> (i32, i32, i32) {
    %c0_i32 = arith.constant 0 : i32
    %c0_i32_0 = arith.constant 0 : i32
    %c0_i32_1 = arith.constant 0 : i32
    %c0_i32_2 = arith.constant 0 : i32
    return %c0_i32, %c0_i32_0, %c0_i32_1 : i32, i32, i32
  }
  func.func @transform_5(%arg0: i32) -> (i32, i32) {
    %c0_i32 = arith.constant 0 : i32
    %c0_i32_0 = arith.constant 0 : i32
    %c0_i32_1 = arith.constant 0 : i32
    return %c0_i32, %c0_i32_0 : i32, i32
  }
  func.func @transform_6(%arg0: i32) -> (i32, i32) {
    %c0_i32 = arith.constant 0 : i32
    %c0_i32_0 = arith.constant 0 : i32
    %c0_i32_1 = arith.constant 0 : i32
    return %c0_i32, %c0_i32_0 : i32, i32
  }
  func.func @transform_7(%arg0: i32) -> (i32, i32, i32, i32) {
    %c0_i32 = arith.constant 0 : i32
    %c0_i32_0 = arith.constant 0 : i32
    %c0_i32_1 = arith.constant 0 : i32
    %c0_i32_2 = arith.constant 0 : i32
    return %arg0, %c0_i32, %c0_i32_0, %c0_i32_1 : i32, i32, i32, i32
  }
}

</mosaic_0001>

<llo_original>
// kernel: ghost_bottleneck_nchw.2
$region0: #{ghost_bottleneck_nchw.2}
  #allocation0 [shape = 'u32[]', space=smem, size = 0x4, offset = 0x4, fixed_abs, tag = 'smem constant byte address 0x4 - core index']
  #allocation1 [shape = 'u32[72,128]{1,0:T(1,128)}', space=vmem, size = 0x9000, scoped, tag = 'internal scratch']
  #allocation2 [shape = 'f32[18,25,8]{2,1,0:T(8,128)}', space=vmem, size = 0x48000, scoped, tag = 'scratch operand']
  %s0 = inlined_call_operand.vmem [shape: f32[2,16,16,16], index: 0, kind: input, shape index: {}]
  %s1 = inlined_call_operand.vmem [shape: f32[16,8], index: 1, kind: input, shape index: {}]
  %s2 = inlined_call_operand.vmem [shape: f32[1,8], index: 2, kind: input, shape index: {}]
  %s3 = inlined_call_operand.vmem [shape: f32[1,8], index: 3, kind: input, shape index: {}]
  %s4 = inlined_call_operand.vmem [shape: f32[9,1,8], index: 4, kind: input, shape index: {}]
  %s5 = inlined_call_operand.vmem [shape: f32[1,8], index: 5, kind: input, shape index: {}]
  %s6 = inlined_call_operand.vmem [shape: f32[1,8], index: 6, kind: input, shape index: {}]
  %s7 = inlined_call_operand.vmem [shape: f32[2,16,16,16], index: 7, kind: output, shape index: {}]
  %s8 = sld [smem:[#allocation0]]
  $region61: #{ghost_bottleneck_nchw.2} parent=0
    _
  %s10 = ssub.s32 1, %s8
  %s11 = scalar_select 0, %s10, %s8
  loop: start=0, step=1, limit=4
  $region2: #{ghost_bottleneck_nchw.2} parent=0 // loop_pre_header
    _
  $region3: #{ghost_bottleneck_nchw.2} parent=0 // loop_header
    %s13 = sphi 0, %s17
    %p14 = scmp.ge.s32.totalorder %s13, 4
    %s23 = sphi 0, %s25
    %s26 = sphi 0, %s23
    %s27 = sphi 0, %s26
    %s43 = sphi 0, %s27
    %s47 = sphi 0, %s47
    %s49 = sphi 0, %s47
    %s50 = sphi 0, %s49
    %s64 = sphi 0, %s50
    %s68 = sphi 0, %s68
    %s70 = sphi 0, %s68
    %s71 = sphi 0, %s70
    %s85 = sphi 0, %s71
    %s89 = sphi 0, %s89
    %s91 = sphi 0, %s89
    %s92 = sphi 0, %s91
    %s106 = sphi 0, %s92
    %s110 = sphi 0, %s110
    %s112 = sphi 0, %s110
    %s113 = sphi 0, %s112
    %s127 = sphi 0, %s113
    %s131 = sphi 0, %s131
    %s133 = sphi 0, %s131
    %s134 = sphi 0, %s133
    %s148 = sphi 0, %s134
    %s152 = sphi 0, %s152
    %s154 = sphi 0, %s152
    %s155 = sphi 0, %s154
    %s169 = sphi 0, %s155
    %s175 = sphi 0, %s177
    %s178 = sphi 0, %s175
    %s179 = sphi 0, %s178
    %s195 = sphi 0, %s179
  $region4: #{ghost_bottleneck_nchw.2} parent=0 // loop_header_branch
    %16 = sbr.rel (%p14) target = $region8
  $region5: #{ghost_bottleneck_nchw.2} parent=0 // loop_body
    %s18 = ssub.s32 %s13, 1
    %s19 = ssub.s32 %s13, 2
    %s20 = sadd.s32 %s13, 1
    %s21 = ssub.s32 %s13, %s20
    %p22 = scmp.eq.s32.totalorder %s21, 0
    %s24 = sadd.s32 %s23, 1
    %s25 = scalar_select %p22, %s23, %s24
    %p28 = pneg %p22
    %p29 = scmp.eq.s32.totalorder %s13, 1
    %p30 = por %p28, %p29
    %p31 = scmp.ne.s32.totalorder %s23, %s26
    %p32 = scmp.eq.s32.totalorder %s13, 0
    %p33 = por %p31, %p32
    %p34 = scmp.ne.s32.totalorder %s23, %s26
    %p35 = scmp.eq.s32.totalorder %s18, 1
    %p36 = por %p34, %p35
    %p37 = scmp.ne.s32.totalorder %s26, %s27
    %p38 = scmp.eq.s32.totalorder %s18, 0
    %p39 = por %p37, %p38
    %p40 = scmp.ne.s32.totalorder %s26, %s27
    %p41 = scmp.eq.s32.totalorder %s19, 1
    %p42 = por %p40, %p41
    %p44 = scmp.ne.s32.totalorder %s27, %s43
    %p45 = scmp.eq.s32.totalorder %s19, 0
    %p46 = por %p44, %p45
    %s48 = sadd.s32 %s47, 1
    %p51 = scmp.eq.s32.totalorder %s13, 1
    %p52 = scmp.ne.s32.totalorder %s47, %s49
    %p53 = scmp.eq.s32.totalorder %s13, 0
    %p54 = por %p52, %p53
    %p55 = scmp.ne.s32.totalorder %s47, %s49
    %p56 = scmp.eq.s32.totalorder %s18, 1
    %p57 = por %p55, %p56
    %p58 = scmp.ne.s32.totalorder %s49, %s50
    %p59 = scmp.eq.s32.totalorder %s18, 0
    %p60 = por %p58, %p59
    %p61 = scmp.ne.s32.totalorder %s49, %s50
    %p62 = scmp.eq.s32.totalorder %s19, 1
    %p63 = por %p61, %p62
    %p65 = scmp.ne.s32.totalorder %s50, %s64
    %p66 = scmp.eq.s32.totalorder %s19, 0
    %p67 = por %p65, %p66
    %s69 = sadd.s32 %s68, 1
    %p72 = scmp.eq.s32.totalorder %s13, 1
    %p73 = scmp.ne.s32.totalorder %s68, %s70
    %p74 = scmp.eq.s32.totalorder %s13, 0
    %p75 = por %p73, %p74
    %p76 = scmp.ne.s32.totalorder %s68, %s70
    %p77 = scmp.eq.s32.totalorder %s18, 1
    %p78 = por %p76, %p77
    %p79 = scmp.ne.s32.totalorder %s70, %s71
    %p80 = scmp.eq.s32.totalorder %s18, 0
    %p81 = por %p79, %p80
    %p82 = scmp.ne.s32.totalorder %s70, %s71
    %p83 = scmp.eq.s32.totalorder %s19, 1
    %p84 = por %p82, %p83
    %p86 = scmp.ne.s32.totalorder %s71, %s85
    %p87 = scmp.eq.s32.totalorder %s19, 0
    %p88 = por %p86, %p87
    %s90 = sadd.s32 %s89, 1
    %p93 = scmp.eq.s32.totalorder %s13, 1
    %p94 = scmp.ne.s32.totalorder %s89, %s91
    %p95 = scmp.eq.s32.totalorder %s13, 0
    %p96 = por %p94, %p95
    %p97 = scmp.ne.s32.totalorder %s89, %s91
    %p98 = scmp.eq.s32.totalorder %s18, 1
    %p99 = por %p97, %p98
    %p100 = scmp.ne.s32.totalorder %s91, %s92
    %p101 = scmp.eq.s32.totalorder %s18, 0
    %p102 = por %p100, %p101
    %p103 = scmp.ne.s32.totalorder %s91, %s92
    %p104 = scmp.eq.s32.totalorder %s19, 1
    %p105 = por %p103, %p104
    %p107 = scmp.ne.s32.totalorder %s92, %s106
    %p108 = scmp.eq.s32.totalorder %s19, 0
    %p109 = por %p107, %p108
    %s111 = sadd.s32 %s110, 1
    %p114 = scmp.eq.s32.totalorder %s13, 1
    %p115 = scmp.ne.s32.totalorder %s110, %s112
    %p116 = scmp.eq.s32.totalorder %s13, 0
    %p117 = por %p115, %p116
    %p118 = scmp.ne.s32.totalorder %s110, %s112
    %p119 = scmp.eq.s32.totalorder %s18, 1
    %p120 = por %p118, %p119
    %p121 = scmp.ne.s32.totalorder %s112, %s113
    %p122 = scmp.eq.s32.totalorder %s18, 0
    %p123 = por %p121, %p122
    %p124 = scmp.ne.s32.totalorder %s112, %s113
    %p125 = scmp.eq.s32.totalorder %s19, 1
    %p126 = por %p124, %p125
    %p128 = scmp.ne.s32.totalorder %s113, %s127
    %p129 = scmp.eq.s32.totalorder %s19, 0
    %p130 = por %p128, %p129
    %s132 = sadd.s32 %s131, 1
    %p135 = scmp.eq.s32.totalorder %s13, 1
    %p136 = scmp.ne.s32.totalorder %s131, %s133
    %p137 = scmp.eq.s32.totalorder %s13, 0
    %p138 = por %p136, %p137
    %p139 = scmp.ne.s32.totalorder %s131, %s133
    %p140 = scmp.eq.s32.totalorder %s18, 1
    %p141 = por %p139, %p140
    %p142 = scmp.ne.s32.totalorder %s133, %s134
    %p143 = scmp.eq.s32.totalorder %s18, 0
    %p144 = por %p142, %p143
    %p145 = scmp.ne.s32.totalorder %s133, %s134
    %p146 = scmp.eq.s32.totalorder %s19, 1
    %p147 = por %p145, %p146
    %p149 = scmp.ne.s32.totalorder %s134, %s148
    %p150 = scmp.eq.s32.totalorder %s19, 0
    %p151 = por %p149, %p150
    %s153 = sadd.s32 %s152, 1
    %p156 = scmp.eq.s32.totalorder %s13, 1
    %p157 = scmp.ne.s32.totalorder %s152, %s154
    %p158 = scmp.eq.s32.totalorder %s13, 0
    %p159 = por %p157, %p158
    %p160 = scmp.ne.s32.totalorder %s152, %s154
    %p161 = scmp.eq.s32.totalorder %s18, 1
    %p162 = por %p160, %p161
    %p163 = scmp.ne.s32.totalorder %s154, %s155
    %p164 = scmp.eq.s32.totalorder %s18, 0
    %p165 = por %p163, %p164
    %p166 = scmp.ne.s32.totalorder %s154, %s155
    %p167 = scmp.eq.s32.totalorder %s19, 1
    %p168 = por %p166, %p167
    %p170 = scmp.ne.s32.totalorder %s155, %s169
    %p171 = scmp.eq.s32.totalorder %s19, 0
    %p172 = por %p170, %p171
    %s173 = ssub.s32 %s13, %s20
    %p174 = scmp.eq.s32.totalorder %s173, 0
    %s176 = sadd.s32 %s175, 1
    %s177 = scalar_select %p174, %s175, %s176
    %p180 = pneg %p174
    %p181 = scmp.eq.s32.totalorder %s13, 1
    %p182 = por %p180, %p181
    %p183 = scmp.ne.s32.totalorder %s175, %s178
    %p184 = scmp.eq.s32.totalorder %s13, 0
    %p185 = por %p183, %p184
    %p186 = scmp.ne.s32.totalorder %s175, %s178
    %p187 = scmp.eq.s32.totalorder %s18, 1
    %p188 = por %p186, %p187
    %p189 = scmp.ne.s32.totalorder %s178, %s179
    %p190 = scmp.eq.s32.totalorder %s18, 0
    %p191 = por %p189, %p190
    %p192 = scmp.ne.s32.totalorder %s178, %s179
    %p193 = scmp.eq.s32.totalorder %s19, 1
    %p194 = por %p192, %p193
    %p196 = scmp.ne.s32.totalorder %s179, %s195
    %p197 = scmp.eq.s32.totalorder %s19, 0
    %p198 = por %p196, %p197
    %p199 = scmp.le.s32.totalorder 1, %s13
    %p200 = scmp.lt.s32.totalorder %s13, 3
    %p201 = pnand %p199, %p200
    %p202 = pneg %p201
    // Predicated region
    $region9: #{ghost_bottleneck_nchw.2} parent=5 // pred_check
      _
    $region10: #{ghost_bottleneck_nchw.2} parent=5 // pred_check_branch
      %204 = sbr.rel (%p201) target = $region12
    $region11: #{ghost_bottleneck_nchw.2} parent=5 // pred_region
      %s205 = ssub.s32 %s13, 1
      // Predicated region
      $region13: #{ghost_bottleneck_nchw.2} parent=11 // pred_check
        %p206 = pneg %p60
      $region14: #{ghost_bottleneck_nchw.2} parent=11 // pred_check_branch
        %208 = sbr.rel (%p206) target = $region16
      $region15: #{ghost_bottleneck_nchw.2} parent=11 // pred_region
        _
      $region16: #{ghost_bottleneck_nchw.2} parent=11 // pred_fallthru
        _
      // Predicated region
      $region17: #{ghost_bottleneck_nchw.2} parent=11 // pred_check
        %p209 = pneg %p81
      $region18: #{ghost_bottleneck_nchw.2} parent=11 // pred_check_branch
        %211 = sbr.rel (%p209) target = $region20
      $region19: #{ghost_bottleneck_nchw.2} parent=11 // pred_region
        _
      $region20: #{ghost_bottleneck_nchw.2} parent=11 // pred_fallthru
        _
      // Predicated region
      $region21: #{ghost_bottleneck_nchw.2} parent=11 // pred_check
        %p212 = pneg %p102
      $region22: #{ghost_bottleneck_nchw.2} parent=11 // pred_check_branch
        %214 = sbr.rel (%p212) target = $region24
      $region23: #{ghost_bottleneck_nchw.2} parent=11 // pred_region
        _
      $region24: #{ghost_bottleneck_nchw.2} parent=11 // pred_fallthru
        _
      // Predicated region
      $region25: #{ghost_bottleneck_nchw.2} parent=11 // pred_check
        %p215 = pneg %p123
      $region26: #{ghost_bottleneck_nchw.2} parent=11 // pred_check_branch
        %217 = sbr.rel (%p215) target = $region28
      $region27: #{ghost_bottleneck_nchw.2} parent=11 // pred_region
        _
      $region28: #{ghost_bottleneck_nchw.2} parent=11 // pred_fallthru
        _
      // Predicated region
      $region29: #{ghost_bottleneck_nchw.2} parent=11 // pred_check
        %p218 = pneg %p144
      $region30: #{ghost_bottleneck_nchw.2} parent=11 // pred_check_branch
        %220 = sbr.rel (%p218) target = $region32
      $region31: #{ghost_bottleneck_nchw.2} parent=11 // pred_region
        _
      $region32: #{ghost_bottleneck_nchw.2} parent=11 // pred_fallthru
        _
      // Predicated region
      $region33: #{ghost_bottleneck_nchw.2} parent=11 // pred_check
        %p221 = pneg %p165
      $region34: #{ghost_bottleneck_nchw.2} parent=11 // pred_check_branch
        %223 = sbr.rel (%p221) target = $region36
      $region35: #{ghost_bottleneck_nchw.2} parent=11 // pred_region
        _
      $region36: #{ghost_bottleneck_nchw.2} parent=11 // pred_fallthru
        _
    $region12: #{ghost_bottleneck_nchw.2} parent=5 // pred_fallthru
      _
    %p224 = scmp.lt.s32.totalorder %s13, 2
    // Predicated region
    $region37: #{ghost_bottleneck_nchw.2} parent=5 // pred_check
      %p225 = pneg %p224
    $region38: #{ghost_bottleneck_nchw.2} parent=5 // pred_check_branch
      %227 = sbr.rel (%p225) target = $region40
    $region39: #{ghost_bottleneck_nchw.2} parent=5 // pred_region
      // Predicated region
      $region41: #{ghost_bottleneck_nchw.2} parent=39 // pred_check
        %p228 = pneg %p33
      $region42: #{ghost_bottleneck_nchw.2} parent=39 // pred_check_branch
        %230 = sbr.rel (%p228) target = $region44
      $region43: #{ghost_bottleneck_nchw.2} parent=39 // pred_region
        %p231 = scmp.lt.s32.totalorder %s13, 1
        %s232 = scalar_select %p231, %s13, 1
        %s233 = smul.addr %s232, 32
        %s234 = smul.addr %s233, 8
        %s235 = scalar_lea.vmem %s0, %s234
      $region44: #{ghost_bottleneck_nchw.2} parent=39 // pred_fallthru
        _
    $region40: #{ghost_bottleneck_nchw.2} parent=5 // pred_fallthru
      _
    %p236 = scmp.le.s32.totalorder 1, %s13
    %p237 = scmp.lt.s32.totalorder %s13, 3
    %p238 = pnand %p236, %p237
    %p239 = pneg %p238
    // Predicated region
    $region45: #{ghost_bottleneck_nchw.2} parent=5 // pred_check
      _
    $region46: #{ghost_bottleneck_nchw.2} parent=5 // pred_check_branch
      %241 = sbr.rel (%p238) target = $region48
    $region47: #{ghost_bottleneck_nchw.2} parent=5 // pred_region
      %s242 = ssub.s32 %s13, 1
      %p243 = scmp.lt.s32.totalorder %s18, 1
      %s244 = scalar_select %p243, %s18, 1
      %s245 = smul.addr %s244, 32
      %s246 = smul.addr %s245, 8
      %s247 = scalar_lea.vmem %s0, %s246
      %p248 = pneg %p39
      %p249 = pneg %p36
      %p250 = pneg %p60
      %p251 = pneg %p57
      %p252 = pneg %p81
      %p253 = pneg %p78
      %p254 = pneg %p102
      %p255 = pneg %p99
      %p256 = pneg %p123
      %p257 = pneg %p120
      %p258 = pneg %p144
      %p259 = pneg %p141
      %p260 = pneg %p165
      %p261 = pneg %p162
      %p262 = pneg %p191
      %p263 = pneg %p188
      %p264 = scmp.lt.s32.totalorder %s18, 1
      %s265 = scalar_select %p264, %s18, 1
      %s266 = smul.addr %s265, 32
      %s267 = smul.addr %s266, 8
      %s268 = scalar_lea.vmem %s7, %s267
      %p269 = scmp.lt.s32.totalorder %s18, 1
      %s270 = scalar_select %p269, %s18, 1
      %s271 = smul.addr %s270, 32
      %s272 = smul.addr %s271, 8
      %s273 = scalar_lea.vmem %s0, %s272
      %p274 = scmp.lt.s32.totalorder %s18, 1
      %s275 = scalar_select %p274, %s18, 1
      %s276 = smul.addr %s275, 32
      %s277 = smul.addr %s276, 8
      %s278 = scalar_lea.vmem %s7, %s277
      %v279 = vld [vmem:[%s273] sm:$0xff]
      %v280 = vld [vmem:[%s273 + $0x8] sm:$0xff]
      %v281 = vld [vmem:[%s273 + $0x10] sm:$0xff]
      %v282 = vld [vmem:[%s273 + $0x18] sm:$0xff]
      %v283 = vld [vmem:[%s273 + $0x20] sm:$0xff]
      %v284 = vld [vmem:[%s273 + $0x28] sm:$0xff]
      %v285 = vld [vmem:[%s273 + $0x30] sm:$0xff]
      %v286 = vld [vmem:[%s273 + $0x38] sm:$0xff]
      %v287 = vld [vmem:[%s273 + $0x40] sm:$0xff]
      %v288 = vld [vmem:[%s273 + $0x48] sm:$0xff]
      %v289 = vld [vmem:[%s273 + $0x50] sm:$0xff]
      %v290 = vld [vmem:[%s273 + $0x58] sm:$0xff]
      %v291 = vld [vmem:[%s273 + $0x60] sm:$0xff]
      %v292 = vld [vmem:[%s273 + $0x68] sm:$0xff]
      %v293 = vld [vmem:[%s273 + $0x70] sm:$0xff]
      %v294 = vld [vmem:[%s273 + $0x78] sm:$0xff]
      %v295 = vld [vmem:[%s273 + $0x80] sm:$0xff]
      %v296 = vld [vmem:[%s273 + $0x88] sm:$0xff]
      %v297 = vld [vmem:[%s273 + $0x90] sm:$0xff]
      %v298 = vld [vmem:[%s273 + $0x98] sm:$0xff]
      %v299 = vld [vmem:[%s273 + $0xa0] sm:$0xff]
      %v300 = vld [vmem:[%s273 + $0xa8] sm:$0xff]
      %v301 = vld [vmem:[%s273 + $0xb0] sm:$0xff]
      %v302 = vld [vmem:[%s273 + $0xb8] sm:$0xff]
      %v303 = vld [vmem:[%s273 + $0xc0] sm:$0xff]
      %v304 = vld [vmem:[%s273 + $0xc8] sm:$0xff]
      %v305 = vld [vmem:[%s273 + $0xd0] sm:$0xff]
      %v306 = vld [vmem:[%s273 + $0xd8] sm:$0xff]
      %v307 = vld [vmem:[%s273 + $0xe0] sm:$0xff]
      %v308 = vld [vmem:[%s273 + $0xe8] sm:$0xff]
      %v309 = vld [vmem:[%s273 + $0xf0] sm:$0xff]
      %v310 = vld [vmem:[%s273 + $0xf8] sm:$0xff]
      %v311 = vld [vmem:[%s1] sm:$0xff]
      %v312 = vld [vmem:[%s1 + $0x8] sm:$0xff]
      %vm313 = vcmask 130048
      %v315 = vsel %vm313, %v279, 0
      %v318 = vsel %vm313, %v280, 0
      %v321 = vsel %vm313, %v281, 0
      %v324 = vsel %vm313, %v282, 0
      %v327 = vsel %vm313, %v283, 0
      %v330 = vsel %vm313, %v284, 0
      %v333 = vsel %vm313, %v285, 0
      %v336 = vsel %vm313, %v286, 0
      %v339 = vsel %vm313, %v287, 0
      %v342 = vsel %vm313, %v288, 0
      %v345 = vsel %vm313, %v289, 0
      %v348 = vsel %vm313, %v290, 0
      %v351 = vsel %vm313, %v291, 0
      %v354 = vsel %vm313, %v292, 0
      %v357 = vsel %vm313, %v293, 0
      %v360 = vsel %vm313, %v294, 0
      %v363 = vsel %vm313, %v295, 0
      %v366 = vsel %vm313, %v296, 0
      %v369 = vsel %vm313, %v297, 0
      %v372 = vsel %vm313, %v298, 0
      %v375 = vsel %vm313, %v299, 0
      %v378 = vsel %vm313, %v300, 0
      %v381 = vsel %vm313, %v301, 0
      %v384 = vsel %vm313, %v302, 0
      %v387 = vsel %vm313, %v303, 0
      %v390 = vsel %vm313, %v304, 0
      %v393 = vsel %vm313, %v305, 0
      %v396 = vsel %vm313, %v306, 0
      %v399 = vsel %vm313, %v307, 0
      %v402 = vsel %vm313, %v308, 0
      %v405 = vsel %vm313, %v309, 0
      %v408 = vsel %vm313, %v310, 0
      %410 = vmatpush.msra.mxu0 0.0
      %411 = vmatpush.msra.mxu0 0.0
      %412 = vmatpush.msra.mxu0 0.0
      %413 = vmatpush.msra.mxu0 0.0
      %414 = vmatpush.msra.mxu0 0.0
      %415 = vmatpush.msra.mxu0 0.0
      %416 = vmatpush.msra.mxu0 0.0
      %417 = vmatpush.msra.mxu0 0.0
      %418 = vmatpush.msra.mxu0 0.0
      %419 = vmatpush.msra.mxu0 0.0
      %420 = vmatpush.msra.mxu0 0.0
      %421 = vmatpush.msra.mxu0 0.0
      %422 = vmatpush.msra.mxu0 0.0
      %423 = vmatpush.msra.mxu0 0.0
      %424 = vmatpush.msra.mxu0 %v312
      %425 = vmatpush.msra.mxu0 %v311
      %426 = vmatmul.f32.gmra.mxu0 %v315
      %v427 = vpop.f32.mrf.mxu0
      %v428 = vadd.f32 0.0, %v427
      %429 = vmatmul.f32.gmra.mxu0 %v318
      %v430 = vpop.f32.mrf.mxu0
      %v431 = vadd.f32 0.0, %v430
      %432 = vmatmul.f32.gmra.mxu0 %v321
      %v433 = vpop.f32.mrf.mxu0
      %v434 = vadd.f32 0.0, %v433
      %435 = vmatmul.f32.gmra.mxu0 %v324
      %v436 = vpop.f32.mrf.mxu0
      %v437 = vadd.f32 0.0, %v436
      %438 = vmatmul.f32.gmra.mxu0 %v327
      %v439 = vpop.f32.mrf.mxu0
      %v440 = vadd.f32 0.0, %v439
      %441 = vmatmul.f32.gmra.mxu0 %v330
      %v442 = vpop.f32.mrf.mxu0
      %v443 = vadd.f32 0.0, %v442
      %444 = vmatmul.f32.gmra.mxu0 %v333
      %v445 = vpop.f32.mrf.mxu0
      %v446 = vadd.f32 0.0, %v445
      %447 = vmatmul.f32.gmra.mxu0 %v336
      %v448 = vpop.f32.mrf.mxu0
      %v449 = vadd.f32 0.0, %v448
      %450 = vmatmul.f32.gmra.mxu0 %v339
      %v451 = vpop.f32.mrf.mxu0
      %v452 = vadd.f32 0.0, %v451
      %453 = vmatmul.f32.gmra.mxu0 %v342
      %v454 = vpop.f32.mrf.mxu0
      %v455 = vadd.f32 0.0, %v454
      %456 = vmatmul.f32.gmra.mxu0 %v345
      %v457 = vpop.f32.mrf.mxu0
      %v458 = vadd.f32 0.0, %v457
      %459 = vmatmul.f32.gmra.mxu0 %v348
      %v460 = vpop.f32.mrf.mxu0
      %v461 = vadd.f32 0.0, %v460
      %462 = vmatmul.f32.gmra.mxu0 %v351
      %v463 = vpop.f32.mrf.mxu0
      %v464 = vadd.f32 0.0, %v463
      %465 = vmatmul.f32.gmra.mxu0 %v354
      %v466 = vpop.f32.mrf.mxu0
      %v467 = vadd.f32 0.0, %v466
      %468 = vmatmul.f32.gmra.mxu0 %v357
      %v469 = vpop.f32.mrf.mxu0
      %v470 = vadd.f32 0.0, %v469
      %471 = vmatmul.f32.gmra.mxu0 %v360
      %v472 = vpop.f32.mrf.mxu0
      %v473 = vadd.f32 0.0, %v472
      %474 = vmatmul.f32.gmra.mxu0 %v363
      %v475 = vpop.f32.mrf.mxu0
      %v476 = vadd.f32 0.0, %v475
      %477 = vmatmul.f32.gmra.mxu0 %v366
      %v478 = vpop.f32.mrf.mxu0
      %v479 = vadd.f32 0.0, %v478
      %480 = vmatmul.f32.gmra.mxu0 %v369
      %v481 = vpop.f32.mrf.mxu0
      %v482 = vadd.f32 0.0, %v481
      %483 = vmatmul.f32.gmra.mxu0 %v372
      %v484 = vpop.f32.mrf.mxu0
      %v485 = vadd.f32 0.0, %v484
      %486 = vmatmul.f32.gmra.mxu0 %v375
      %v487 = vpop.f32.mrf.mxu0
      %v488 = vadd.f32 0.0, %v487
      %489 = vmatmul.f32.gmra.mxu0 %v378
      %v490 = vpop.f32.mrf.mxu0
      %v491 = vadd.f32 0.0, %v490
      %492 = vmatmul.f32.gmra.mxu0 %v381
      %v493 = vpop.f32.mrf.mxu0
      %v494 = vadd.f32 0.0, %v493
      %495 = vmatmul.f32.gmra.mxu0 %v384
      %v496 = vpop.f32.mrf.mxu0
      %v497 = vadd.f32 0.0, %v496
      %498 = vmatmul.f32.gmra.mxu0 %v387
      %v499 = vpop.f32.mrf.mxu0
      %v500 = vadd.f32 0.0, %v499
      %501 = vmatmul.f32.gmra.mxu0 %v390
      %v502 = vpop.f32.mrf.mxu0
      %v503 = vadd.f32 0.0, %v502
      %504 = vmatmul.f32.gmra.mxu0 %v393
      %v505 = vpop.f32.mrf.mxu0
      %v506 = vadd.f32 0.0, %v505
      %507 = vmatmul.f32.gmra.mxu0 %v396
      %v508 = vpop.f32.mrf.mxu0
      %v509 = vadd.f32 0.0, %v508
      %510 = vmatmul.f32.gmra.mxu0 %v399
      %v511 = vpop.f32.mrf.mxu0
      %v512 = vadd.f32 0.0, %v511
      %513 = vmatmul.f32.gmra.mxu0 %v402
      %v514 = vpop.f32.mrf.mxu0
      %v515 = vadd.f32 0.0, %v514
      %516 = vmatmul.f32.gmra.mxu0 %v405
      %v517 = vpop.f32.mrf.mxu0
      %v518 = vadd.f32 0.0, %v517
      %519 = vmatmul.f32.gmra.mxu0 %v408
      %v520 = vpop.f32.mrf.mxu0
      %v521 = vadd.f32 0.0, %v520
      %522 = vdwg.mxu0
      %v523 = vld [vmem:[%s2] sm:$0x1]
      %v525 = vperm.slane %v523, 0
      %v527 = vmul.f32 %v428, %v525
      %v528 = vmul.f32 %v431, %v525
      %v529 = vmul.f32 %v434, %v525
      %v530 = vmul.f32 %v437, %v525
      %v531 = vmul.f32 %v440, %v525
      %v532 = vmul.f32 %v443, %v525
      %v533 = vmul.f32 %v446, %v525
      %v534 = vmul.f32 %v449, %v525
      %v535 = vmul.f32 %v452, %v525
      %v536 = vmul.f32 %v455, %v525
      %v537 = vmul.f32 %v458, %v525
      %v538 = vmul.f32 %v461, %v525
      %v539 = vmul.f32 %v464, %v525
      %v540 = vmul.f32 %v467, %v525
      %v541 = vmul.f32 %v470, %v525
      %v542 = vmul.f32 %v473, %v525
      %v543 = vmul.f32 %v476, %v525
      %v544 = vmul.f32 %v479, %v525
      %v545 = vmul.f32 %v482, %v525
      %v546 = vmul.f32 %v485, %v525
      %v547 = vmul.f32 %v488, %v525
      %v548 = vmul.f32 %v491, %v525
      %v549 = vmul.f32 %v494, %v525
      %v550 = vmul.f32 %v497, %v525
      %v551 = vmul.f32 %v500, %v525
      %v552 = vmul.f32 %v503, %v525
      %v553 = vmul.f32 %v506, %v525
      %v554 = vmul.f32 %v509, %v525
      %v555 = vmul.f32 %v512, %v525
      %v556 = vmul.f32 %v515, %v525
      %v557 = vmul.f32 %v518, %v525
      %v558 = vmul.f32 %v521, %v525
      %v559 = vld [vmem:[%s3] sm:$0x1]
      %v561 = vperm.slane %v559, 0
      %v563 = vadd.f32 %v527, %v561
      %v564 = vadd.f32 %v528, %v561
      %v565 = vadd.f32 %v529, %v561
      %v566 = vadd.f32 %v530, %v561
      %v567 = vadd.f32 %v531, %v561
      %v568 = vadd.f32 %v532, %v561
      %v569 = vadd.f32 %v533, %v561
      %v570 = vadd.f32 %v534, %v561
      %v571 = vadd.f32 %v535, %v561
      %v572 = vadd.f32 %v536, %v561
      %v573 = vadd.f32 %v537, %v561
      %v574 = vadd.f32 %v538, %v561
      %v575 = vadd.f32 %v539, %v561
      %v576 = vadd.f32 %v540, %v561
      %v577 = vadd.f32 %v541, %v561
      %v578 = vadd.f32 %v542, %v561
      %v579 = vadd.f32 %v543, %v561
      %v580 = vadd.f32 %v544, %v561
      %v581 = vadd.f32 %v545, %v561
      %v582 = vadd.f32 %v546, %v561
      %v583 = vadd.f32 %v547, %v561
      %v584 = vadd.f32 %v548, %v561
      %v585 = vadd.f32 %v549, %v561
      %v586 = vadd.f32 %v550, %v561
      %v587 = vadd.f32 %v551, %v561
      %v588 = vadd.f32 %v552, %v561
      %v589 = vadd.f32 %v553, %v561
      %v590 = vadd.f32 %v554, %v561
      %v591 = vadd.f32 %v555, %v561
      %v592 = vadd.f32 %v556, %v561
      %v593 = vadd.f32 %v557, %v561
      %v594 = vadd.f32 %v558, %v561
      %v595 = vmax.f32 %v563, 0.0
      %v596 = vmax.f32 %v564, 0.0
      %v597 = vmax.f32 %v565, 0.0
      %v598 = vmax.f32 %v566, 0.0
      %v599 = vmax.f32 %v567, 0.0
      %v600 = vmax.f32 %v568, 0.0
      %v601 = vmax.f32 %v569, 0.0
      %v602 = vmax.f32 %v570, 0.0
      %v603 = vmax.f32 %v571, 0.0
      %v604 = vmax.f32 %v572, 0.0
      %v605 = vmax.f32 %v573, 0.0
      %v606 = vmax.f32 %v574, 0.0
      %v607 = vmax.f32 %v575, 0.0
      %v608 = vmax.f32 %v576, 0.0
      %v609 = vmax.f32 %v577, 0.0
      %v610 = vmax.f32 %v578, 0.0
      %v611 = vmax.f32 %v579, 0.0
      %v612 = vmax.f32 %v580, 0.0
      %v613 = vmax.f32 %v581, 0.0
      %v614 = vmax.f32 %v582, 0.0
      %v615 = vmax.f32 %v583, 0.0
      %v616 = vmax.f32 %v584, 0.0
      %v617 = vmax.f32 %v585, 0.0
      %v618 = vmax.f32 %v586, 0.0
      %v619 = vmax.f32 %v587, 0.0
      %v620 = vmax.f32 %v588, 0.0
      %v621 = vmax.f32 %v589, 0.0
      %v622 = vmax.f32 %v590, 0.0
      %v623 = vmax.f32 %v591, 0.0
      %v624 = vmax.f32 %v592, 0.0
      %v625 = vmax.f32 %v593, 0.0
      %v626 = vmax.f32 %v594, 0.0
      %vm627 = vcmask 64512
      %628 = vst.msk [vmem:[#allocation2 + $0x7] sm:$0xff] %vm627, 0.0
      %629 = vst.msk [vmem:[#allocation2 + $0xf] sm:$0xff] %vm627, 0.0
      %vm630 = vcmask 58368
      %631 = vst.msk [vmem:[#allocation2 + $0x17] sm:$0x3] %vm630, 0.0
      %s632 = scalar_lea.vmem [#allocation2], 544
      %633 = vst.msk [vmem:[%s632 + $0x7] sm:$0xff] %vm627, 0.0
      %634 = vst.msk [vmem:[%s632 + $0xf] sm:$0xff] %vm627, 0.0
      %635 = vst.msk [vmem:[%s632 + $0x17] sm:$0x3] %vm630, 0.0
      %s636 = scalar_lea.vmem [#allocation2], 32
      %vm637 = vcmask 57344
      %638 = vst.msk [vmem:[%s636 + $0x7] sm:$0x1] %vm637, 0.0
      %639 = vst.msk [vmem:[%s636 + $0x27] sm:$0x1] %vm637, 0.0
      %640 = vst.msk [vmem:[%s636 + $0x47] sm:$0x1] %vm637, 0.0
      %641 = vst.msk [vmem:[%s636 + $0x67] sm:$0x1] %vm637, 0.0
      %642 = vst.msk [vmem:[%s636 + $0x87] sm:$0x1] %vm637, 0.0
      %643 = vst.msk [vmem:[%s636 + $0xa7] sm:$0x1] %vm637, 0.0
      %644 = vst.msk [vmem:[%s636 + $0xc7] sm:$0x1] %vm637, 0.0
      %645 = vst.msk [vmem:[%s636 + $0xe7] sm:$0x1] %vm637, 0.0
      %646 = vst.msk [vmem:[%s636 + $0x107] sm:$0x1] %vm637, 0.0
      %647 = vst.msk [vmem:[%s636 + $0x127] sm:$0x1] %vm637, 0.0
      %648 = vst.msk [vmem:[%s636 + $0x147] sm:$0x1] %vm637, 0.0
      %649 = vst.msk [vmem:[%s636 + $0x167] sm:$0x1] %vm637, 0.0
      %650 = vst.msk [vmem:[%s636 + $0x187] sm:$0x1] %vm637, 0.0
      %651 = vst.msk [vmem:[%s636 + $0x1a7] sm:$0x1] %vm637, 0.0
      %652 = vst.msk [vmem:[%s636 + $0x1c7] sm:$0x1] %vm637, 0.0
      %653 = vst.msk [vmem:[%s636 + $0x1e7] sm:$0x1] %vm637, 0.0
      %654 = vst.msk [vmem:[%s636 + $0x18] sm:$0x1] %vm637, 0.0
      %655 = vst.msk [vmem:[%s636 + $0x38] sm:$0x1] %vm637, 0.0
      %656 = vst.msk [vmem:[%s636 + $0x58] sm:$0x1] %vm637, 0.0
      %657 = vst.msk [vmem:[%s636 + $0x78] sm:$0x1] %vm637, 0.0
      %658 = vst.msk [vmem:[%s636 + $0x98] sm:$0x1] %vm637, 0.0
      %659 = vst.msk [vmem:[%s636 + $0xb8] sm:$0x1] %vm637, 0.0
      %660 = vst.msk [vmem:[%s636 + $0xd8] sm:$0x1] %vm637, 0.0
      %661 = vst.msk [vmem:[%s636 + $0xf8] sm:$0x1] %vm637, 0.0
      %662 = vst.msk [vmem:[%s636 + $0x118] sm:$0x1] %vm637, 0.0
      %663 = vst.msk [vmem:[%s636 + $0x138] sm:$0x1] %vm637, 0.0
      %664 = vst.msk [vmem:[%s636 + $0x158] sm:$0x1] %vm637, 0.0
      %665 = vst.msk [vmem:[%s636 + $0x178] sm:$0x1] %vm637, 0.0
      %666 = vst.msk [vmem:[%s636 + $0x198] sm:$0x1] %vm637, 0.0
      %667 = vst.msk [vmem:[%s636 + $0x1b8] sm:$0x1] %vm637, 0.0
      %668 = vst.msk [vmem:[%s636 + $0x1d8] sm:$0x1] %vm637, 0.0
      %669 = vst.msk [vmem:[%s636 + $0x1f8] sm:$0x1] %vm637, 0.0
      %670 = vst.msk [vmem:[%s636 + $0x8] sm:$0xff] %vm627, %v595
      %671 = vst.msk [vmem:[%s636 + $0x10] sm:$0xff] %vm627, %v596
      %672 = vst.msk [vmem:[%s636 + $0x28] sm:$0xff] %vm627, %v597
      %673 = vst.msk [vmem:[%s636 + $0x30] sm:$0xff] %vm627, %v598
      %674 = vst.msk [vmem:[%s636 + $0x48] sm:$0xff] %vm627, %v599
      %675 = vst.msk [vmem:[%s636 + $0x50] sm:$0xff] %vm627, %v600
      %676 = vst.msk [vmem:[%s636 + $0x68] sm:$0xff] %vm627, %v601
      %677 = vst.msk [vmem:[%s636 + $0x70] sm:$0xff] %vm627, %v602
      %678 = vst.msk [vmem:[%s636 + $0x88] sm:$0xff] %vm627, %v603
      %679 = vst.msk [vmem:[%s636 + $0x90] sm:$0xff] %vm627, %v604
      %680 = vst.msk [vmem:[%s636 + $0xa8] sm:$0xff] %vm627, %v605
      %681 = vst.msk [vmem:[%s636 + $0xb0] sm:$0xff] %vm627, %v606
      %682 = vst.msk [vmem:[%s636 + $0xc8] sm:$0xff] %vm627, %v607
      %683 = vst.msk [vmem:[%s636 + $0xd0] sm:$0xff] %vm627, %v608
      %684 = vst.msk [vmem:[%s636 + $0xe8] sm:$0xff] %vm627, %v609
      %685 = vst.msk [vmem:[%s636 + $0xf0] sm:$0xff] %vm627, %v610
      %686 = vst.msk [vmem:[%s636 + $0x108] sm:$0xff] %vm627, %v611
      %687 = vst.msk [vmem:[%s636 + $0x110] sm:$0xff] %vm627, %v612
      %688 = vst.msk [vmem:[%s636 + $0x128] sm:$0xff] %vm627, %v613
      %689 = vst.msk [vmem:[%s636 + $0x130] sm:$0xff] %vm627, %v614
      %690 = vst.msk [vmem:[%s636 + $0x148] sm:$0xff] %vm627, %v615
      %691 = vst.msk [vmem:[%s636 + $0x150] sm:$0xff] %vm627, %v616
      %692 = vst.msk [vmem:[%s636 + $0x168] sm:$0xff] %vm627, %v617
      %693 = vst.msk [vmem:[%s636 + $0x170] sm:$0xff] %vm627, %v618
      %694 = vst.msk [vmem:[%s636 + $0x188] sm:$0xff] %vm627, %v619
      %695 = vst.msk [vmem:[%s636 + $0x190] sm:$0xff] %vm627, %v620
      %696 = vst.msk [vmem:[%s636 + $0x1a8] sm:$0xff] %vm627, %v621
      %697 = vst.msk [vmem:[%s636 + $0x1b0] sm:$0xff] %vm627, %v622
      %698 = vst.msk [vmem:[%s636 + $0x1c8] sm:$0xff] %vm627, %v623
      %699 = vst.msk [vmem:[%s636 + $0x1d0] sm:$0xff] %vm627, %v624
      %700 = vst.msk [vmem:[%s636 + $0x1e8] sm:$0xff] %vm627, %v625
      %701 = vst.msk [vmem:[%s636 + $0x1f0] sm:$0xff] %vm627, %v626
      %v702 = vld [vmem:[#allocation2 + $0x7] sm:$0xff]
      %v703 = vld [vmem:[#allocation2 + $0xf] sm:$0xff]
      %v704 = vld [vmem:[#allocation2 + $0x27] sm:$0xff]
      %v705 = vld [vmem:[#allocation2 + $0x2f] sm:$0xff]
      %v706 = vld [vmem:[#allocation2 + $0x47] sm:$0xff]
      %v707 = vld [vmem:[#allocation2 + $0x4f] sm:$0xff]
      %v708 = vld [vmem:[#allocation2 + $0x67] sm:$0xff]
      %v709 = vld [vmem:[#allocation2 + $0x6f] sm:$0xff]
      %v710 = vld [vmem:[#allocation2 + $0x87] sm:$0xff]
      %v711 = vld [vmem:[#allocation2 + $0x8f] sm:$0xff]
      %v712 = vld [vmem:[#allocation2 + $0xa7] sm:$0xff]
      %v713 = vld [vmem:[#allocation2 + $0xaf] sm:$0xff]
      %v714 = vld [vmem:[#allocation2 + $0xc7] sm:$0xff]
      %v715 = vld [vmem:[#allocation2 + $0xcf] sm:$0xff]
      %v716 = vld [vmem:[#allocation2 + $0xe7] sm:$0xff]
      %v717 = vld [vmem:[#allocation2 + $0xef] sm:$0xff]
      %v718 = vld [vmem:[#allocation2 + $0x107] sm:$0xff]
      %v719 = vld [vmem:[#allocation2 + $0x10f] sm:$0xff]
      %v720 = vld [vmem:[#allocation2 + $0x127] sm:$0xff]
      %v721 = vld [vmem:[#allocation2 + $0x12f] sm:$0xff]
      %v722 = vld [vmem:[#allocation2 + $0x147] sm:$0xff]
      %v723 = vld [vmem:[#allocation2 + $0x14f] sm:$0xff]
      %v724 = vld [vmem:[#allocation2 + $0x167] sm:$0xff]
      %v725 = vld [vmem:[#allocation2 + $0x16f] sm:$0xff]
      %v726 = vld [vmem:[#allocation2 + $0x187] sm:$0xff]
      %v727 = vld [vmem:[#allocation2 + $0x18f] sm:$0xff]
      %v728 = vld [vmem:[#allocation2 + $0x1a7] sm:$0xff]
      %v729 = vld [vmem:[#allocation2 + $0x1af] sm:$0xff]
      %v730 = vld [vmem:[#allocation2 + $0x1c7] sm:$0xff]
      %v731 = vld [vmem:[#allocation2 + $0x1cf] sm:$0xff]
      %v732 = vld [vmem:[#allocation2 + $0x1e7] sm:$0xff]
      %v733 = vld [vmem:[#allocation2 + $0x1ef] sm:$0xff]
      %v734 = vld [vmem:[%s4] sm:$0x1]
      %v736 = vperm.slane %v734, 0
      %v738 = vmul.f32 %v702, %v736
      %v739 = vmul.f32 %v703, %v736
      %v740 = vmul.f32 %v704, %v736
      %v741 = vmul.f32 %v705, %v736
      %v742 = vmul.f32 %v706, %v736
      %v743 = vmul.f32 %v707, %v736
      %v744 = vmul.f32 %v708, %v736
      %v745 = vmul.f32 %v709, %v736
      %v746 = vmul.f32 %v710, %v736
      %v747 = vmul.f32 %v711, %v736
      %v748 = vmul.f32 %v712, %v736
      %v749 = vmul.f32 %v713, %v736
      %v750 = vmul.f32 %v714, %v736
      %v751 = vmul.f32 %v715, %v736
      %v752 = vmul.f32 %v716, %v736
      %v753 = vmul.f32 %v717, %v736
      %v754 = vmul.f32 %v718, %v736
      %v755 = vmul.f32 %v719, %v736
      %v756 = vmul.f32 %v720, %v736
      %v757 = vmul.f32 %v721, %v736
      %v758 = vmul.f32 %v722, %v736
      %v759 = vmul.f32 %v723, %v736
      %v760 = vmul.f32 %v724, %v736
      %v761 = vmul.f32 %v725, %v736
      %v762 = vmul.f32 %v726, %v736
      %v763 = vmul.f32 %v727, %v736
      %v764 = vmul.f32 %v728, %v736
      %v765 = vmul.f32 %v729, %v736
      %v766 = vmul.f32 %v730, %v736
      %v767 = vmul.f32 %v731, %v736
      %v768 = vmul.f32 %v732, %v736
      %v769 = vmul.f32 %v733, %v736
      %v770 = vld [vmem:[#allocation2 + $0x8] sm:$0xff]
      %v771 = vld [vmem:[#allocation2 + $0x10] sm:$0xff]
      %v772 = vld [vmem:[#allocation2 + $0x28] sm:$0xff]
      %v773 = vld [vmem:[#allocation2 + $0x30] sm:$0xff]
      %v774 = vld [vmem:[#allocation2 + $0x48] sm:$0xff]
      %v775 = vld [vmem:[#allocation2 + $0x50] sm:$0xff]
      %v776 = vld [vmem:[#allocation2 + $0x68] sm:$0xff]
      %v777 = vld [vmem:[#allocation2 + $0x70] sm:$0xff]
      %v778 = vld [vmem:[#allocation2 + $0x88] sm:$0xff]
      %v779 = vld [vmem:[#allocation2 + $0x90] sm:$0xff]
      %v780 = vld [vmem:[#allocation2 + $0xa8] sm:$0xff]
      %v781 = vld [vmem:[#allocation2 + $0xb0] sm:$0xff]
      %v782 = vld [vmem:[#allocation2 + $0xc8] sm:$0xff]
      %v783 = vld [vmem:[#allocation2 + $0xd0] sm:$0xff]
      %v784 = vld [vmem:[#allocation2 + $0xe8] sm:$0xff]
      %v785 = vld [vmem:[#allocation2 + $0xf0] sm:$0xff]
      %v786 = vld [vmem:[#allocation2 + $0x108] sm:$0xff]
      %v787 = vld [vmem:[#allocation2 + $0x110] sm:$0xff]
      %v788 = vld [vmem:[#allocation2 + $0x128] sm:$0xff]
      %v789 = vld [vmem:[#allocation2 + $0x130] sm:$0xff]
      %v790 = vld [vmem:[#allocation2 + $0x148] sm:$0xff]
      %v791 = vld [vmem:[#allocation2 + $0x150] sm:$0xff]
      %v792 = vld [vmem:[#allocation2 + $0x168] sm:$0xff]
      %v793 = vld [vmem:[#allocation2 + $0x170] sm:$0xff]
      %v794 = vld [vmem:[#allocation2 + $0x188] sm:$0xff]
      %v795 = vld [vmem:[#allocation2 + $0x190] sm:$0xff]
      %v796 = vld [vmem:[#allocation2 + $0x1a8] sm:$0xff]
      %v797 = vld [vmem:[#allocation2 + $0x1b0] sm:$0xff]
      %v798 = vld [vmem:[#allocation2 + $0x1c8] sm:$0xff]
      %v799 = vld [vmem:[#allocation2 + $0x1d0] sm:$0xff]
      %v800 = vld [vmem:[#allocation2 + $0x1e8] sm:$0xff]
      %v801 = vld [vmem:[#allocation2 + $0x1f0] sm:$0xff]
      %s802 = scalar_lea.vmem %s4, 1
      %v803 = vld [vmem:[%s802] sm:$0x1]
      %v805 = vperm.slane %v803, 0
      %v807 = vmul.f32 %v770, %v805
      %v808 = vmul.f32 %v771, %v805
      %v809 = vmul.f32 %v772, %v805
      %v810 = vmul.f32 %v773, %v805
      %v811 = vmul.f32 %v774, %v805
      %v812 = vmul.f32 %v775, %v805
      %v813 = vmul.f32 %v776, %v805
      %v814 = vmul.f32 %v777, %v805
      %v815 = vmul.f32 %v778, %v805
      %v816 = vmul.f32 %v779, %v805
      %v817 = vmul.f32 %v780, %v805
      %v818 = vmul.f32 %v781, %v805
      %v819 = vmul.f32 %v782, %v805
      %v820 = vmul.f32 %v783, %v805
      %v821 = vmul.f32 %v784, %v805
      %v822 = vmul.f32 %v785, %v805
      %v823 = vmul.f32 %v786, %v805
      %v824 = vmul.f32 %v787, %v805
      %v825 = vmul.f32 %v788, %v805
      %v826 = vmul.f32 %v789, %v805
      %v827 = vmul.f32 %v790, %v805
      %v828 = vmul.f32 %v791, %v805
      %v829 = vmul.f32 %v792, %v805
      %v830 = vmul.f32 %v793, %v805
      %v831 = vmul.f32 %v794, %v805
      %v832 = vmul.f32 %v795, %v805
      %v833 = vmul.f32 %v796, %v805
      %v834 = vmul.f32 %v797, %v805
      %v835 = vmul.f32 %v798, %v805
      %v836 = vmul.f32 %v799, %v805
      %v837 = vmul.f32 %v800, %v805
      %v838 = vmul.f32 %v801, %v805
      %v839 = vadd.f32 %v738, %v807
      %v840 = vadd.f32 %v739, %v808
      %v841 = vadd.f32 %v740, %v809
      %v842 = vadd.f32 %v741, %v810
      %v843 = vadd.f32 %v742, %v811
      %v844 = vadd.f32 %v743, %v812
      %v845 = vadd.f32 %v744, %v813
      %v846 = vadd.f32 %v745, %v814
      %v847 = vadd.f32 %v746, %v815
      %v848 = vadd.f32 %v747, %v816
      %v849 = vadd.f32 %v748, %v817
      %v850 = vadd.f32 %v749, %v818
      %v851 = vadd.f32 %v750, %v819
      %v852 = vadd.f32 %v751, %v820
      %v853 = vadd.f32 %v752, %v821
      %v854 = vadd.f32 %v753, %v822
      %v855 = vadd.f32 %v754, %v823
      %v856 = vadd.f32 %v755, %v824
      %v857 = vadd.f32 %v756, %v825
      %v858 = vadd.f32 %v757, %v826
      %v859 = vadd.f32 %v758, %v827
      %v860 = vadd.f32 %v759, %v828
      %v861 = vadd.f32 %v760, %v829
      %v862 = vadd.f32 %v761, %v830
      %v863 = vadd.f32 %v762, %v831
      %v864 = vadd.f32 %v763, %v832
      %v865 = vadd.f32 %v764, %v833
      %v866 = vadd.f32 %v765, %v834
      %v867 = vadd.f32 %v766, %v835
      %v868 = vadd.f32 %v767, %v836
      %v869 = vadd.f32 %v768, %v837
      %v870 = vadd.f32 %v769, %v838
      %v871 = vld [vmem:[#allocation2 + $0x9] sm:$0xff]
      %v872 = vld [vmem:[#allocation2 + $0x11] sm:$0xff]
      %v873 = vld [vmem:[#allocation2 + $0x29] sm:$0xff]
      %v874 = vld [vmem:[#allocation2 + $0x31] sm:$0xff]
      %v875 = vld [vmem:[#allocation2 + $0x49] sm:$0xff]
      %v876 = vld [vmem:[#allocation2 + $0x51] sm:$0xff]
      %v877 = vld [vmem:[#allocation2 + $0x69] sm:$0xff]
      %v878 = vld [vmem:[#allocation2 + $0x71] sm:$0xff]
      %v879 = vld [vmem:[#allocation2 + $0x89] sm:$0xff]
      %v880 = vld [vmem:[#allocation2 + $0x91] sm:$0xff]
      %v881 = vld [vmem:[#allocation2 + $0xa9] sm:$0xff]
      %v882 = vld [vmem:[#allocation2 + $0xb1] sm:$0xff]
      %v883 = vld [vmem:[#allocation2 + $0xc9] sm:$0xff]
      %v884 = vld [vmem:[#allocation2 + $0xd1] sm:$0xff]
      %v885 = vld [vmem:[#allocation2 + $0xe9] sm:$0xff]
      %v886 = vld [vmem:[#allocation2 + $0xf1] sm:$0xff]
      %v887 = vld [vmem:[#allocation2 + $0x109] sm:$0xff]
      %v888 = vld [vmem:[#allocation2 + $0x111] sm:$0xff]
      %v889 = vld [vmem:[#allocation2 + $0x129] sm:$0xff]
      %v890 = vld [vmem:[#allocation2 + $0x131] sm:$0xff]
      %v891 = vld [vmem:[#allocation2 + $0x149] sm:$0xff]
      %v892 = vld [vmem:[#allocation2 + $0x151] sm:$0xff]
      %v893 = vld [vmem:[#allocation2 + $0x169] sm:$0xff]
      %v894 = vld [vmem:[#allocation2 + $0x171] sm:$0xff]
      %v895 = vld [vmem:[#allocation2 + $0x189] sm:$0xff]
      %v896 = vld [vmem:[#allocation2 + $0x191] sm:$0xff]
      %v897 = vld [vmem:[#allocation2 + $0x1a9] sm:$0xff]
      %v898 = vld [vmem:[#allocation2 + $0x1b1] sm:$0xff]
      %v899 = vld [vmem:[#allocation2 + $0x1c9] sm:$0xff]
      %v900 = vld [vmem:[#allocation2 + $0x1d1] sm:$0xff]
      %v901 = vld [vmem:[#allocation2 + $0x1e9] sm:$0xff]
      %v902 = vld [vmem:[#allocation2 + $0x1f1] sm:$0xff]
      %s903 = scalar_lea.vmem %s4, 2
      %v904 = vld [vmem:[%s903] sm:$0x1]
      %v906 = vperm.slane %v904, 0
      %v908 = vmul.f32 %v871, %v906
      %v909 = vmul.f32 %v872, %v906
      %v910 = vmul.f32 %v873, %v906
      %v911 = vmul.f32 %v874, %v906
      %v912 = vmul.f32 %v875, %v906
      %v913 = vmul.f32 %v876, %v906
      %v914 = vmul.f32 %v877, %v906
      %v915 = vmul.f32 %v878, %v906
      %v916 = vmul.f32 %v879, %v906
      %v917 = vmul.f32 %v880, %v906
      %v918 = vmul.f32 %v881, %v906
      %v919 = vmul.f32 %v882, %v906
      %v920 = vmul.f32 %v883, %v906
      %v921 = vmul.f32 %v884, %v906
      %v922 = vmul.f32 %v885, %v906
      %v923 = vmul.f32 %v886, %v906
      %v924 = vmul.f32 %v887, %v906
      %v925 = vmul.f32 %v888, %v906
      %v926 = vmul.f32 %v889, %v906
      %v927 = vmul.f32 %v890, %v906
      %v928 = vmul.f32 %v891, %v906
      %v929 = vmul.f32 %v892, %v906
      %v930 = vmul.f32 %v893, %v906
      %v931 = vmul.f32 %v894, %v906
      %v932 = vmul.f32 %v895, %v906
      %v933 = vmul.f32 %v896, %v906
      %v934 = vmul.f32 %v897, %v906
      %v935 = vmul.f32 %v898, %v906
      %v936 = vmul.f32 %v899, %v906
      %v937 = vmul.f32 %v900, %v906
      %v938 = vmul.f32 %v901, %v906
      %v939 = vmul.f32 %v902, %v906
      %v940 = vadd.f32 %v839, %v908
      %v941 = vadd.f32 %v840, %v909
      %v942 = vadd.f32 %v841, %v910
      %v943 = vadd.f32 %v842, %v911
      %v944 = vadd.f32 %v843, %v912
      %v945 = vadd.f32 %v844, %v913
      %v946 = vadd.f32 %v845, %v914
      %v947 = vadd.f32 %v846, %v915
      %v948 = vadd.f32 %v847, %v916
      %v949 = vadd.f32 %v848, %v917
      %v950 = vadd.f32 %v849, %v918
      %v951 = vadd.f32 %v850, %v919
      %v952 = vadd.f32 %v851, %v920
      %v953 = vadd.f32 %v852, %v921
      %v954 = vadd.f32 %v853, %v922
      %v955 = vadd.f32 %v854, %v923
      %v956 = vadd.f32 %v855, %v924
      %v957 = vadd.f32 %v856, %v925
      %v958 = vadd.f32 %v857, %v926
      %v959 = vadd.f32 %v858, %v927
      %v960 = vadd.f32 %v859, %v928
      %v961 = vadd.f32 %v860, %v929
      %v962 = vadd.f32 %v861, %v930
      %v963 = vadd.f32 %v862, %v931
      %v964 = vadd.f32 %v863, %v932
      %v965 = vadd.f32 %v864, %v933
      %v966 = vadd.f32 %v865, %v934
      %v967 = vadd.f32 %v866, %v935
      %v968 = vadd.f32 %v867, %v936
      %v969 = vadd.f32 %v868, %v937
      %v970 = vadd.f32 %v869, %v938
      %v971 = vadd.f32 %v870, %v939
      %v972 = vld [vmem:[%s636 + $0x7] sm:$0xff]
      %v973 = vld [vmem:[%s636 + $0xf] sm:$0xff]
      %v974 = vld [vmem:[%s636 + $0x27] sm:$0xff]
      %v975 = vld [vmem:[%s636 + $0x2f] sm:$0xff]
      %v976 = vld [vmem:[%s636 + $0x47] sm:$0xff]
      %v977 = vld [vmem:[%s636 + $0x4f] sm:$0xff]
      %v978 = vld [vmem:[%s636 + $0x67] sm:$0xff]
      %v979 = vld [vmem:[%s636 + $0x6f] sm:$0xff]
      %v980 = vld [vmem:[%s636 + $0x87] sm:$0xff]
      %v981 = vld [vmem:[%s636 + $0x8f] sm:$0xff]
      %v982 = vld [vmem:[%s636 + $0xa7] sm:$0xff]
      %v983 = vld [vmem:[%s636 + $0xaf] sm:$0xff]
      %v984 = vld [vmem:[%s636 + $0xc7] sm:$0xff]
      %v985 = vld [vmem:[%s636 + $0xcf] sm:$0xff]
      %v986 = vld [vmem:[%s636 + $0xe7] sm:$0xff]
      %v987 = vld [vmem:[%s636 + $0xef] sm:$0xff]
      %v988 = vld [vmem:[%s636 + $0x107] sm:$0xff]
      %v989 = vld [vmem:[%s636 + $0x10f] sm:$0xff]
      %v990 = vld [vmem:[%s636 + $0x127] sm:$0xff]
      %v991 = vld [vmem:[%s636 + $0x12f] sm:$0xff]
      %v992 = vld [vmem:[%s636 + $0x147] sm:$0xff]
      %v993 = vld [vmem:[%s636 + $0x14f] sm:$0xff]
      %v994 = vld [vmem:[%s636 + $0x167] sm:$0xff]
      %v995 = vld [vmem:[%s636 + $0x16f] sm:$0xff]
      %v996 = vld [vmem:[%s636 + $0x187] sm:$0xff]
      %v997 = vld [vmem:[%s636 + $0x18f] sm:$0xff]
      %v998 = vld [vmem:[%s636 + $0x1a7] sm:$0xff]
      %v999 = vld [vmem:[%s636 + $0x1af] sm:$0xff]
      %v1000 = vld [vmem:[%s636 + $0x1c7] sm:$0xff]
      %v1001 = vld [vmem:[%s636 + $0x1cf] sm:$0xff]
      %v1002 = vld [vmem:[%s636 + $0x1e7] sm:$0xff]
      %v1003 = vld [vmem:[%s636 + $0x1ef] sm:$0xff]
      %s1004 = scalar_lea.vmem %s4, 3
      %v1005 = vld [vmem:[%s1004] sm:$0x1]
      %v1007 = vperm.slane %v1005, 0
      %v1009 = vmul.f32 %v972, %v1007
      %v1010 = vmul.f32 %v973, %v1007
      %v1011 = vmul.f32 %v974, %v1007
      %v1012 = vmul.f32 %v975, %v1007
      %v1013 = vmul.f32 %v976, %v1007
      %v1014 = vmul.f32 %v977, %v1007
      %v1015 = vmul.f32 %v978, %v1007
      %v1016 = vmul.f32 %v979, %v1007
      %v1017 = vmul.f32 %v980, %v1007
      %v1018 = vmul.f32 %v981, %v1007
      %v1019 = vmul.f32 %v982, %v1007
      %v1020 = vmul.f32 %v983, %v1007
      %v1021 = vmul.f32 %v984, %v1007
      %v1022 = vmul.f32 %v985, %v1007
      %v1023 = vmul.f32 %v986, %v1007
      %v1024 = vmul.f32 %v987, %v1007
      %v1025 = vmul.f32 %v988, %v1007
      %v1026 = vmul.f32 %v989, %v1007
      %v1027 = vmul.f32 %v990, %v1007
      %v1028 = vmul.f32 %v991, %v1007
      %v1029 = vmul.f32 %v992, %v1007
      %v1030 = vmul.f32 %v993, %v1007
      %v1031 = vmul.f32 %v994, %v1007
      %v1032 = vmul.f32 %v995, %v1007
      %v1033 = vmul.f32 %v996, %v1007
      %v1034 = vmul.f32 %v997, %v1007
      %v1035 = vmul.f32 %v998, %v1007
      %v1036 = vmul.f32 %v999, %v1007
      %v1037 = vmul.f32 %v1000, %v1007
      %v1038 = vmul.f32 %v1001, %v1007
      %v1039 = vmul.f32 %v1002, %v1007
      %v1040 = vmul.f32 %v1003, %v1007
      %v1041 = vadd.f32 %v940, %v1009
      %v1042 = vadd.f32 %v941, %v1010
      %v1043 = vadd.f32 %v942, %v1011
      %v1044 = vadd.f32 %v943, %v1012
      %v1045 = vadd.f32 %v944, %v1013
      %v1046 = vadd.f32 %v945, %v1014
      %v1047 = vadd.f32 %v946, %v1015
      %v1048 = vadd.f32 %v947, %v1016
      %v1049 = vadd.f32 %v948, %v1017
      %v1050 = vadd.f32 %v949, %v1018
      %v1051 = vadd.f32 %v950, %v1019
      %v1052 = vadd.f32 %v951, %v1020
      %v1053 = vadd.f32 %v952, %v1021
      %v1054 = vadd.f32 %v953, %v1022
      %v1055 = vadd.f32 %v954, %v1023
      %v1056 = vadd.f32 %v955, %v1024
      %v1057 = vadd.f32 %v956, %v1025
      %v1058 = vadd.f32 %v957, %v1026
      %v1059 = vadd.f32 %v958, %v1027
      %v1060 = vadd.f32 %v959, %v1028
      %v1061 = vadd.f32 %v960, %v1029
      %v1062 = vadd.f32 %v961, %v1030
      %v1063 = vadd.f32 %v962, %v1031
      %v1064 = vadd.f32 %v963, %v1032
      %v1065 = vadd.f32 %v964, %v1033
      %v1066 = vadd.f32 %v965, %v1034
      %v1067 = vadd.f32 %v966, %v1035
      %v1068 = vadd.f32 %v967, %v1036
      %v1069 = vadd.f32 %v968, %v1037
      %v1070 = vadd.f32 %v969, %v1038
      %v1071 = vadd.f32 %v970, %v1039
      %v1072 = vadd.f32 %v971, %v1040
      %v1073 = vld [vmem:[%s636 + $0x8] sm:$0xff]
      %v1074 = vld [vmem:[%s636 + $0x10] sm:$0xff]
      %v1075 = vld [vmem:[%s636 + $0x28] sm:$0xff]
      %v1076 = vld [vmem:[%s636 + $0x30] sm:$0xff]
      %v1077 = vld [vmem:[%s636 + $0x48] sm:$0xff]
      %v1078 = vld [vmem:[%s636 + $0x50] sm:$0xff]
      %v1079 = vld [vmem:[%s636 + $0x68] sm:$0xff]
      %v1080 = vld [vmem:[%s636 + $0x70] sm:$0xff]
      %v1081 = vld [vmem:[%s636 + $0x88] sm:$0xff]
      %v1082 = vld [vmem:[%s636 + $0x90] sm:$0xff]
      %v1083 = vld [vmem:[%s636 + $0xa8] sm:$0xff]
      %v1084 = vld [vmem:[%s636 + $0xb0] sm:$0xff]
      %v1085 = vld [vmem:[%s636 + $0xc8] sm:$0xff]
      %v1086 = vld [vmem:[%s636 + $0xd0] sm:$0xff]
      %v1087 = vld [vmem:[%s636 + $0xe8] sm:$0xff]
      %v1088 = vld [vmem:[%s636 + $0xf0] sm:$0xff]
      %v1089 = vld [vmem:[%s636 + $0x108] sm:$0xff]
      %v1090 = vld [vmem:[%s636 + $0x110] sm:$0xff]
      %v1091 = vld [vmem:[%s636 + $0x128] sm:$0xff]
      %v1092 = vld [vmem:[%s636 + $0x130] sm:$0xff]
      %v1093 = vld [vmem:[%s636 + $0x148] sm:$0xff]
      %v1094 = vld [vmem:[%s636 + $0x150] sm:$0xff]
      %v1095 = vld [vmem:[%s636 + $0x168] sm:$0xff]
      %v1096 = vld [vmem:[%s636 + $0x170] sm:$0xff]
      %v1097 = vld [vmem:[%s636 + $0x188] sm:$0xff]
      %v1098 = vld [vmem:[%s636 + $0x190] sm:$0xff]
      %v1099 = vld [vmem:[%s636 + $0x1a8] sm:$0xff]
      %v1100 = vld [vmem:[%s636 + $0x1b0] sm:$0xff]
      %v1101 = vld [vmem:[%s636 + $0x1c8] sm:$0xff]
      %v1102 = vld [vmem:[%s636 + $0x1d0] sm:$0xff]
      %v1103 = vld [vmem:[%s636 + $0x1e8] sm:$0xff]
      %v1104 = vld [vmem:[%s636 + $0x1f0] sm:$0xff]
      %s1105 = scalar_lea.vmem %s4, 4
      %v1106 = vld [vmem:[%s1105] sm:$0x1]
      %v1108 = vperm.slane %v1106, 0
      %v1110 = vmul.f32 %v1073, %v1108
      %v1111 = vmul.f32 %v1074, %v1108
      %v1112 = vmul.f32 %v1075, %v1108
      %v1113 = vmul.f32 %v1076, %v1108
      %v1114 = vmul.f32 %v1077, %v1108
      %v1115 = vmul.f32 %v1078, %v1108
      %v1116 = vmul.f32 %v1079, %v1108
      %v1117 = vmul.f32 %v1080, %v1108
      %v1118 = vmul.f32 %v1081, %v1108
      %v1119 = vmul.f32 %v1082, %v1108
      %v1120 = vmul.f32 %v1083, %v1108
      %v1121 = vmul.f32 %v1084, %v1108
      %v1122 = vmul.f32 %v1085, %v1108
      %v1123 = vmul.f32 %v1086, %v1108
      %v1124 = vmul.f32 %v1087, %v1108
      %v1125 = vmul.f32 %v1088, %v1108
      %v1126 = vmul.f32 %v1089, %v1108
      %v1127 = vmul.f32 %v1090, %v1108
      %v1128 = vmul.f32 %v1091, %v1108
      %v1129 = vmul.f32 %v1092, %v1108
      %v1130 = vmul.f32 %v1093, %v1108
      %v1131 = vmul.f32 %v1094, %v1108
      %v1132 = vmul.f32 %v1095, %v1108
      %v1133 = vmul.f32 %v1096, %v1108
      %v1134 = vmul.f32 %v1097, %v1108
      %v1135 = vmul.f32 %v1098, %v1108
      %v1136 = vmul.f32 %v1099, %v1108
      %v1137 = vmul.f32 %v1100, %v1108
      %v1138 = vmul.f32 %v1101, %v1108
      %v1139 = vmul.f32 %v1102, %v1108
      %v1140 = vmul.f32 %v1103, %v1108
      %v1141 = vmul.f32 %v1104, %v1108
      %v1142 = vadd.f32 %v1041, %v1110
      %v1143 = vadd.f32 %v1042, %v1111
      %v1144 = vadd.f32 %v1043, %v1112
      %v1145 = vadd.f32 %v1044, %v1113
      %v1146 = vadd.f32 %v1045, %v1114
      %v1147 = vadd.f32 %v1046, %v1115
      %v1148 = vadd.f32 %v1047, %v1116
      %v1149 = vadd.f32 %v1048, %v1117
      %v1150 = vadd.f32 %v1049, %v1118
      %v1151 = vadd.f32 %v1050, %v1119
      %v1152 = vadd.f32 %v1051, %v1120
      %v1153 = vadd.f32 %v1052, %v1121
      %v1154 = vadd.f32 %v1053, %v1122
      %v1155 = vadd.f32 %v1054, %v1123
      %v1156 = vadd.f32 %v1055, %v1124
      %v1157 = vadd.f32 %v1056, %v1125
      %v1158 = vadd.f32 %v1057, %v1126
      %v1159 = vadd.f32 %v1058, %v1127
      %v1160 = vadd.f32 %v1059, %v1128
      %v1161 = vadd.f32 %v1060, %v1129
      %v1162 = vadd.f32 %v1061, %v1130
      %v1163 = vadd.f32 %v1062, %v1131
      %v1164 = vadd.f32 %v1063, %v1132
      %v1165 = vadd.f32 %v1064, %v1133
      %v1166 = vadd.f32 %v1065, %v1134
      %v1167 = vadd.f32 %v1066, %v1135
      %v1168 = vadd.f32 %v1067, %v1136
      %v1169 = vadd.f32 %v1068, %v1137
      %v1170 = vadd.f32 %v1069, %v1138
      %v1171 = vadd.f32 %v1070, %v1139
      %v1172 = vadd.f32 %v1071, %v1140
      %v1173 = vadd.f32 %v1072, %v1141
      %v1174 = vld [vmem:[%s636 + $0x9] sm:$0xff]
      %v1175 = vld [vmem:[%s636 + $0x11] sm:$0xff]
      %v1176 = vld [vmem:[%s636 + $0x29] sm:$0xff]
      %v1177 = vld [vmem:[%s636 + $0x31] sm:$0xff]
      %v1178 = vld [vmem:[%s636 + $0x49] sm:$0xff]
      %v1179 = vld [vmem:[%s636 + $0x51] sm:$0xff]
      %v1180 = vld [vmem:[%s636 + $0x69] sm:$0xff]
      %v1181 = vld [vmem:[%s636 + $0x71] sm:$0xff]
      %v1182 = vld [vmem:[%s636 + $0x89] sm:$0xff]
      %v1183 = vld [vmem:[%s636 + $0x91] sm:$0xff]
      %v1184 = vld [vmem:[%s636 + $0xa9] sm:$0xff]
      %v1185 = vld [vmem:[%s636 + $0xb1] sm:$0xff]
      %v1186 = vld [vmem:[%s636 + $0xc9] sm:$0xff]
      %v1187 = vld [vmem:[%s636 + $0xd1] sm:$0xff]
      %v1188 = vld [vmem:[%s636 + $0xe9] sm:$0xff]
      %v1189 = vld [vmem:[%s636 + $0xf1] sm:$0xff]
      %v1190 = vld [vmem:[%s636 + $0x109] sm:$0xff]
      %v1191 = vld [vmem:[%s636 + $0x111] sm:$0xff]
      %v1192 = vld [vmem:[%s636 + $0x129] sm:$0xff]
      %v1193 = vld [vmem:[%s636 + $0x131] sm:$0xff]
      %v1194 = vld [vmem:[%s636 + $0x149] sm:$0xff]
      %v1195 = vld [vmem:[%s636 + $0x151] sm:$0xff]
      %v1196 = vld [vmem:[%s636 + $0x169] sm:$0xff]
      %v1197 = vld [vmem:[%s636 + $0x171] sm:$0xff]
      %v1198 = vld [vmem:[%s636 + $0x189] sm:$0xff]
      %v1199 = vld [vmem:[%s636 + $0x191] sm:$0xff]
      %v1200 = vld [vmem:[%s636 + $0x1a9] sm:$0xff]
      %v1201 = vld [vmem:[%s636 + $0x1b1] sm:$0xff]
      %v1202 = vld [vmem:[%s636 + $0x1c9] sm:$0xff]
      %v1203 = vld [vmem:[%s636 + $0x1d1] sm:$0xff]
      %v1204 = vld [vmem:[%s636 + $0x1e9] sm:$0xff]
      %v1205 = vld [vmem:[%s636 + $0x1f1] sm:$0xff]
      %s1206 = scalar_lea.vmem %s4, 5
      %v1207 = vld [vmem:[%s1206] sm:$0x1]
      %v1209 = vperm.slane %v1207, 0
      %v1211 = vmul.f32 %v1174, %v1209
      %v1212 = vmul.f32 %v1175, %v1209
      %v1213 = vmul.f32 %v1176, %v1209
      %v1214 = vmul.f32 %v1177, %v1209
      %v1215 = vmul.f32 %v1178, %v1209
      %v1216 = vmul.f32 %v1179, %v1209
      %v1217 = vmul.f32 %v1180, %v1209
      %v1218 = vmul.f32 %v1181, %v1209
      %v1219 = vmul.f32 %v1182, %v1209
      %v1220 = vmul.f32 %v1183, %v1209
      %v1221 = vmul.f32 %v1184, %v1209
      %v1222 = vmul.f32 %v1185, %v1209
      %v1223 = vmul.f32 %v1186, %v1209
      %v1224 = vmul.f32 %v1187, %v1209
      %v1225 = vmul.f32 %v1188, %v1209
      %v1226 = vmul.f32 %v1189, %v1209
      %v1227 = vmul.f32 %v1190, %v1209
      %v1228 = vmul.f32 %v1191, %v1209
      %v1229 = vmul.f32 %v1192, %v1209
      %v1230 = vmul.f32 %v1193, %v1209
      %v1231 = vmul.f32 %v1194, %v1209
      %v1232 = vmul.f32 %v1195, %v1209
      %v1233 = vmul.f32 %v1196, %v1209
      %v1234 = vmul.f32 %v1197, %v1209
      %v1235 = vmul.f32 %v1198, %v1209
      %v1236 = vmul.f32 %v1199, %v1209
      %v1237 = vmul.f32 %v1200, %v1209
      %v1238 = vmul.f32 %v1201, %v1209
      %v1239 = vmul.f32 %v1202, %v1209
      %v1240 = vmul.f32 %v1203, %v1209
      %v1241 = vmul.f32 %v1204, %v1209
      %v1242 = vmul.f32 %v1205, %v1209
      %v1243 = vadd.f32 %v1142, %v1211
      %v1244 = vadd.f32 %v1143, %v1212
      %v1245 = vadd.f32 %v1144, %v1213
      %v1246 = vadd.f32 %v1145, %v1214
      %v1247 = vadd.f32 %v1146, %v1215
      %v1248 = vadd.f32 %v1147, %v1216
      %v1249 = vadd.f32 %v1148, %v1217
      %v1250 = vadd.f32 %v1149, %v1218
      %v1251 = vadd.f32 %v1150, %v1219
      %v1252 = vadd.f32 %v1151, %v1220
      %v1253 = vadd.f32 %v1152, %v1221
      %v1254 = vadd.f32 %v1153, %v1222
      %v1255 = vadd.f32 %v1154, %v1223
      %v1256 = vadd.f32 %v1155, %v1224
      %v1257 = vadd.f32 %v1156, %v1225
      %v1258 = vadd.f32 %v1157, %v1226
      %v1259 = vadd.f32 %v1158, %v1227
      %v1260 = vadd.f32 %v1159, %v1228
      %v1261 = vadd.f32 %v1160, %v1229
      %v1262 = vadd.f32 %v1161, %v1230
      %v1263 = vadd.f32 %v1162, %v1231
      %v1264 = vadd.f32 %v1163, %v1232
      %v1265 = vadd.f32 %v1164, %v1233
      %v1266 = vadd.f32 %v1165, %v1234
      %v1267 = vadd.f32 %v1166, %v1235
      %v1268 = vadd.f32 %v1167, %v1236
      %v1269 = vadd.f32 %v1168, %v1237
      %v1270 = vadd.f32 %v1169, %v1238
      %v1271 = vadd.f32 %v1170, %v1239
      %v1272 = vadd.f32 %v1171, %v1240
      %v1273 = vadd.f32 %v1172, %v1241
      %v1274 = vadd.f32 %v1173, %v1242
      %s1275 = scalar_lea.vmem [#allocation2], 64
      %v1276 = vld [vmem:[%s1275 + $0x7] sm:$0xff]
      %v1277 = vld [vmem:[%s1275 + $0xf] sm:$0xff]
      %v1278 = vld [vmem:[%s1275 + $0x27] sm:$0xff]
      %v1279 = vld [vmem:[%s1275 + $0x2f] sm:$0xff]
      %v1280 = vld [vmem:[%s1275 + $0x47] sm:$0xff]
      %v1281 = vld [vmem:[%s1275 + $0x4f] sm:$0xff]
      %v1282 = vld [vmem:[%s1275 + $0x67] sm:$0xff]
      %v1283 = vld [vmem:[%s1275 + $0x6f] sm:$0xff]
      %v1284 = vld [vmem:[%s1275 + $0x87] sm:$0xff]
      %v1285 = vld [vmem:[%s1275 + $0x8f] sm:$0xff]
      %v1286 = vld [vmem:[%s1275 + $0xa7] sm:$0xff]
      %v1287 = vld [vmem:[%s1275 + $0xaf] sm:$0xff]
      %v1288 = vld [vmem:[%s1275 + $0xc7] sm:$0xff]
      %v1289 = vld [vmem:[%s1275 + $0xcf] sm:$0xff]
      %v1290 = vld [vmem:[%s1275 + $0xe7] sm:$0xff]
      %v1291 = vld [vmem:[%s1275 + $0xef] sm:$0xff]
      %v1292 = vld [vmem:[%s1275 + $0x107] sm:$0xff]
      %v1293 = vld [vmem:[%s1275 + $0x10f] sm:$0xff]
      %v1294 = vld [vmem:[%s1275 + $0x127] sm:$0xff]
      %v1295 = vld [vmem:[%s1275 + $0x12f] sm:$0xff]
      %v1296 = vld [vmem:[%s1275 + $0x147] sm:$0xff]
      %v1297 = vld [vmem:[%s1275 + $0x14f] sm:$0xff]
      %v1298 = vld [vmem:[%s1275 + $0x167] sm:$0xff]
      %v1299 = vld [vmem:[%s1275 + $0x16f] sm:$0xff]
      %v1300 = vld [vmem:[%s1275 + $0x187] sm:$0xff]
      %v1301 = vld [vmem:[%s1275 + $0x18f] sm:$0xff]
      %v1302 = vld [vmem:[%s1275 + $0x1a7] sm:$0xff]
      %v1303 = vld [vmem:[%s1275 + $0x1af] sm:$0xff]
      %v1304 = vld [vmem:[%s1275 + $0x1c7] sm:$0xff]
      %v1305 = vld [vmem:[%s1275 + $0x1cf] sm:$0xff]
      %v1306 = vld [vmem:[%s1275 + $0x1e7] sm:$0xff]
      %v1307 = vld [vmem:[%s1275 + $0x1ef] sm:$0xff]
      %s1308 = scalar_lea.vmem %s4, 6
      %v1309 = vld [vmem:[%s1308] sm:$0x1]
      %v1311 = vperm.slane %v1309, 0
      %v1313 = vmul.f32 %v1276, %v1311
      %v1314 = vmul.f32 %v1277, %v1311
      %v1315 = vmul.f32 %v1278, %v1311
      %v1316 = vmul.f32 %v1279, %v1311
      %v1317 = vmul.f32 %v1280, %v1311
      %v1318 = vmul.f32 %v1281, %v1311
      %v1319 = vmul.f32 %v1282, %v1311
      %v1320 = vmul.f32 %v1283, %v1311
      %v1321 = vmul.f32 %v1284, %v1311
      %v1322 = vmul.f32 %v1285, %v1311
      %v1323 = vmul.f32 %v1286, %v1311
      %v1324 = vmul.f32 %v1287, %v1311
      %v1325 = vmul.f32 %v1288, %v1311
      %v1326 = vmul.f32 %v1289, %v1311
      %v1327 = vmul.f32 %v1290, %v1311
      %v1328 = vmul.f32 %v1291, %v1311
      %v1329 = vmul.f32 %v1292, %v1311
      %v1330 = vmul.f32 %v1293, %v1311
      %v1331 = vmul.f32 %v1294, %v1311
      %v1332 = vmul.f32 %v1295, %v1311
      %v1333 = vmul.f32 %v1296, %v1311
      %v1334 = vmul.f32 %v1297, %v1311
      %v1335 = vmul.f32 %v1298, %v1311
      %v1336 = vmul.f32 %v1299, %v1311
      %v1337 = vmul.f32 %v1300, %v1311
      %v1338 = vmul.f32 %v1301, %v1311
      %v1339 = vmul.f32 %v1302, %v1311
      %v1340 = vmul.f32 %v1303, %v1311
      %v1341 = vmul.f32 %v1304, %v1311
      %v1342 = vmul.f32 %v1305, %v1311
      %v1343 = vmul.f32 %v1306, %v1311
      %v1344 = vmul.f32 %v1307, %v1311
      %v1345 = vadd.f32 %v1243, %v1313
      %v1346 = vadd.f32 %v1244, %v1314
      %v1347 = vadd.f32 %v1245, %v1315
      %v1348 = vadd.f32 %v1246, %v1316
      %v1349 = vadd.f32 %v1247, %v1317
      %v1350 = vadd.f32 %v1248, %v1318
      %v1351 = vadd.f32 %v1249, %v1319
      %v1352 = vadd.f32 %v1250, %v1320
      %v1353 = vadd.f32 %v1251, %v1321
      %v1354 = vadd.f32 %v1252, %v1322
      %v1355 = vadd.f32 %v1253, %v1323
      %v1356 = vadd.f32 %v1254, %v1324
      %v1357 = vadd.f32 %v1255, %v1325
      %v1358 = vadd.f32 %v1256, %v1326
      %v1359 = vadd.f32 %v1257, %v1327
      %v1360 = vadd.f32 %v1258, %v1328
      %v1361 = vadd.f32 %v1259, %v1329
      %v1362 = vadd.f32 %v1260, %v1330
      %v1363 = vadd.f32 %v1261, %v1331
      %v1364 = vadd.f32 %v1262, %v1332
      %v1365 = vadd.f32 %v1263, %v1333
      %v1366 = vadd.f32 %v1264, %v1334
      %v1367 = vadd.f32 %v1265, %v1335
      %v1368 = vadd.f32 %v1266, %v1336
      %v1369 = vadd.f32 %v1267, %v1337
      %v1370 = vadd.f32 %v1268, %v1338
      %v1371 = vadd.f32 %v1269, %v1339
      %v1372 = vadd.f32 %v1270, %v1340
      %v1373 = vadd.f32 %v1271, %v1341
      %v1374 = vadd.f32 %v1272, %v1342
      %v1375 = vadd.f32 %v1273, %v1343
      %v1376 = vadd.f32 %v1274, %v1344
      %v1377 = vld [vmem:[%s1275 + $0x8] sm:$0xff]
      %v1378 = vld [vmem:[%s1275 + $0x10] sm:$0xff]
      %v1379 = vld [vmem:[%s1275 + $0x28] sm:$0xff]
      %v1380 = vld [vmem:[%s1275 + $0x30] sm:$0xff]
      %v1381 = vld [vmem:[%s1275 + $0x48] sm:$0xff]
      %v1382 = vld [vmem:[%s1275 + $0x50] sm:$0xff]
      %v1383 = vld [vmem:[%s1275 + $0x68] sm:$0xff]
      %v1384 = vld [vmem:[%s1275 + $0x70] sm:$0xff]
      %v1385 = vld [vmem:[%s1275 + $0x88] sm:$0xff]
      %v1386 = vld [vmem:[%s1275 + $0x90] sm:$0xff]
      %v1387 = vld [vmem:[%s1275 + $0xa8] sm:$0xff]
      %v1388 = vld [vmem:[%s1275 + $0xb0] sm:$0xff]
      %v1389 = vld [vmem:[%s1275 + $0xc8] sm:$0xff]
      %v1390 = vld [vmem:[%s1275 + $0xd0] sm:$0xff]
      %v1391 = vld [vmem:[%s1275 + $0xe8] sm:$0xff]
      %v1392 = vld [vmem:[%s1275 + $0xf0] sm:$0xff]
      %v1393 = vld [vmem:[%s1275 + $0x108] sm:$0xff]
      %v1394 = vld [vmem:[%s1275 + $0x110] sm:$0xff]
      %v1395 = vld [vmem:[%s1275 + $0x128] sm:$0xff]
      %v1396 = vld [vmem:[%s1275 + $0x130] sm:$0xff]
      %v1397 = vld [vmem:[%s1275 + $0x148] sm:$0xff]
      %v1398 = vld [vmem:[%s1275 + $0x150] sm:$0xff]
      %v1399 = vld [vmem:[%s1275 + $0x168] sm:$0xff]
      %v1400 = vld [vmem:[%s1275 + $0x170] sm:$0xff]
      %v1401 = vld [vmem:[%s1275 + $0x188] sm:$0xff]
      %v1402 = vld [vmem:[%s1275 + $0x190] sm:$0xff]
      %v1403 = vld [vmem:[%s1275 + $0x1a8] sm:$0xff]
      %v1404 = vld [vmem:[%s1275 + $0x1b0] sm:$0xff]
      %v1405 = vld [vmem:[%s1275 + $0x1c8] sm:$0xff]
      %v1406 = vld [vmem:[%s1275 + $0x1d0] sm:$0xff]
      %v1407 = vld [vmem:[%s1275 + $0x1e8] sm:$0xff]
      %v1408 = vld [vmem:[%s1275 + $0x1f0] sm:$0xff]
      %s1409 = scalar_lea.vmem %s4, 7
      %v1410 = vld [vmem:[%s1409] sm:$0x1]
      %v1412 = vperm.slane %v1410, 0
      %v1414 = vmul.f32 %v1377, %v1412
      %v1415 = vmul.f32 %v1378, %v1412
      %v1416 = vmul.f32 %v1379, %v1412
      %v1417 = vmul.f32 %v1380, %v1412
      %v1418 = vmul.f32 %v1381, %v1412
      %v1419 = vmul.f32 %v1382, %v1412
      %v1420 = vmul.f32 %v1383, %v1412
      %v1421 = vmul.f32 %v1384, %v1412
      %v1422 = vmul.f32 %v1385, %v1412
      %v1423 = vmul.f32 %v1386, %v1412
      %v1424 = vmul.f32 %v1387, %v1412
      %v1425 = vmul.f32 %v1388, %v1412
      %v1426 = vmul.f32 %v1389, %v1412
      %v1427 = vmul.f32 %v1390, %v1412
      %v1428 = vmul.f32 %v1391, %v1412
      %v1429 = vmul.f32 %v1392, %v1412
      %v1430 = vmul.f32 %v1393, %v1412
      %v1431 = vmul.f32 %v1394, %v1412
      %v1432 = vmul.f32 %v1395, %v1412
      %v1433 = vmul.f32 %v1396, %v1412
      %v1434 = vmul.f32 %v1397, %v1412
      %v1435 = vmul.f32 %v1398, %v1412
      %v1436 = vmul.f32 %v1399, %v1412
      %v1437 = vmul.f32 %v1400, %v1412
      %v1438 = vmul.f32 %v1401, %v1412
      %v1439 = vmul.f32 %v1402, %v1412
      %v1440 = vmul.f32 %v1403, %v1412
      %v1441 = vmul.f32 %v1404, %v1412
      %v1442 = vmul.f32 %v1405, %v1412
      %v1443 = vmul.f32 %v1406, %v1412
      %v1444 = vmul.f32 %v1407, %v1412
      %v1445 = vmul.f32 %v1408, %v1412
      %v1446 = vadd.f32 %v1345, %v1414
      %v1447 = vadd.f32 %v1346, %v1415
      %v1448 = vadd.f32 %v1347, %v1416
      %v1449 = vadd.f32 %v1348, %v1417
      %v1450 = vadd.f32 %v1349, %v1418
      %v1451 = vadd.f32 %v1350, %v1419
      %v1452 = vadd.f32 %v1351, %v1420
      %v1453 = vadd.f32 %v1352, %v1421
      %v1454 = vadd.f32 %v1353, %v1422
      %v1455 = vadd.f32 %v1354, %v1423
      %v1456 = vadd.f32 %v1355, %v1424
      %v1457 = vadd.f32 %v1356, %v1425
      %v1458 = vadd.f32 %v1357, %v1426
      %v1459 = vadd.f32 %v1358, %v1427
      %v1460 = vadd.f32 %v1359, %v1428
      %v1461 = vadd.f32 %v1360, %v1429
      %v1462 = vadd.f32 %v1361, %v1430
      %v1463 = vadd.f32 %v1362, %v1431
      %v1464 = vadd.f32 %v1363, %v1432
      %v1465 = vadd.f32 %v1364, %v1433
      %v1466 = vadd.f32 %v1365, %v1434
      %v1467 = vadd.f32 %v1366, %v1435
      %v1468 = vadd.f32 %v1367, %v1436
      %v1469 = vadd.f32 %v1368, %v1437
      %v1470 = vadd.f32 %v1369, %v1438
      %v1471 = vadd.f32 %v1370, %v1439
      %v1472 = vadd.f32 %v1371, %v1440
      %v1473 = vadd.f32 %v1372, %v1441
      %v1474 = vadd.f32 %v1373, %v1442
      %v1475 = vadd.f32 %v1374, %v1443
      %v1476 = vadd.f32 %v1375, %v1444
      %v1477 = vadd.f32 %v1376, %v1445
      %v1478 = vld [vmem:[%s1275 + $0x9] sm:$0xff]
      %v1479 = vld [vmem:[%s1275 + $0x11] sm:$0xff]
      %v1480 = vld [vmem:[%s1275 + $0x29] sm:$0xff]
      %v1481 = vld [vmem:[%s1275 + $0x31] sm:$0xff]
      %v1482 = vld [vmem:[%s1275 + $0x49] sm:$0xff]
      %v1483 = vld [vmem:[%s1275 + $0x51] sm:$0xff]
      %v1484 = vld [vmem:[%s1275 + $0x69] sm:$0xff]
      %v1485 = vld [vmem:[%s1275 + $0x71] sm:$0xff]
      %v1486 = vld [vmem:[%s1275 + $0x89] sm:$0xff]
      %v1487 = vld [vmem:[%s1275 + $0x91] sm:$0xff]
      %v1488 = vld [vmem:[%s1275 + $0xa9] sm:$0xff]
      %v1489 = vld [vmem:[%s1275 + $0xb1] sm:$0xff]
      %v1490 = vld [vmem:[%s1275 + $0xc9] sm:$0xff]
      %v1491 = vld [vmem:[%s1275 + $0xd1] sm:$0xff]
      %v1492 = vld [vmem:[%s1275 + $0xe9] sm:$0xff]
      %v1493 = vld [vmem:[%s1275 + $0xf1] sm:$0xff]
      %v1494 = vld [vmem:[%s1275 + $0x109] sm:$0xff]
      %v1495 = vld [vmem:[%s1275 + $0x111] sm:$0xff]
      %v1496 = vld [vmem:[%s1275 + $0x129] sm:$0xff]
      %v1497 = vld [vmem:[%s1275 + $0x131] sm:$0xff]
      %v1498 = vld [vmem:[%s1275 + $0x149] sm:$0xff]
      %v1499 = vld [vmem:[%s1275 + $0x151] sm:$0xff]
      %v1500 = vld [vmem:[%s1275 + $0x169] sm:$0xff]
      %v1501 = vld [vmem:[%s1275 + $0x171] sm:$0xff]
      %v1502 = vld [vmem:[%s1275 + $0x189] sm:$0xff]
      %v1503 = vld [vmem:[%s1275 + $0x191] sm:$0xff]
      %v1504 = vld [vmem:[%s1275 + $0x1a9] sm:$0xff]
      %v1505 = vld [vmem:[%s1275 + $0x1b1] sm:$0xff]
      %v1506 = vld [vmem:[%s1275 + $0x1c9] sm:$0xff]
      %v1507 = vld [vmem:[%s1275 + $0x1d1] sm:$0xff]
      %v1508 = vld [vmem:[%s1275 + $0x1e9] sm:$0xff]
      %v1509 = vld [vmem:[%s1275 + $0x1f1] sm:$0xff]
      %s1510 = scalar_lea.vmem %s4, 8
      %v1511 = vld [vmem:[%s1510] sm:$0x1]
      %v1513 = vperm.slane %v1511, 0
      %v1515 = vmul.f32 %v1478, %v1513
      %v1516 = vmul.f32 %v1479, %v1513
      %v1517 = vmul.f32 %v1480, %v1513
      %v1518 = vmul.f32 %v1481, %v1513
      %v1519 = vmul.f32 %v1482, %v1513
      %v1520 = vmul.f32 %v1483, %v1513
      %v1521 = vmul.f32 %v1484, %v1513
      %v1522 = vmul.f32 %v1485, %v1513
      %v1523 = vmul.f32 %v1486, %v1513
      %v1524 = vmul.f32 %v1487, %v1513
      %v1525 = vmul.f32 %v1488, %v1513
      %v1526 = vmul.f32 %v1489, %v1513
      %v1527 = vmul.f32 %v1490, %v1513
      %v1528 = vmul.f32 %v1491, %v1513
      %v1529 = vmul.f32 %v1492, %v1513
      %v1530 = vmul.f32 %v1493, %v1513
      %v1531 = vmul.f32 %v1494, %v1513
      %v1532 = vmul.f32 %v1495, %v1513
      %v1533 = vmul.f32 %v1496, %v1513
      %v1534 = vmul.f32 %v1497, %v1513
      %v1535 = vmul.f32 %v1498, %v1513
      %v1536 = vmul.f32 %v1499, %v1513
      %v1537 = vmul.f32 %v1500, %v1513
      %v1538 = vmul.f32 %v1501, %v1513
      %v1539 = vmul.f32 %v1502, %v1513
      %v1540 = vmul.f32 %v1503, %v1513
      %v1541 = vmul.f32 %v1504, %v1513
      %v1542 = vmul.f32 %v1505, %v1513
      %v1543 = vmul.f32 %v1506, %v1513
      %v1544 = vmul.f32 %v1507, %v1513
      %v1545 = vmul.f32 %v1508, %v1513
      %v1546 = vmul.f32 %v1509, %v1513
      %v1547 = vadd.f32 %v1446, %v1515
      %v1548 = vadd.f32 %v1447, %v1516
      %v1549 = vadd.f32 %v1448, %v1517
      %v1550 = vadd.f32 %v1449, %v1518
      %v1551 = vadd.f32 %v1450, %v1519
      %v1552 = vadd.f32 %v1451, %v1520
      %v1553 = vadd.f32 %v1452, %v1521
      %v1554 = vadd.f32 %v1453, %v1522
      %v1555 = vadd.f32 %v1454, %v1523
      %v1556 = vadd.f32 %v1455, %v1524
      %v1557 = vadd.f32 %v1456, %v1525
      %v1558 = vadd.f32 %v1457, %v1526
      %v1559 = vadd.f32 %v1458, %v1527
      %v1560 = vadd.f32 %v1459, %v1528
      %v1561 = vadd.f32 %v1460, %v1529
      %v1562 = vadd.f32 %v1461, %v1530
      %v1563 = vadd.f32 %v1462, %v1531
      %v1564 = vadd.f32 %v1463, %v1532
      %v1565 = vadd.f32 %v1464, %v1533
      %v1566 = vadd.f32 %v1465, %v1534
      %v1567 = vadd.f32 %v1466, %v1535
      %v1568 = vadd.f32 %v1467, %v1536
      %v1569 = vadd.f32 %v1468, %v1537
      %v1570 = vadd.f32 %v1469, %v1538
      %v1571 = vadd.f32 %v1470, %v1539
      %v1572 = vadd.f32 %v1471, %v1540
      %v1573 = vadd.f32 %v1472, %v1541
      %v1574 = vadd.f32 %v1473, %v1542
      %v1575 = vadd.f32 %v1474, %v1543
      %v1576 = vadd.f32 %v1475, %v1544
      %v1577 = vadd.f32 %v1476, %v1545
      %v1578 = vadd.f32 %v1477, %v1546
      %v1579 = vld [vmem:[%s5] sm:$0x1]
      %v1581 = vperm.slane %v1579, 0
      %v1583 = vmul.f32 %v1547, %v1581
      %v1584 = vmul.f32 %v1548, %v1581
      %v1585 = vmul.f32 %v1549, %v1581
      %v1586 = vmul.f32 %v1550, %v1581
      %v1587 = vmul.f32 %v1551, %v1581
      %v1588 = vmul.f32 %v1552, %v1581
      %v1589 = vmul.f32 %v1553, %v1581
      %v1590 = vmul.f32 %v1554, %v1581
      %v1591 = vmul.f32 %v1555, %v1581
      %v1592 = vmul.f32 %v1556, %v1581
      %v1593 = vmul.f32 %v1557, %v1581
      %v1594 = vmul.f32 %v1558, %v1581
      %v1595 = vmul.f32 %v1559, %v1581
      %v1596 = vmul.f32 %v1560, %v1581
      %v1597 = vmul.f32 %v1561, %v1581
      %v1598 = vmul.f32 %v1562, %v1581
      %v1599 = vmul.f32 %v1563, %v1581
      %v1600 = vmul.f32 %v1564, %v1581
      %v1601 = vmul.f32 %v1565, %v1581
      %v1602 = vmul.f32 %v1566, %v1581
      %v1603 = vmul.f32 %v1567, %v1581
      %v1604 = vmul.f32 %v1568, %v1581
      %v1605 = vmul.f32 %v1569, %v1581
      %v1606 = vmul.f32 %v1570, %v1581
      %v1607 = vmul.f32 %v1571, %v1581
      %v1608 = vmul.f32 %v1572, %v1581
      %v1609 = vmul.f32 %v1573, %v1581
      %v1610 = vmul.f32 %v1574, %v1581
      %v1611 = vmul.f32 %v1575, %v1581
      %v1612 = vmul.f32 %v1576, %v1581
      %v1613 = vmul.f32 %v1577, %v1581
      %v1614 = vmul.f32 %v1578, %v1581
      %v1615 = vld [vmem:[%s6] sm:$0x1]
      %v1617 = vperm.slane %v1615, 0
      %v1619 = vadd.f32 %v1583, %v1617
      %v1620 = vadd.f32 %v1584, %v1617
      %v1621 = vadd.f32 %v1585, %v1617
      %v1622 = vadd.f32 %v1586, %v1617
      %v1623 = vadd.f32 %v1587, %v1617
      %v1624 = vadd.f32 %v1588, %v1617
      %v1625 = vadd.f32 %v1589, %v1617
      %v1626 = vadd.f32 %v1590, %v1617
      %v1627 = vadd.f32 %v1591, %v1617
      %v1628 = vadd.f32 %v1592, %v1617
      %v1629 = vadd.f32 %v1593, %v1617
      %v1630 = vadd.f32 %v1594, %v1617
      %v1631 = vadd.f32 %v1595, %v1617
      %v1632 = vadd.f32 %v1596, %v1617
      %v1633 = vadd.f32 %v1597, %v1617
      %v1634 = vadd.f32 %v1598, %v1617
      %v1635 = vadd.f32 %v1599, %v1617
      %v1636 = vadd.f32 %v1600, %v1617
      %v1637 = vadd.f32 %v1601, %v1617
      %v1638 = vadd.f32 %v1602, %v1617
      %v1639 = vadd.f32 %v1603, %v1617
      %v1640 = vadd.f32 %v1604, %v1617
      %v1641 = vadd.f32 %v1605, %v1617
      %v1642 = vadd.f32 %v1606, %v1617
      %v1643 = vadd.f32 %v1607, %v1617
      %v1644 = vadd.f32 %v1608, %v1617
      %v1645 = vadd.f32 %v1609, %v1617
      %v1646 = vadd.f32 %v1610, %v1617
      %v1647 = vadd.f32 %v1611, %v1617
      %v1648 = vadd.f32 %v1612, %v1617
      %v1649 = vadd.f32 %v1613, %v1617
      %v1650 = vadd.f32 %v1614, %v1617
      %v1651 = vmax.f32 %v1619, 0.0
      %v1652 = vmax.f32 %v1620, 0.0
      %v1653 = vmax.f32 %v1621, 0.0
      %v1654 = vmax.f32 %v1622, 0.0
      %v1655 = vmax.f32 %v1623, 0.0
      %v1656 = vmax.f32 %v1624, 0.0
      %v1657 = vmax.f32 %v1625, 0.0
      %v1658 = vmax.f32 %v1626, 0.0
      %v1659 = vmax.f32 %v1627, 0.0
      %v1660 = vmax.f32 %v1628, 0.0
      %v1661 = vmax.f32 %v1629, 0.0
      %v1662 = vmax.f32 %v1630, 0.0
      %v1663 = vmax.f32 %v1631, 0.0
      %v1664 = vmax.f32 %v1632, 0.0
      %v1665 = vmax.f32 %v1633, 0.0
      %v1666 = vmax.f32 %v1634, 0.0
      %v1667 = vmax.f32 %v1635, 0.0
      %v1668 = vmax.f32 %v1636, 0.0
      %v1669 = vmax.f32 %v1637, 0.0
      %v1670 = vmax.f32 %v1638, 0.0
      %v1671 = vmax.f32 %v1639, 0.0
      %v1672 = vmax.f32 %v1640, 0.0
      %v1673 = vmax.f32 %v1641, 0.0
      %v1674 = vmax.f32 %v1642, 0.0
      %v1675 = vmax.f32 %v1643, 0.0
      %v1676 = vmax.f32 %v1644, 0.0
      %v1677 = vmax.f32 %v1645, 0.0
      %v1678 = vmax.f32 %v1646, 0.0
      %v1679 = vmax.f32 %v1647, 0.0
      %v1680 = vmax.f32 %v1648, 0.0
      %v1681 = vmax.f32 %v1649, 0.0
      %v1682 = vmax.f32 %v1650, 0.0
      %1715 = vrot.lane.b32.xlu0 %v1651, 8
      %v1716 = vpop.permute.xlu0 %1715
      %1717 = vrot.lane.b32.xlu0 %v1652, 8
      %v1718 = vpop.permute.xlu0 %1717
      %1719 = vrot.lane.b32.xlu0 %v1653, 8
      %v1720 = vpop.permute.xlu0 %1719
      %1721 = vrot.lane.b32.xlu0 %v1654, 8
      %v1722 = vpop.permute.xlu0 %1721
      %1723 = vrot.lane.b32.xlu0 %v1655, 8
      %v1724 = vpop.permute.xlu0 %1723
      %1725 = vrot.lane.b32.xlu0 %v1656, 8
      %v1726 = vpop.permute.xlu0 %1725
      %1727 = vrot.lane.b32.xlu0 %v1657, 8
      %v1728 = vpop.permute.xlu0 %1727
      %1729 = vrot.lane.b32.xlu0 %v1658, 8
      %v1730 = vpop.permute.xlu0 %1729
      %1731 = vrot.lane.b32.xlu0 %v1659, 8
      %v1732 = vpop.permute.xlu0 %1731
      %1733 = vrot.lane.b32.xlu0 %v1660, 8
      %v1734 = vpop.permute.xlu0 %1733
      %1735 = vrot.lane.b32.xlu0 %v1661, 8
      %v1736 = vpop.permute.xlu0 %1735
      %1737 = vrot.lane.b32.xlu0 %v1662, 8
      %v1738 = vpop.permute.xlu0 %1737
      %1739 = vrot.lane.b32.xlu0 %v1663, 8
      %v1740 = vpop.permute.xlu0 %1739
      %1741 = vrot.lane.b32.xlu0 %v1664, 8
      %v1742 = vpop.permute.xlu0 %1741
      %1743 = vrot.lane.b32.xlu0 %v1665, 8
      %v1744 = vpop.permute.xlu0 %1743
      %1745 = vrot.lane.b32.xlu0 %v1666, 8
      %v1746 = vpop.permute.xlu0 %1745
      %1747 = vrot.lane.b32.xlu0 %v1667, 8
      %v1748 = vpop.permute.xlu0 %1747
      %1749 = vrot.lane.b32.xlu0 %v1668, 8
      %v1750 = vpop.permute.xlu0 %1749
      %1751 = vrot.lane.b32.xlu0 %v1669, 8
      %v1752 = vpop.permute.xlu0 %1751
      %1753 = vrot.lane.b32.xlu0 %v1670, 8
      %v1754 = vpop.permute.xlu0 %1753
      %1755 = vrot.lane.b32.xlu0 %v1671, 8
      %v1756 = vpop.permute.xlu0 %1755
      %1757 = vrot.lane.b32.xlu0 %v1672, 8
      %v1758 = vpop.permute.xlu0 %1757
      %1759 = vrot.lane.b32.xlu0 %v1673, 8
      %v1760 = vpop.permute.xlu0 %1759
      %1761 = vrot.lane.b32.xlu0 %v1674, 8
      %v1762 = vpop.permute.xlu0 %1761
      %1763 = vrot.lane.b32.xlu0 %v1675, 8
      %v1764 = vpop.permute.xlu0 %1763
      %1765 = vrot.lane.b32.xlu0 %v1676, 8
      %v1766 = vpop.permute.xlu0 %1765
      %1767 = vrot.lane.b32.xlu0 %v1677, 8
      %v1768 = vpop.permute.xlu0 %1767
      %1769 = vrot.lane.b32.xlu0 %v1678, 8
      %v1770 = vpop.permute.xlu0 %1769
      %1771 = vrot.lane.b32.xlu0 %v1679, 8
      %v1772 = vpop.permute.xlu0 %1771
      %1773 = vrot.lane.b32.xlu0 %v1680, 8
      %v1774 = vpop.permute.xlu0 %1773
      %1775 = vrot.lane.b32.xlu0 %v1681, 8
      %v1776 = vpop.permute.xlu0 %1775
      %1777 = vrot.lane.b32.xlu0 %v1682, 8
      %v1778 = vpop.permute.xlu0 %1777
      %v1811 = vsel %vm627, %v595, %v1716
      %v1812 = vsel %vm627, %v596, %v1718
      %v1813 = vsel %vm627, %v597, %v1720
      %v1814 = vsel %vm627, %v598, %v1722
      %v1815 = vsel %vm627, %v599, %v1724
      %v1816 = vsel %vm627, %v600, %v1726
      %v1817 = vsel %vm627, %v601, %v1728
      %v1818 = vsel %vm627, %v602, %v1730
      %v1819 = vsel %vm627, %v603, %v1732
      %v1820 = vsel %vm627, %v604, %v1734
      %v1821 = vsel %vm627, %v605, %v1736
      %v1822 = vsel %vm627, %v606, %v1738
      %v1823 = vsel %vm627, %v607, %v1740
      %v1824 = vsel %vm627, %v608, %v1742
      %v1825 = vsel %vm627, %v609, %v1744
      %v1826 = vsel %vm627, %v610, %v1746
      %v1827 = vsel %vm627, %v611, %v1748
      %v1828 = vsel %vm627, %v612, %v1750
      %v1829 = vsel %vm627, %v613, %v1752
      %v1830 = vsel %vm627, %v614, %v1754
      %v1831 = vsel %vm627, %v615, %v1756
      %v1832 = vsel %vm627, %v616, %v1758
      %v1833 = vsel %vm627, %v617, %v1760
      %v1834 = vsel %vm627, %v618, %v1762
      %v1835 = vsel %vm627, %v619, %v1764
      %v1836 = vsel %vm627, %v620, %v1766
      %v1837 = vsel %vm627, %v621, %v1768
      %v1838 = vsel %vm627, %v622, %v1770
      %v1839 = vsel %vm627, %v623, %v1772
      %v1840 = vsel %vm627, %v624, %v1774
      %v1841 = vsel %vm627, %v625, %v1776
      %v1842 = vsel %vm627, %v626, %v1778
      %1843 = vst.msk [vmem:[%s278] sm:$0xff] %vm313, %v1811
      %1844 = vst.msk [vmem:[%s278 + $0x8] sm:$0xff] %vm313, %v1812
      %1845 = vst.msk [vmem:[%s278 + $0x10] sm:$0xff] %vm313, %v1813
      %1846 = vst.msk [vmem:[%s278 + $0x18] sm:$0xff] %vm313, %v1814
      %1847 = vst.msk [vmem:[%s278 + $0x20] sm:$0xff] %vm313, %v1815
      %1848 = vst.msk [vmem:[%s278 + $0x28] sm:$0xff] %vm313, %v1816
      %1849 = vst.msk [vmem:[%s278 + $0x30] sm:$0xff] %vm313, %v1817
      %1850 = vst.msk [vmem:[%s278 + $0x38] sm:$0xff] %vm313, %v1818
      %1851 = vst.msk [vmem:[%s278 + $0x40] sm:$0xff] %vm313, %v1819
      %1852 = vst.msk [vmem:[%s278 + $0x48] sm:$0xff] %vm313, %v1820
      %1853 = vst.msk [vmem:[%s278 + $0x50] sm:$0xff] %vm313, %v1821
      %1854 = vst.msk [vmem:[%s278 + $0x58] sm:$0xff] %vm313, %v1822
      %1855 = vst.msk [vmem:[%s278 + $0x60] sm:$0xff] %vm313, %v1823
      %1856 = vst.msk [vmem:[%s278 + $0x68] sm:$0xff] %vm313, %v1824
      %1857 = vst.msk [vmem:[%s278 + $0x70] sm:$0xff] %vm313, %v1825
      %1858 = vst.msk [vmem:[%s278 + $0x78] sm:$0xff] %vm313, %v1826
      %1859 = vst.msk [vmem:[%s278 + $0x80] sm:$0xff] %vm313, %v1827
      %1860 = vst.msk [vmem:[%s278 + $0x88] sm:$0xff] %vm313, %v1828
      %1861 = vst.msk [vmem:[%s278 + $0x90] sm:$0xff] %vm313, %v1829
      %1862 = vst.msk [vmem:[%s278 + $0x98] sm:$0xff] %vm313, %v1830
      %1863 = vst.msk [vmem:[%s278 + $0xa0] sm:$0xff] %vm313, %v1831
      %1864 = vst.msk [vmem:[%s278 + $0xa8] sm:$0xff] %vm313, %v1832
      %1865 = vst.msk [vmem:[%s278 + $0xb0] sm:$0xff] %vm313, %v1833
      %1866 = vst.msk [vmem:[%s278 + $0xb8] sm:$0xff] %vm313, %v1834
      %1867 = vst.msk [vmem:[%s278 + $0xc0] sm:$0xff] %vm313, %v1835
      %1868 = vst.msk [vmem:[%s278 + $0xc8] sm:$0xff] %vm313, %v1836
      %1869 = vst.msk [vmem:[%s278 + $0xd0] sm:$0xff] %vm313, %v1837
      %1870 = vst.msk [vmem:[%s278 + $0xd8] sm:$0xff] %vm313, %v1838
      %1871 = vst.msk [vmem:[%s278 + $0xe0] sm:$0xff] %vm313, %v1839
      %1872 = vst.msk [vmem:[%s278 + $0xe8] sm:$0xff] %vm313, %v1840
      %1873 = vst.msk [vmem:[%s278 + $0xf0] sm:$0xff] %vm313, %v1841
      %1874 = vst.msk [vmem:[%s278 + $0xf8] sm:$0xff] %vm313, %v1842
      %p1875 = scmp.lt.s32.totalorder %s18, 1
      %s1876 = scalar_select %p1875, %s18, 1
      %s1877 = smul.addr %s1876, 32
      %s1878 = smul.addr %s1877, 8
      %s1879 = scalar_lea.vmem %s7, %s1878
      // Predicated region
      $region49: #{ghost_bottleneck_nchw.2} parent=47 // pred_check
        %p1880 = pneg %p188
      $region50: #{ghost_bottleneck_nchw.2} parent=47 // pred_check_branch
        %1882 = sbr.rel (%p1880) target = $region52
      $region51: #{ghost_bottleneck_nchw.2} parent=47 // pred_region
        _
      $region52: #{ghost_bottleneck_nchw.2} parent=47 // pred_fallthru
        _
    $region48: #{ghost_bottleneck_nchw.2} parent=5 // pred_fallthru
      _
    %p1883 = scmp.le.s32.totalorder 2, %s13
    // Predicated region
    $region53: #{ghost_bottleneck_nchw.2} parent=5 // pred_check
      %p1884 = pneg %p1883
    $region54: #{ghost_bottleneck_nchw.2} parent=5 // pred_check_branch
      %1886 = sbr.rel (%p1884) target = $region56
    $region55: #{ghost_bottleneck_nchw.2} parent=5 // pred_region
      %s1887 = ssub.s32 %s13, 2
      // Predicated region
      $region57: #{ghost_bottleneck_nchw.2} parent=55 // pred_check
        %p1888 = pneg %p194
      $region58: #{ghost_bottleneck_nchw.2} parent=55 // pred_check_branch
        %1890 = sbr.rel (%p1888) target = $region60
      $region59: #{ghost_bottleneck_nchw.2} parent=55 // pred_region
        %p1891 = scmp.lt.s32.totalorder %s19, 1
        %s1892 = scalar_select %p1891, %s19, 1
        %s1893 = smul.addr %s1892, 32
        %s1894 = smul.addr %s1893, 8
        %s1895 = scalar_lea.vmem %s7, %s1894
      $region60: #{ghost_bottleneck_nchw.2} parent=55 // pred_fallthru
        _
    $region56: #{ghost_bottleneck_nchw.2} parent=5 // pred_fallthru
      _
  $region6: #{ghost_bottleneck_nchw.2} parent=0 // loop_footer
    %s17 = sadd.s32 1, %s13
  $region7: #{ghost_bottleneck_nchw.2} parent=0 // loop_footer_branch
    %12 = sbr.rel target = $region3
  $region8: #{ghost_bottleneck_nchw.2} parent=0 // loop_exit
    _

// kernel: ghost_bottleneck_nchw.3
$region0: #{ghost_bottleneck_nchw.3}
  #allocation0 [shape = 'u32[]', space=smem, size = 0x4, offset = 0x4, fixed_abs, tag = 'smem constant byte address 0x4 - core index']
  #allocation1 [shape = 'u32[72,128]{1,0:T(1,128)}', space=vmem, size = 0x9000, scoped, tag = 'internal scratch']
  #allocation2 [shape = 'f32[18,25,8]{2,1,0:T(8,128)}', space=vmem, size = 0x48000, scoped, tag = 'scratch operand']
  %s0 = inlined_call_operand.vmem [shape: f32[2,16,16,16], index: 0, kind: input, shape index: {}]
  %s1 = inlined_call_operand.vmem [shape: f32[16,8], index: 1, kind: input, shape index: {}]
  %s2 = inlined_call_operand.vmem [shape: f32[1,8], index: 2, kind: input, shape index: {}]
  %s3 = inlined_call_operand.vmem [shape: f32[1,8], index: 3, kind: input, shape index: {}]
  %s4 = inlined_call_operand.vmem [shape: f32[9,1,8], index: 4, kind: input, shape index: {}]
  %s5 = inlined_call_operand.vmem [shape: f32[1,8], index: 5, kind: input, shape index: {}]
  %s6 = inlined_call_operand.vmem [shape: f32[1,8], index: 6, kind: input, shape index: {}]
  %s7 = inlined_call_operand.vmem [shape: f32[2,16,16,16], index: 7, kind: input, shape index: {}]
  %s8 = inlined_call_operand.vmem [shape: f32[2,16,16,16], index: 8, kind: output, shape index: {}]
  %s9 = sld [smem:[#allocation0]]
  $region65: #{ghost_bottleneck_nchw.3} parent=0
    _
  %s11 = ssub.s32 1, %s9
  %s12 = scalar_select 0, %s11, %s9
  loop: start=0, step=1, limit=4
  $region2: #{ghost_bottleneck_nchw.3} parent=0 // loop_pre_header
    _
  $region3: #{ghost_bottleneck_nchw.3} parent=0 // loop_header
    %s14 = sphi 0, %s18
    %p15 = scmp.ge.s32.totalorder %s14, 4
    %s24 = sphi 0, %s26
    %s27 = sphi 0, %s24
    %s28 = sphi 0, %s27
    %s44 = sphi 0, %s28
    %s48 = sphi 0, %s48
    %s50 = sphi 0, %s48
    %s51 = sphi 0, %s50
    %s65 = sphi 0, %s51
    %s69 = sphi 0, %s69
    %s71 = sphi 0, %s69
    %s72 = sphi 0, %s71
    %s86 = sphi 0, %s72
    %s90 = sphi 0, %s90
    %s92 = sphi 0, %s90
    %s93 = sphi 0, %s92
    %s107 = sphi 0, %s93
    %s111 = sphi 0, %s111
    %s113 = sphi 0, %s111
    %s114 = sphi 0, %s113
    %s128 = sphi 0, %s114
    %s132 = sphi 0, %s132
    %s134 = sphi 0, %s132
    %s135 = sphi 0, %s134
    %s149 = sphi 0, %s135
    %s153 = sphi 0, %s153
    %s155 = sphi 0, %s153
    %s156 = sphi 0, %s155
    %s170 = sphi 0, %s156
    %s176 = sphi 0, %s178
    %s179 = sphi 0, %s176
    %s180 = sphi 0, %s179
    %s196 = sphi 0, %s180
    %s202 = sphi 0, %s204
    %s205 = sphi 0, %s202
    %s206 = sphi 0, %s205
    %s222 = sphi 0, %s206
  $region4: #{ghost_bottleneck_nchw.3} parent=0 // loop_header_branch
    %17 = sbr.rel (%p15) target = $region8
  $region5: #{ghost_bottleneck_nchw.3} parent=0 // loop_body
    %s19 = ssub.s32 %s14, 1
    %s20 = ssub.s32 %s14, 2
    %s21 = sadd.s32 %s14, 1
    %s22 = ssub.s32 %s14, %s21
    %p23 = scmp.eq.s32.totalorder %s22, 0
    %s25 = sadd.s32 %s24, 1
    %s26 = scalar_select %p23, %s24, %s25
    %p29 = pneg %p23
    %p30 = scmp.eq.s32.totalorder %s14, 1
    %p31 = por %p29, %p30
    %p32 = scmp.ne.s32.totalorder %s24, %s27
    %p33 = scmp.eq.s32.totalorder %s14, 0
    %p34 = por %p32, %p33
    %p35 = scmp.ne.s32.totalorder %s24, %s27
    %p36 = scmp.eq.s32.totalorder %s19, 1
    %p37 = por %p35, %p36
    %p38 = scmp.ne.s32.totalorder %s27, %s28
    %p39 = scmp.eq.s32.totalorder %s19, 0
    %p40 = por %p38, %p39
    %p41 = scmp.ne.s32.totalorder %s27, %s28
    %p42 = scmp.eq.s32.totalorder %s20, 1
    %p43 = por %p41, %p42
    %p45 = scmp.ne.s32.totalorder %s28, %s44
    %p46 = scmp.eq.s32.totalorder %s20, 0
    %p47 = por %p45, %p46
    %s49 = sadd.s32 %s48, 1
    %p52 = scmp.eq.s32.totalorder %s14, 1
    %p53 = scmp.ne.s32.totalorder %s48, %s50
    %p54 = scmp.eq.s32.totalorder %s14, 0
    %p55 = por %p53, %p54
    %p56 = scmp.ne.s32.totalorder %s48, %s50
    %p57 = scmp.eq.s32.totalorder %s19, 1
    %p58 = por %p56, %p57
    %p59 = scmp.ne.s32.totalorder %s50, %s51
    %p60 = scmp.eq.s32.totalorder %s19, 0
    %p61 = por %p59, %p60
    %p62 = scmp.ne.s32.totalorder %s50, %s51
    %p63 = scmp.eq.s32.totalorder %s20, 1
    %p64 = por %p62, %p63
    %p66 = scmp.ne.s32.totalorder %s51, %s65
    %p67 = scmp.eq.s32.totalorder %s20, 0
    %p68 = por %p66, %p67
    %s70 = sadd.s32 %s69, 1
    %p73 = scmp.eq.s32.totalorder %s14, 1
    %p74 = scmp.ne.s32.totalorder %s69, %s71
    %p75 = scmp.eq.s32.totalorder %s14, 0
    %p76 = por %p74, %p75
    %p77 = scmp.ne.s32.totalorder %s69, %s71
    %p78 = scmp.eq.s32.totalorder %s19, 1
    %p79 = por %p77, %p78
    %p80 = scmp.ne.s32.totalorder %s71, %s72
    %p81 = scmp.eq.s32.totalorder %s19, 0
    %p82 = por %p80, %p81
    %p83 = scmp.ne.s32.totalorder %s71, %s72
    %p84 = scmp.eq.s32.totalorder %s20, 1
    %p85 = por %p83, %p84
    %p87 = scmp.ne.s32.totalorder %s72, %s86
    %p88 = scmp.eq.s32.totalorder %s20, 0
    %p89 = por %p87, %p88
    %s91 = sadd.s32 %s90, 1
    %p94 = scmp.eq.s32.totalorder %s14, 1
    %p95 = scmp.ne.s32.totalorder %s90, %s92
    %p96 = scmp.eq.s32.totalorder %s14, 0
    %p97 = por %p95, %p96
    %p98 = scmp.ne.s32.totalorder %s90, %s92
    %p99 = scmp.eq.s32.totalorder %s19, 1
    %p100 = por %p98, %p99
    %p101 = scmp.ne.s32.totalorder %s92, %s93
    %p102 = scmp.eq.s32.totalorder %s19, 0
    %p103 = por %p101, %p102
    %p104 = scmp.ne.s32.totalorder %s92, %s93
    %p105 = scmp.eq.s32.totalorder %s20, 1
    %p106 = por %p104, %p105
    %p108 = scmp.ne.s32.totalorder %s93, %s107
    %p109 = scmp.eq.s32.totalorder %s20, 0
    %p110 = por %p108, %p109
    %s112 = sadd.s32 %s111, 1
    %p115 = scmp.eq.s32.totalorder %s14, 1
    %p116 = scmp.ne.s32.totalorder %s111, %s113
    %p117 = scmp.eq.s32.totalorder %s14, 0
    %p118 = por %p116, %p117
    %p119 = scmp.ne.s32.totalorder %s111, %s113
    %p120 = scmp.eq.s32.totalorder %s19, 1
    %p121 = por %p119, %p120
    %p122 = scmp.ne.s32.totalorder %s113, %s114
    %p123 = scmp.eq.s32.totalorder %s19, 0
    %p124 = por %p122, %p123
    %p125 = scmp.ne.s32.totalorder %s113, %s114
    %p126 = scmp.eq.s32.totalorder %s20, 1
    %p127 = por %p125, %p126
    %p129 = scmp.ne.s32.totalorder %s114, %s128
    %p130 = scmp.eq.s32.totalorder %s20, 0
    %p131 = por %p129, %p130
    %s133 = sadd.s32 %s132, 1
    %p136 = scmp.eq.s32.totalorder %s14, 1
    %p137 = scmp.ne.s32.totalorder %s132, %s134
    %p138 = scmp.eq.s32.totalorder %s14, 0
    %p139 = por %p137, %p138
    %p140 = scmp.ne.s32.totalorder %s132, %s134
    %p141 = scmp.eq.s32.totalorder %s19, 1
    %p142 = por %p140, %p141
    %p143 = scmp.ne.s32.totalorder %s134, %s135
    %p144 = scmp.eq.s32.totalorder %s19, 0
    %p145 = por %p143, %p144
    %p146 = scmp.ne.s32.totalorder %s134, %s135
    %p147 = scmp.eq.s32.totalorder %s20, 1
    %p148 = por %p146, %p147
    %p150 = scmp.ne.s32.totalorder %s135, %s149
    %p151 = scmp.eq.s32.totalorder %s20, 0
    %p152 = por %p150, %p151
    %s154 = sadd.s32 %s153, 1
    %p157 = scmp.eq.s32.totalorder %s14, 1
    %p158 = scmp.ne.s32.totalorder %s153, %s155
    %p159 = scmp.eq.s32.totalorder %s14, 0
    %p160 = por %p158, %p159
    %p161 = scmp.ne.s32.totalorder %s153, %s155
    %p162 = scmp.eq.s32.totalorder %s19, 1
    %p163 = por %p161, %p162
    %p164 = scmp.ne.s32.totalorder %s155, %s156
    %p165 = scmp.eq.s32.totalorder %s19, 0
    %p166 = por %p164, %p165
    %p167 = scmp.ne.s32.totalorder %s155, %s156
    %p168 = scmp.eq.s32.totalorder %s20, 1
    %p169 = por %p167, %p168
    %p171 = scmp.ne.s32.totalorder %s156, %s170
    %p172 = scmp.eq.s32.totalorder %s20, 0
    %p173 = por %p171, %p172
    %s174 = ssub.s32 %s14, %s21
    %p175 = scmp.eq.s32.totalorder %s174, 0
    %s177 = sadd.s32 %s176, 1
    %s178 = scalar_select %p175, %s176, %s177
    %p181 = pneg %p175
    %p182 = scmp.eq.s32.totalorder %s14, 1
    %p183 = por %p181, %p182
    %p184 = scmp.ne.s32.totalorder %s176, %s179
    %p185 = scmp.eq.s32.totalorder %s14, 0
    %p186 = por %p184, %p185
    %p187 = scmp.ne.s32.totalorder %s176, %s179
    %p188 = scmp.eq.s32.totalorder %s19, 1
    %p189 = por %p187, %p188
    %p190 = scmp.ne.s32.totalorder %s179, %s180
    %p191 = scmp.eq.s32.totalorder %s19, 0
    %p192 = por %p190, %p191
    %p193 = scmp.ne.s32.totalorder %s179, %s180
    %p194 = scmp.eq.s32.totalorder %s20, 1
    %p195 = por %p193, %p194
    %p197 = scmp.ne.s32.totalorder %s180, %s196
    %p198 = scmp.eq.s32.totalorder %s20, 0
    %p199 = por %p197, %p198
    %s200 = ssub.s32 %s14, %s21
    %p201 = scmp.eq.s32.totalorder %s200, 0
    %s203 = sadd.s32 %s202, 1
    %s204 = scalar_select %p201, %s202, %s203
    %p207 = pneg %p201
    %p208 = scmp.eq.s32.totalorder %s14, 1
    %p209 = por %p207, %p208
    %p210 = scmp.ne.s32.totalorder %s202, %s205
    %p211 = scmp.eq.s32.totalorder %s14, 0
    %p212 = por %p210, %p211
    %p213 = scmp.ne.s32.totalorder %s202, %s205
    %p214 = scmp.eq.s32.totalorder %s19, 1
    %p215 = por %p213, %p214
    %p216 = scmp.ne.s32.totalorder %s205, %s206
    %p217 = scmp.eq.s32.totalorder %s19, 0
    %p218 = por %p216, %p217
    %p219 = scmp.ne.s32.totalorder %s205, %s206
    %p220 = scmp.eq.s32.totalorder %s20, 1
    %p221 = por %p219, %p220
    %p223 = scmp.ne.s32.totalorder %s206, %s222
    %p224 = scmp.eq.s32.totalorder %s20, 0
    %p225 = por %p223, %p224
    %p226 = scmp.le.s32.totalorder 1, %s14
    %p227 = scmp.lt.s32.totalorder %s14, 3
    %p228 = pnand %p226, %p227
    %p229 = pneg %p228
    // Predicated region
    $region9: #{ghost_bottleneck_nchw.3} parent=5 // pred_check
      _
    $region10: #{ghost_bottleneck_nchw.3} parent=5 // pred_check_branch
      %231 = sbr.rel (%p228) target = $region12
    $region11: #{ghost_bottleneck_nchw.3} parent=5 // pred_region
      %s232 = ssub.s32 %s14, 1
      // Predicated region
      $region13: #{ghost_bottleneck_nchw.3} parent=11 // pred_check
        %p233 = pneg %p61
      $region14: #{ghost_bottleneck_nchw.3} parent=11 // pred_check_branch
        %235 = sbr.rel (%p233) target = $region16
      $region15: #{ghost_bottleneck_nchw.3} parent=11 // pred_region
        _
      $region16: #{ghost_bottleneck_nchw.3} parent=11 // pred_fallthru
        _
      // Predicated region
      $region17: #{ghost_bottleneck_nchw.3} parent=11 // pred_check
        %p236 = pneg %p82
      $region18: #{ghost_bottleneck_nchw.3} parent=11 // pred_check_branch
        %238 = sbr.rel (%p236) target = $region20
      $region19: #{ghost_bottleneck_nchw.3} parent=11 // pred_region
        _
      $region20: #{ghost_bottleneck_nchw.3} parent=11 // pred_fallthru
        _
      // Predicated region
      $region21: #{ghost_bottleneck_nchw.3} parent=11 // pred_check
        %p239 = pneg %p103
      $region22: #{ghost_bottleneck_nchw.3} parent=11 // pred_check_branch
        %241 = sbr.rel (%p239) target = $region24
      $region23: #{ghost_bottleneck_nchw.3} parent=11 // pred_region
        _
      $region24: #{ghost_bottleneck_nchw.3} parent=11 // pred_fallthru
        _
      // Predicated region
      $region25: #{ghost_bottleneck_nchw.3} parent=11 // pred_check
        %p242 = pneg %p124
      $region26: #{ghost_bottleneck_nchw.3} parent=11 // pred_check_branch
        %244 = sbr.rel (%p242) target = $region28
      $region27: #{ghost_bottleneck_nchw.3} parent=11 // pred_region
        _
      $region28: #{ghost_bottleneck_nchw.3} parent=11 // pred_fallthru
        _
      // Predicated region
      $region29: #{ghost_bottleneck_nchw.3} parent=11 // pred_check
        %p245 = pneg %p145
      $region30: #{ghost_bottleneck_nchw.3} parent=11 // pred_check_branch
        %247 = sbr.rel (%p245) target = $region32
      $region31: #{ghost_bottleneck_nchw.3} parent=11 // pred_region
        _
      $region32: #{ghost_bottleneck_nchw.3} parent=11 // pred_fallthru
        _
      // Predicated region
      $region33: #{ghost_bottleneck_nchw.3} parent=11 // pred_check
        %p248 = pneg %p166
      $region34: #{ghost_bottleneck_nchw.3} parent=11 // pred_check_branch
        %250 = sbr.rel (%p248) target = $region36
      $region35: #{ghost_bottleneck_nchw.3} parent=11 // pred_region
        _
      $region36: #{ghost_bottleneck_nchw.3} parent=11 // pred_fallthru
        _
    $region12: #{ghost_bottleneck_nchw.3} parent=5 // pred_fallthru
      _
    %p251 = scmp.lt.s32.totalorder %s14, 2
    // Predicated region
    $region37: #{ghost_bottleneck_nchw.3} parent=5 // pred_check
      %p252 = pneg %p251
    $region38: #{ghost_bottleneck_nchw.3} parent=5 // pred_check_branch
      %254 = sbr.rel (%p252) target = $region40
    $region39: #{ghost_bottleneck_nchw.3} parent=5 // pred_region
      // Predicated region
      $region41: #{ghost_bottleneck_nchw.3} parent=39 // pred_check
        %p255 = pneg %p34
      $region42: #{ghost_bottleneck_nchw.3} parent=39 // pred_check_branch
        %257 = sbr.rel (%p255) target = $region44
      $region43: #{ghost_bottleneck_nchw.3} parent=39 // pred_region
        %p258 = scmp.lt.s32.totalorder %s14, 1
        %s259 = scalar_select %p258, %s14, 1
        %s260 = smul.addr %s259, 32
        %s261 = smul.addr %s260, 8
        %s262 = scalar_lea.vmem %s0, %s261
      $region44: #{ghost_bottleneck_nchw.3} parent=39 // pred_fallthru
        _
      // Predicated region
      $region45: #{ghost_bottleneck_nchw.3} parent=39 // pred_check
        %p263 = pneg %p186
      $region46: #{ghost_bottleneck_nchw.3} parent=39 // pred_check_branch
        %265 = sbr.rel (%p263) target = $region48
      $region47: #{ghost_bottleneck_nchw.3} parent=39 // pred_region
        %p266 = scmp.lt.s32.totalorder %s14, 1
        %s267 = scalar_select %p266, %s14, 1
        %s268 = smul.addr %s267, 32
        %s269 = smul.addr %s268, 8
        %s270 = scalar_lea.vmem %s7, %s269
      $region48: #{ghost_bottleneck_nchw.3} parent=39 // pred_fallthru
        _
    $region40: #{ghost_bottleneck_nchw.3} parent=5 // pred_fallthru
      _
    %p271 = scmp.le.s32.totalorder 1, %s14
    %p272 = scmp.lt.s32.totalorder %s14, 3
    %p273 = pnand %p271, %p272
    %p274 = pneg %p273
    // Predicated region
    $region49: #{ghost_bottleneck_nchw.3} parent=5 // pred_check
      _
    $region50: #{ghost_bottleneck_nchw.3} parent=5 // pred_check_branch
      %276 = sbr.rel (%p273) target = $region52
    $region51: #{ghost_bottleneck_nchw.3} parent=5 // pred_region
      %s277 = ssub.s32 %s14, 1
      %p278 = scmp.lt.s32.totalorder %s19, 1
      %s279 = scalar_select %p278, %s19, 1
      %s280 = smul.addr %s279, 32
      %s281 = smul.addr %s280, 8
      %s282 = scalar_lea.vmem %s0, %s281
      %p283 = pneg %p40
      %p284 = pneg %p37
      %p285 = pneg %p61
      %p286 = pneg %p58
      %p287 = pneg %p82
      %p288 = pneg %p79
      %p289 = pneg %p103
      %p290 = pneg %p100
      %p291 = pneg %p124
      %p292 = pneg %p121
      %p293 = pneg %p145
      %p294 = pneg %p142
      %p295 = pneg %p166
      %p296 = pneg %p163
      %p297 = scmp.lt.s32.totalorder %s19, 1
      %s298 = scalar_select %p297, %s19, 1
      %s299 = smul.addr %s298, 32
      %s300 = smul.addr %s299, 8
      %s301 = scalar_lea.vmem %s7, %s300
      %p302 = pneg %p192
      %p303 = pneg %p189
      %p304 = pneg %p218
      %p305 = pneg %p215
      %p306 = scmp.lt.s32.totalorder %s19, 1
      %s307 = scalar_select %p306, %s19, 1
      %s308 = smul.addr %s307, 32
      %s309 = smul.addr %s308, 8
      %s310 = scalar_lea.vmem %s8, %s309
      %p311 = scmp.lt.s32.totalorder %s19, 1
      %s312 = scalar_select %p311, %s19, 1
      %s313 = smul.addr %s312, 32
      %s314 = smul.addr %s313, 8
      %s315 = scalar_lea.vmem %s0, %s314
      %p316 = scmp.lt.s32.totalorder %s19, 1
      %s317 = scalar_select %p316, %s19, 1
      %s318 = smul.addr %s317, 32
      %s319 = smul.addr %s318, 8
      %s320 = scalar_lea.vmem %s7, %s319
      %p321 = scmp.lt.s32.totalorder %s19, 1
      %s322 = scalar_select %p321, %s19, 1
      %s323 = smul.addr %s322, 32
      %s324 = smul.addr %s323, 8
      %s325 = scalar_lea.vmem %s8, %s324
      %v326 = vld [vmem:[%s315] sm:$0xff]
      %v327 = vld [vmem:[%s315 + $0x8] sm:$0xff]
      %v328 = vld [vmem:[%s315 + $0x10] sm:$0xff]
      %v329 = vld [vmem:[%s315 + $0x18] sm:$0xff]
      %v330 = vld [vmem:[%s315 + $0x20] sm:$0xff]
      %v331 = vld [vmem:[%s315 + $0x28] sm:$0xff]
      %v332 = vld [vmem:[%s315 + $0x30] sm:$0xff]
      %v333 = vld [vmem:[%s315 + $0x38] sm:$0xff]
      %v334 = vld [vmem:[%s315 + $0x40] sm:$0xff]
      %v335 = vld [vmem:[%s315 + $0x48] sm:$0xff]
      %v336 = vld [vmem:[%s315 + $0x50] sm:$0xff]
      %v337 = vld [vmem:[%s315 + $0x58] sm:$0xff]
      %v338 = vld [vmem:[%s315 + $0x60] sm:$0xff]
      %v339 = vld [vmem:[%s315 + $0x68] sm:$0xff]
      %v340 = vld [vmem:[%s315 + $0x70] sm:$0xff]
      %v341 = vld [vmem:[%s315 + $0x78] sm:$0xff]
      %v342 = vld [vmem:[%s315 + $0x80] sm:$0xff]
      %v343 = vld [vmem:[%s315 + $0x88] sm:$0xff]
      %v344 = vld [vmem:[%s315 + $0x90] sm:$0xff]
      %v345 = vld [vmem:[%s315 + $0x98] sm:$0xff]
      %v346 = vld [vmem:[%s315 + $0xa0] sm:$0xff]
      %v347 = vld [vmem:[%s315 + $0xa8] sm:$0xff]
      %v348 = vld [vmem:[%s315 + $0xb0] sm:$0xff]
      %v349 = vld [vmem:[%s315 + $0xb8] sm:$0xff]
      %v350 = vld [vmem:[%s315 + $0xc0] sm:$0xff]
      %v351 = vld [vmem:[%s315 + $0xc8] sm:$0xff]
      %v352 = vld [vmem:[%s315 + $0xd0] sm:$0xff]
      %v353 = vld [vmem:[%s315 + $0xd8] sm:$0xff]
      %v354 = vld [vmem:[%s315 + $0xe0] sm:$0xff]
      %v355 = vld [vmem:[%s315 + $0xe8] sm:$0xff]
      %v356 = vld [vmem:[%s315 + $0xf0] sm:$0xff]
      %v357 = vld [vmem:[%s315 + $0xf8] sm:$0xff]
      %v358 = vld [vmem:[%s1] sm:$0xff]
      %v359 = vld [vmem:[%s1 + $0x8] sm:$0xff]
      %vm360 = vcmask 130048
      %v362 = vsel %vm360, %v326, 0
      %v365 = vsel %vm360, %v327, 0
      %v368 = vsel %vm360, %v328, 0
      %v371 = vsel %vm360, %v329, 0
      %v374 = vsel %vm360, %v330, 0
      %v377 = vsel %vm360, %v331, 0
      %v380 = vsel %vm360, %v332, 0
      %v383 = vsel %vm360, %v333, 0
      %v386 = vsel %vm360, %v334, 0
      %v389 = vsel %vm360, %v335, 0
      %v392 = vsel %vm360, %v336, 0
      %v395 = vsel %vm360, %v337, 0
      %v398 = vsel %vm360, %v338, 0
      %v401 = vsel %vm360, %v339, 0
      %v404 = vsel %vm360, %v340, 0
      %v407 = vsel %vm360, %v341, 0
      %v410 = vsel %vm360, %v342, 0
      %v413 = vsel %vm360, %v343, 0
      %v416 = vsel %vm360, %v344, 0
      %v419 = vsel %vm360, %v345, 0
      %v422 = vsel %vm360, %v346, 0
      %v425 = vsel %vm360, %v347, 0
      %v428 = vsel %vm360, %v348, 0
      %v431 = vsel %vm360, %v349, 0
      %v434 = vsel %vm360, %v350, 0
      %v437 = vsel %vm360, %v351, 0
      %v440 = vsel %vm360, %v352, 0
      %v443 = vsel %vm360, %v353, 0
      %v446 = vsel %vm360, %v354, 0
      %v449 = vsel %vm360, %v355, 0
      %v452 = vsel %vm360, %v356, 0
      %v455 = vsel %vm360, %v357, 0
      %457 = vmatpush.msra.mxu0 0.0
      %458 = vmatpush.msra.mxu0 0.0
      %459 = vmatpush.msra.mxu0 0.0
      %460 = vmatpush.msra.mxu0 0.0
      %461 = vmatpush.msra.mxu0 0.0
      %462 = vmatpush.msra.mxu0 0.0
      %463 = vmatpush.msra.mxu0 0.0
      %464 = vmatpush.msra.mxu0 0.0
      %465 = vmatpush.msra.mxu0 0.0
      %466 = vmatpush.msra.mxu0 0.0
      %467 = vmatpush.msra.mxu0 0.0
      %468 = vmatpush.msra.mxu0 0.0
      %469 = vmatpush.msra.mxu0 0.0
      %470 = vmatpush.msra.mxu0 0.0
      %471 = vmatpush.msra.mxu0 %v359
      %472 = vmatpush.msra.mxu0 %v358
      %473 = vmatmul.f32.gmra.mxu0 %v362
      %v474 = vpop.f32.mrf.mxu0
      %v475 = vadd.f32 0.0, %v474
      %476 = vmatmul.f32.gmra.mxu0 %v365
      %v477 = vpop.f32.mrf.mxu0
      %v478 = vadd.f32 0.0, %v477
      %479 = vmatmul.f32.gmra.mxu0 %v368
      %v480 = vpop.f32.mrf.mxu0
      %v481 = vadd.f32 0.0, %v480
      %482 = vmatmul.f32.gmra.mxu0 %v371
      %v483 = vpop.f32.mrf.mxu0
      %v484 = vadd.f32 0.0, %v483
      %485 = vmatmul.f32.gmra.mxu0 %v374
      %v486 = vpop.f32.mrf.mxu0
      %v487 = vadd.f32 0.0, %v486
      %488 = vmatmul.f32.gmra.mxu0 %v377
      %v489 = vpop.f32.mrf.mxu0
      %v490 = vadd.f32 0.0, %v489
      %491 = vmatmul.f32.gmra.mxu0 %v380
      %v492 = vpop.f32.mrf.mxu0
      %v493 = vadd.f32 0.0, %v492
      %494 = vmatmul.f32.gmra.mxu0 %v383
      %v495 = vpop.f32.mrf.mxu0
      %v496 = vadd.f32 0.0, %v495
      %497 = vmatmul.f32.gmra.mxu0 %v386
      %v498 = vpop.f32.mrf.mxu0
      %v499 = vadd.f32 0.0, %v498
      %500 = vmatmul.f32.gmra.mxu0 %v389
      %v501 = vpop.f32.mrf.mxu0
      %v502 = vadd.f32 0.0, %v501
      %503 = vmatmul.f32.gmra.mxu0 %v392
      %v504 = vpop.f32.mrf.mxu0
      %v505 = vadd.f32 0.0, %v504
      %506 = vmatmul.f32.gmra.mxu0 %v395
      %v507 = vpop.f32.mrf.mxu0
      %v508 = vadd.f32 0.0, %v507
      %509 = vmatmul.f32.gmra.mxu0 %v398
      %v510 = vpop.f32.mrf.mxu0
      %v511 = vadd.f32 0.0, %v510
      %512 = vmatmul.f32.gmra.mxu0 %v401
      %v513 = vpop.f32.mrf.mxu0
      %v514 = vadd.f32 0.0, %v513
      %515 = vmatmul.f32.gmra.mxu0 %v404
      %v516 = vpop.f32.mrf.mxu0
      %v517 = vadd.f32 0.0, %v516
      %518 = vmatmul.f32.gmra.mxu0 %v407
      %v519 = vpop.f32.mrf.mxu0
      %v520 = vadd.f32 0.0, %v519
      %521 = vmatmul.f32.gmra.mxu0 %v410
      %v522 = vpop.f32.mrf.mxu0
      %v523 = vadd.f32 0.0, %v522
      %524 = vmatmul.f32.gmra.mxu0 %v413
      %v525 = vpop.f32.mrf.mxu0
      %v526 = vadd.f32 0.0, %v525
      %527 = vmatmul.f32.gmra.mxu0 %v416
      %v528 = vpop.f32.mrf.mxu0
      %v529 = vadd.f32 0.0, %v528
      %530 = vmatmul.f32.gmra.mxu0 %v419
      %v531 = vpop.f32.mrf.mxu0
      %v532 = vadd.f32 0.0, %v531
      %533 = vmatmul.f32.gmra.mxu0 %v422
      %v534 = vpop.f32.mrf.mxu0
      %v535 = vadd.f32 0.0, %v534
      %536 = vmatmul.f32.gmra.mxu0 %v425
      %v537 = vpop.f32.mrf.mxu0
      %v538 = vadd.f32 0.0, %v537
      %539 = vmatmul.f32.gmra.mxu0 %v428
      %v540 = vpop.f32.mrf.mxu0
      %v541 = vadd.f32 0.0, %v540
      %542 = vmatmul.f32.gmra.mxu0 %v431
      %v543 = vpop.f32.mrf.mxu0
      %v544 = vadd.f32 0.0, %v543
      %545 = vmatmul.f32.gmra.mxu0 %v434
      %v546 = vpop.f32.mrf.mxu0
      %v547 = vadd.f32 0.0, %v546
      %548 = vmatmul.f32.gmra.mxu0 %v437
      %v549 = vpop.f32.mrf.mxu0
      %v550 = vadd.f32 0.0, %v549
      %551 = vmatmul.f32.gmra.mxu0 %v440
      %v552 = vpop.f32.mrf.mxu0
      %v553 = vadd.f32 0.0, %v552
      %554 = vmatmul.f32.gmra.mxu0 %v443
      %v555 = vpop.f32.mrf.mxu0
      %v556 = vadd.f32 0.0, %v555
      %557 = vmatmul.f32.gmra.mxu0 %v446
      %v558 = vpop.f32.mrf.mxu0
      %v559 = vadd.f32 0.0, %v558
      %560 = vmatmul.f32.gmra.mxu0 %v449
      %v561 = vpop.f32.mrf.mxu0
      %v562 = vadd.f32 0.0, %v561
      %563 = vmatmul.f32.gmra.mxu0 %v452
      %v564 = vpop.f32.mrf.mxu0
      %v565 = vadd.f32 0.0, %v564
      %566 = vmatmul.f32.gmra.mxu0 %v455
      %v567 = vpop.f32.mrf.mxu0
      %v568 = vadd.f32 0.0, %v567
      %569 = vdwg.mxu0
      %v570 = vld [vmem:[%s2] sm:$0x1]
      %v572 = vperm.slane %v570, 0
      %v574 = vmul.f32 %v475, %v572
      %v575 = vmul.f32 %v478, %v572
      %v576 = vmul.f32 %v481, %v572
      %v577 = vmul.f32 %v484, %v572
      %v578 = vmul.f32 %v487, %v572
      %v579 = vmul.f32 %v490, %v572
      %v580 = vmul.f32 %v493, %v572
      %v581 = vmul.f32 %v496, %v572
      %v582 = vmul.f32 %v499, %v572
      %v583 = vmul.f32 %v502, %v572
      %v584 = vmul.f32 %v505, %v572
      %v585 = vmul.f32 %v508, %v572
      %v586 = vmul.f32 %v511, %v572
      %v587 = vmul.f32 %v514, %v572
      %v588 = vmul.f32 %v517, %v572
      %v589 = vmul.f32 %v520, %v572
      %v590 = vmul.f32 %v523, %v572
      %v591 = vmul.f32 %v526, %v572
      %v592 = vmul.f32 %v529, %v572
      %v593 = vmul.f32 %v532, %v572
      %v594 = vmul.f32 %v535, %v572
      %v595 = vmul.f32 %v538, %v572
      %v596 = vmul.f32 %v541, %v572
      %v597 = vmul.f32 %v544, %v572
      %v598 = vmul.f32 %v547, %v572
      %v599 = vmul.f32 %v550, %v572
      %v600 = vmul.f32 %v553, %v572
      %v601 = vmul.f32 %v556, %v572
      %v602 = vmul.f32 %v559, %v572
      %v603 = vmul.f32 %v562, %v572
      %v604 = vmul.f32 %v565, %v572
      %v605 = vmul.f32 %v568, %v572
      %v606 = vld [vmem:[%s3] sm:$0x1]
      %v608 = vperm.slane %v606, 0
      %v610 = vadd.f32 %v574, %v608
      %v611 = vadd.f32 %v575, %v608
      %v612 = vadd.f32 %v576, %v608
      %v613 = vadd.f32 %v577, %v608
      %v614 = vadd.f32 %v578, %v608
      %v615 = vadd.f32 %v579, %v608
      %v616 = vadd.f32 %v580, %v608
      %v617 = vadd.f32 %v581, %v608
      %v618 = vadd.f32 %v582, %v608
      %v619 = vadd.f32 %v583, %v608
      %v620 = vadd.f32 %v584, %v608
      %v621 = vadd.f32 %v585, %v608
      %v622 = vadd.f32 %v586, %v608
      %v623 = vadd.f32 %v587, %v608
      %v624 = vadd.f32 %v588, %v608
      %v625 = vadd.f32 %v589, %v608
      %v626 = vadd.f32 %v590, %v608
      %v627 = vadd.f32 %v591, %v608
      %v628 = vadd.f32 %v592, %v608
      %v629 = vadd.f32 %v593, %v608
      %v630 = vadd.f32 %v594, %v608
      %v631 = vadd.f32 %v595, %v608
      %v632 = vadd.f32 %v596, %v608
      %v633 = vadd.f32 %v597, %v608
      %v634 = vadd.f32 %v598, %v608
      %v635 = vadd.f32 %v599, %v608
      %v636 = vadd.f32 %v600, %v608
      %v637 = vadd.f32 %v601, %v608
      %v638 = vadd.f32 %v602, %v608
      %v639 = vadd.f32 %v603, %v608
      %v640 = vadd.f32 %v604, %v608
      %v641 = vadd.f32 %v605, %v608
      %vm642 = vcmask 64512
      %643 = vst.msk [vmem:[#allocation2 + $0x7] sm:$0xff] %vm642, 0.0
      %644 = vst.msk [vmem:[#allocation2 + $0xf] sm:$0xff] %vm642, 0.0
      %vm645 = vcmask 58368
      %646 = vst.msk [vmem:[#allocation2 + $0x17] sm:$0x3] %vm645, 0.0
      %s647 = scalar_lea.vmem [#allocation2], 544
      %648 = vst.msk [vmem:[%s647 + $0x7] sm:$0xff] %vm642, 0.0
      %649 = vst.msk [vmem:[%s647 + $0xf] sm:$0xff] %vm642, 0.0
      %650 = vst.msk [vmem:[%s647 + $0x17] sm:$0x3] %vm645, 0.0
      %s651 = scalar_lea.vmem [#allocation2], 32
      %vm652 = vcmask 57344
      %653 = vst.msk [vmem:[%s651 + $0x7] sm:$0x1] %vm652, 0.0
      %654 = vst.msk [vmem:[%s651 + $0x27] sm:$0x1] %vm652, 0.0
      %655 = vst.msk [vmem:[%s651 + $0x47] sm:$0x1] %vm652, 0.0
      %656 = vst.msk [vmem:[%s651 + $0x67] sm:$0x1] %vm652, 0.0
      %657 = vst.msk [vmem:[%s651 + $0x87] sm:$0x1] %vm652, 0.0
      %658 = vst.msk [vmem:[%s651 + $0xa7] sm:$0x1] %vm652, 0.0
      %659 = vst.msk [vmem:[%s651 + $0xc7] sm:$0x1] %vm652, 0.0
      %660 = vst.msk [vmem:[%s651 + $0xe7] sm:$0x1] %vm652, 0.0
      %661 = vst.msk [vmem:[%s651 + $0x107] sm:$0x1] %vm652, 0.0
      %662 = vst.msk [vmem:[%s651 + $0x127] sm:$0x1] %vm652, 0.0
      %663 = vst.msk [vmem:[%s651 + $0x147] sm:$0x1] %vm652, 0.0
      %664 = vst.msk [vmem:[%s651 + $0x167] sm:$0x1] %vm652, 0.0
      %665 = vst.msk [vmem:[%s651 + $0x187] sm:$0x1] %vm652, 0.0
      %666 = vst.msk [vmem:[%s651 + $0x1a7] sm:$0x1] %vm652, 0.0
      %667 = vst.msk [vmem:[%s651 + $0x1c7] sm:$0x1] %vm652, 0.0
      %668 = vst.msk [vmem:[%s651 + $0x1e7] sm:$0x1] %vm652, 0.0
      %669 = vst.msk [vmem:[%s651 + $0x18] sm:$0x1] %vm652, 0.0
      %670 = vst.msk [vmem:[%s651 + $0x38] sm:$0x1] %vm652, 0.0
      %671 = vst.msk [vmem:[%s651 + $0x58] sm:$0x1] %vm652, 0.0
      %672 = vst.msk [vmem:[%s651 + $0x78] sm:$0x1] %vm652, 0.0
      %673 = vst.msk [vmem:[%s651 + $0x98] sm:$0x1] %vm652, 0.0
      %674 = vst.msk [vmem:[%s651 + $0xb8] sm:$0x1] %vm652, 0.0
      %675 = vst.msk [vmem:[%s651 + $0xd8] sm:$0x1] %vm652, 0.0
      %676 = vst.msk [vmem:[%s651 + $0xf8] sm:$0x1] %vm652, 0.0
      %677 = vst.msk [vmem:[%s651 + $0x118] sm:$0x1] %vm652, 0.0
      %678 = vst.msk [vmem:[%s651 + $0x138] sm:$0x1] %vm652, 0.0
      %679 = vst.msk [vmem:[%s651 + $0x158] sm:$0x1] %vm652, 0.0
      %680 = vst.msk [vmem:[%s651 + $0x178] sm:$0x1] %vm652, 0.0
      %681 = vst.msk [vmem:[%s651 + $0x198] sm:$0x1] %vm652, 0.0
      %682 = vst.msk [vmem:[%s651 + $0x1b8] sm:$0x1] %vm652, 0.0
      %683 = vst.msk [vmem:[%s651 + $0x1d8] sm:$0x1] %vm652, 0.0
      %684 = vst.msk [vmem:[%s651 + $0x1f8] sm:$0x1] %vm652, 0.0
      %685 = vst.msk [vmem:[%s651 + $0x8] sm:$0xff] %vm642, %v610
      %686 = vst.msk [vmem:[%s651 + $0x10] sm:$0xff] %vm642, %v611
      %687 = vst.msk [vmem:[%s651 + $0x28] sm:$0xff] %vm642, %v612
      %688 = vst.msk [vmem:[%s651 + $0x30] sm:$0xff] %vm642, %v613
      %689 = vst.msk [vmem:[%s651 + $0x48] sm:$0xff] %vm642, %v614
      %690 = vst.msk [vmem:[%s651 + $0x50] sm:$0xff] %vm642, %v615
      %691 = vst.msk [vmem:[%s651 + $0x68] sm:$0xff] %vm642, %v616
      %692 = vst.msk [vmem:[%s651 + $0x70] sm:$0xff] %vm642, %v617
      %693 = vst.msk [vmem:[%s651 + $0x88] sm:$0xff] %vm642, %v618
      %694 = vst.msk [vmem:[%s651 + $0x90] sm:$0xff] %vm642, %v619
      %695 = vst.msk [vmem:[%s651 + $0xa8] sm:$0xff] %vm642, %v620
      %696 = vst.msk [vmem:[%s651 + $0xb0] sm:$0xff] %vm642, %v621
      %697 = vst.msk [vmem:[%s651 + $0xc8] sm:$0xff] %vm642, %v622
      %698 = vst.msk [vmem:[%s651 + $0xd0] sm:$0xff] %vm642, %v623
      %699 = vst.msk [vmem:[%s651 + $0xe8] sm:$0xff] %vm642, %v624
      %700 = vst.msk [vmem:[%s651 + $0xf0] sm:$0xff] %vm642, %v625
      %701 = vst.msk [vmem:[%s651 + $0x108] sm:$0xff] %vm642, %v626
      %702 = vst.msk [vmem:[%s651 + $0x110] sm:$0xff] %vm642, %v627
      %703 = vst.msk [vmem:[%s651 + $0x128] sm:$0xff] %vm642, %v628
      %704 = vst.msk [vmem:[%s651 + $0x130] sm:$0xff] %vm642, %v629
      %705 = vst.msk [vmem:[%s651 + $0x148] sm:$0xff] %vm642, %v630
      %706 = vst.msk [vmem:[%s651 + $0x150] sm:$0xff] %vm642, %v631
      %707 = vst.msk [vmem:[%s651 + $0x168] sm:$0xff] %vm642, %v632
      %708 = vst.msk [vmem:[%s651 + $0x170] sm:$0xff] %vm642, %v633
      %709 = vst.msk [vmem:[%s651 + $0x188] sm:$0xff] %vm642, %v634
      %710 = vst.msk [vmem:[%s651 + $0x190] sm:$0xff] %vm642, %v635
      %711 = vst.msk [vmem:[%s651 + $0x1a8] sm:$0xff] %vm642, %v636
      %712 = vst.msk [vmem:[%s651 + $0x1b0] sm:$0xff] %vm642, %v637
      %713 = vst.msk [vmem:[%s651 + $0x1c8] sm:$0xff] %vm642, %v638
      %714 = vst.msk [vmem:[%s651 + $0x1d0] sm:$0xff] %vm642, %v639
      %715 = vst.msk [vmem:[%s651 + $0x1e8] sm:$0xff] %vm642, %v640
      %716 = vst.msk [vmem:[%s651 + $0x1f0] sm:$0xff] %vm642, %v641
      %v717 = vld [vmem:[#allocation2 + $0x7] sm:$0xff]
      %v718 = vld [vmem:[#allocation2 + $0xf] sm:$0xff]
      %v719 = vld [vmem:[#allocation2 + $0x27] sm:$0xff]
      %v720 = vld [vmem:[#allocation2 + $0x2f] sm:$0xff]
      %v721 = vld [vmem:[#allocation2 + $0x47] sm:$0xff]
      %v722 = vld [vmem:[#allocation2 + $0x4f] sm:$0xff]
      %v723 = vld [vmem:[#allocation2 + $0x67] sm:$0xff]
      %v724 = vld [vmem:[#allocation2 + $0x6f] sm:$0xff]
      %v725 = vld [vmem:[#allocation2 + $0x87] sm:$0xff]
      %v726 = vld [vmem:[#allocation2 + $0x8f] sm:$0xff]
      %v727 = vld [vmem:[#allocation2 + $0xa7] sm:$0xff]
      %v728 = vld [vmem:[#allocation2 + $0xaf] sm:$0xff]
      %v729 = vld [vmem:[#allocation2 + $0xc7] sm:$0xff]
      %v730 = vld [vmem:[#allocation2 + $0xcf] sm:$0xff]
      %v731 = vld [vmem:[#allocation2 + $0xe7] sm:$0xff]
      %v732 = vld [vmem:[#allocation2 + $0xef] sm:$0xff]
      %v733 = vld [vmem:[#allocation2 + $0x107] sm:$0xff]
      %v734 = vld [vmem:[#allocation2 + $0x10f] sm:$0xff]
      %v735 = vld [vmem:[#allocation2 + $0x127] sm:$0xff]
      %v736 = vld [vmem:[#allocation2 + $0x12f] sm:$0xff]
      %v737 = vld [vmem:[#allocation2 + $0x147] sm:$0xff]
      %v738 = vld [vmem:[#allocation2 + $0x14f] sm:$0xff]
      %v739 = vld [vmem:[#allocation2 + $0x167] sm:$0xff]
      %v740 = vld [vmem:[#allocation2 + $0x16f] sm:$0xff]
      %v741 = vld [vmem:[#allocation2 + $0x187] sm:$0xff]
      %v742 = vld [vmem:[#allocation2 + $0x18f] sm:$0xff]
      %v743 = vld [vmem:[#allocation2 + $0x1a7] sm:$0xff]
      %v744 = vld [vmem:[#allocation2 + $0x1af] sm:$0xff]
      %v745 = vld [vmem:[#allocation2 + $0x1c7] sm:$0xff]
      %v746 = vld [vmem:[#allocation2 + $0x1cf] sm:$0xff]
      %v747 = vld [vmem:[#allocation2 + $0x1e7] sm:$0xff]
      %v748 = vld [vmem:[#allocation2 + $0x1ef] sm:$0xff]
      %v749 = vld [vmem:[%s4] sm:$0x1]
      %v751 = vperm.slane %v749, 0
      %v753 = vmul.f32 %v717, %v751
      %v754 = vmul.f32 %v718, %v751
      %v755 = vmul.f32 %v719, %v751
      %v756 = vmul.f32 %v720, %v751
      %v757 = vmul.f32 %v721, %v751
      %v758 = vmul.f32 %v722, %v751
      %v759 = vmul.f32 %v723, %v751
      %v760 = vmul.f32 %v724, %v751
      %v761 = vmul.f32 %v725, %v751
      %v762 = vmul.f32 %v726, %v751
      %v763 = vmul.f32 %v727, %v751
      %v764 = vmul.f32 %v728, %v751
      %v765 = vmul.f32 %v729, %v751
      %v766 = vmul.f32 %v730, %v751
      %v767 = vmul.f32 %v731, %v751
      %v768 = vmul.f32 %v732, %v751
      %v769 = vmul.f32 %v733, %v751
      %v770 = vmul.f32 %v734, %v751
      %v771 = vmul.f32 %v735, %v751
      %v772 = vmul.f32 %v736, %v751
      %v773 = vmul.f32 %v737, %v751
      %v774 = vmul.f32 %v738, %v751
      %v775 = vmul.f32 %v739, %v751
      %v776 = vmul.f32 %v740, %v751
      %v777 = vmul.f32 %v741, %v751
      %v778 = vmul.f32 %v742, %v751
      %v779 = vmul.f32 %v743, %v751
      %v780 = vmul.f32 %v744, %v751
      %v781 = vmul.f32 %v745, %v751
      %v782 = vmul.f32 %v746, %v751
      %v783 = vmul.f32 %v747, %v751
      %v784 = vmul.f32 %v748, %v751
      %v785 = vld [vmem:[#allocation2 + $0x8] sm:$0xff]
      %v786 = vld [vmem:[#allocation2 + $0x10] sm:$0xff]
      %v787 = vld [vmem:[#allocation2 + $0x28] sm:$0xff]
      %v788 = vld [vmem:[#allocation2 + $0x30] sm:$0xff]
      %v789 = vld [vmem:[#allocation2 + $0x48] sm:$0xff]
      %v790 = vld [vmem:[#allocation2 + $0x50] sm:$0xff]
      %v791 = vld [vmem:[#allocation2 + $0x68] sm:$0xff]
      %v792 = vld [vmem:[#allocation2 + $0x70] sm:$0xff]
      %v793 = vld [vmem:[#allocation2 + $0x88] sm:$0xff]
      %v794 = vld [vmem:[#allocation2 + $0x90] sm:$0xff]
      %v795 = vld [vmem:[#allocation2 + $0xa8] sm:$0xff]
      %v796 = vld [vmem:[#allocation2 + $0xb0] sm:$0xff]
      %v797 = vld [vmem:[#allocation2 + $0xc8] sm:$0xff]
      %v798 = vld [vmem:[#allocation2 + $0xd0] sm:$0xff]
      %v799 = vld [vmem:[#allocation2 + $0xe8] sm:$0xff]
      %v800 = vld [vmem:[#allocation2 + $0xf0] sm:$0xff]
      %v801 = vld [vmem:[#allocation2 + $0x108] sm:$0xff]
      %v802 = vld [vmem:[#allocation2 + $0x110] sm:$0xff]
      %v803 = vld [vmem:[#allocation2 + $0x128] sm:$0xff]
      %v804 = vld [vmem:[#allocation2 + $0x130] sm:$0xff]
      %v805 = vld [vmem:[#allocation2 + $0x148] sm:$0xff]
      %v806 = vld [vmem:[#allocation2 + $0x150] sm:$0xff]
      %v807 = vld [vmem:[#allocation2 + $0x168] sm:$0xff]
      %v808 = vld [vmem:[#allocation2 + $0x170] sm:$0xff]
      %v809 = vld [vmem:[#allocation2 + $0x188] sm:$0xff]
      %v810 = vld [vmem:[#allocation2 + $0x190] sm:$0xff]
      %v811 = vld [vmem:[#allocation2 + $0x1a8] sm:$0xff]
      %v812 = vld [vmem:[#allocation2 + $0x1b0] sm:$0xff]
      %v813 = vld [vmem:[#allocation2 + $0x1c8] sm:$0xff]
      %v814 = vld [vmem:[#allocation2 + $0x1d0] sm:$0xff]
      %v815 = vld [vmem:[#allocation2 + $0x1e8] sm:$0xff]
      %v816 = vld [vmem:[#allocation2 + $0x1f0] sm:$0xff]
      %s817 = scalar_lea.vmem %s4, 1
      %v818 = vld [vmem:[%s817] sm:$0x1]
      %v820 = vperm.slane %v818, 0
      %v822 = vmul.f32 %v785, %v820
      %v823 = vmul.f32 %v786, %v820
      %v824 = vmul.f32 %v787, %v820
      %v825 = vmul.f32 %v788, %v820
      %v826 = vmul.f32 %v789, %v820
      %v827 = vmul.f32 %v790, %v820
      %v828 = vmul.f32 %v791, %v820
      %v829 = vmul.f32 %v792, %v820
      %v830 = vmul.f32 %v793, %v820
      %v831 = vmul.f32 %v794, %v820
      %v832 = vmul.f32 %v795, %v820
      %v833 = vmul.f32 %v796, %v820
      %v834 = vmul.f32 %v797, %v820
      %v835 = vmul.f32 %v798, %v820
      %v836 = vmul.f32 %v799, %v820
      %v837 = vmul.f32 %v800, %v820
      %v838 = vmul.f32 %v801, %v820
      %v839 = vmul.f32 %v802, %v820
      %v840 = vmul.f32 %v803, %v820
      %v841 = vmul.f32 %v804, %v820
      %v842 = vmul.f32 %v805, %v820
      %v843 = vmul.f32 %v806, %v820
      %v844 = vmul.f32 %v807, %v820
      %v845 = vmul.f32 %v808, %v820
      %v846 = vmul.f32 %v809, %v820
      %v847 = vmul.f32 %v810, %v820
      %v848 = vmul.f32 %v811, %v820
      %v849 = vmul.f32 %v812, %v820
      %v850 = vmul.f32 %v813, %v820
      %v851 = vmul.f32 %v814, %v820
      %v852 = vmul.f32 %v815, %v820
      %v853 = vmul.f32 %v816, %v820
      %v854 = vadd.f32 %v753, %v822
      %v855 = vadd.f32 %v754, %v823
      %v856 = vadd.f32 %v755, %v824
      %v857 = vadd.f32 %v756, %v825
      %v858 = vadd.f32 %v757, %v826
      %v859 = vadd.f32 %v758, %v827
      %v860 = vadd.f32 %v759, %v828
      %v861 = vadd.f32 %v760, %v829
      %v862 = vadd.f32 %v761, %v830
      %v863 = vadd.f32 %v762, %v831
      %v864 = vadd.f32 %v763, %v832
      %v865 = vadd.f32 %v764, %v833
      %v866 = vadd.f32 %v765, %v834
      %v867 = vadd.f32 %v766, %v835
      %v868 = vadd.f32 %v767, %v836
      %v869 = vadd.f32 %v768, %v837
      %v870 = vadd.f32 %v769, %v838
      %v871 = vadd.f32 %v770, %v839
      %v872 = vadd.f32 %v771, %v840
      %v873 = vadd.f32 %v772, %v841
      %v874 = vadd.f32 %v773, %v842
      %v875 = vadd.f32 %v774, %v843
      %v876 = vadd.f32 %v775, %v844
      %v877 = vadd.f32 %v776, %v845
      %v878 = vadd.f32 %v777, %v846
      %v879 = vadd.f32 %v778, %v847
      %v880 = vadd.f32 %v779, %v848
      %v881 = vadd.f32 %v780, %v849
      %v882 = vadd.f32 %v781, %v850
      %v883 = vadd.f32 %v782, %v851
      %v884 = vadd.f32 %v783, %v852
      %v885 = vadd.f32 %v784, %v853
      %v886 = vld [vmem:[#allocation2 + $0x9] sm:$0xff]
      %v887 = vld [vmem:[#allocation2 + $0x11] sm:$0xff]
      %v888 = vld [vmem:[#allocation2 + $0x29] sm:$0xff]
      %v889 = vld [vmem:[#allocation2 + $0x31] sm:$0xff]
      %v890 = vld [vmem:[#allocation2 + $0x49] sm:$0xff]
      %v891 = vld [vmem:[#allocation2 + $0x51] sm:$0xff]
      %v892 = vld [vmem:[#allocation2 + $0x69] sm:$0xff]
      %v893 = vld [vmem:[#allocation2 + $0x71] sm:$0xff]
      %v894 = vld [vmem:[#allocation2 + $0x89] sm:$0xff]
      %v895 = vld [vmem:[#allocation2 + $0x91] sm:$0xff]
      %v896 = vld [vmem:[#allocation2 + $0xa9] sm:$0xff]
      %v897 = vld [vmem:[#allocation2 + $0xb1] sm:$0xff]
      %v898 = vld [vmem:[#allocation2 + $0xc9] sm:$0xff]
      %v899 = vld [vmem:[#allocation2 + $0xd1] sm:$0xff]
      %v900 = vld [vmem:[#allocation2 + $0xe9] sm:$0xff]
      %v901 = vld [vmem:[#allocation2 + $0xf1] sm:$0xff]
      %v902 = vld [vmem:[#allocation2 + $0x109] sm:$0xff]
      %v903 = vld [vmem:[#allocation2 + $0x111] sm:$0xff]
      %v904 = vld [vmem:[#allocation2 + $0x129] sm:$0xff]
      %v905 = vld [vmem:[#allocation2 + $0x131] sm:$0xff]
      %v906 = vld [vmem:[#allocation2 + $0x149] sm:$0xff]
      %v907 = vld [vmem:[#allocation2 + $0x151] sm:$0xff]
      %v908 = vld [vmem:[#allocation2 + $0x169] sm:$0xff]
      %v909 = vld [vmem:[#allocation2 + $0x171] sm:$0xff]
      %v910 = vld [vmem:[#allocation2 + $0x189] sm:$0xff]
      %v911 = vld [vmem:[#allocation2 + $0x191] sm:$0xff]
      %v912 = vld [vmem:[#allocation2 + $0x1a9] sm:$0xff]
      %v913 = vld [vmem:[#allocation2 + $0x1b1] sm:$0xff]
      %v914 = vld [vmem:[#allocation2 + $0x1c9] sm:$0xff]
      %v915 = vld [vmem:[#allocation2 + $0x1d1] sm:$0xff]
      %v916 = vld [vmem:[#allocation2 + $0x1e9] sm:$0xff]
      %v917 = vld [vmem:[#allocation2 + $0x1f1] sm:$0xff]
      %s918 = scalar_lea.vmem %s4, 2
      %v919 = vld [vmem:[%s918] sm:$0x1]
      %v921 = vperm.slane %v919, 0
      %v923 = vmul.f32 %v886, %v921
      %v924 = vmul.f32 %v887, %v921
      %v925 = vmul.f32 %v888, %v921
      %v926 = vmul.f32 %v889, %v921
      %v927 = vmul.f32 %v890, %v921
      %v928 = vmul.f32 %v891, %v921
      %v929 = vmul.f32 %v892, %v921
      %v930 = vmul.f32 %v893, %v921
      %v931 = vmul.f32 %v894, %v921
      %v932 = vmul.f32 %v895, %v921
      %v933 = vmul.f32 %v896, %v921
      %v934 = vmul.f32 %v897, %v921
      %v935 = vmul.f32 %v898, %v921
      %v936 = vmul.f32 %v899, %v921
      %v937 = vmul.f32 %v900, %v921
      %v938 = vmul.f32 %v901, %v921
      %v939 = vmul.f32 %v902, %v921
      %v940 = vmul.f32 %v903, %v921
      %v941 = vmul.f32 %v904, %v921
      %v942 = vmul.f32 %v905, %v921
      %v943 = vmul.f32 %v906, %v921
      %v944 = vmul.f32 %v907, %v921
      %v945 = vmul.f32 %v908, %v921
      %v946 = vmul.f32 %v909, %v921
      %v947 = vmul.f32 %v910, %v921
      %v948 = vmul.f32 %v911, %v921
      %v949 = vmul.f32 %v912, %v921
      %v950 = vmul.f32 %v913, %v921
      %v951 = vmul.f32 %v914, %v921
      %v952 = vmul.f32 %v915, %v921
      %v953 = vmul.f32 %v916, %v921
      %v954 = vmul.f32 %v917, %v921
      %v955 = vadd.f32 %v854, %v923
      %v956 = vadd.f32 %v855, %v924
      %v957 = vadd.f32 %v856, %v925
      %v958 = vadd.f32 %v857, %v926
      %v959 = vadd.f32 %v858, %v927
      %v960 = vadd.f32 %v859, %v928
      %v961 = vadd.f32 %v860, %v929
      %v962 = vadd.f32 %v861, %v930
      %v963 = vadd.f32 %v862, %v931
      %v964 = vadd.f32 %v863, %v932
      %v965 = vadd.f32 %v864, %v933
      %v966 = vadd.f32 %v865, %v934
      %v967 = vadd.f32 %v866, %v935
      %v968 = vadd.f32 %v867, %v936
      %v969 = vadd.f32 %v868, %v937
      %v970 = vadd.f32 %v869, %v938
      %v971 = vadd.f32 %v870, %v939
      %v972 = vadd.f32 %v871, %v940
      %v973 = vadd.f32 %v872, %v941
      %v974 = vadd.f32 %v873, %v942
      %v975 = vadd.f32 %v874, %v943
      %v976 = vadd.f32 %v875, %v944
      %v977 = vadd.f32 %v876, %v945
      %v978 = vadd.f32 %v877, %v946
      %v979 = vadd.f32 %v878, %v947
      %v980 = vadd.f32 %v879, %v948
      %v981 = vadd.f32 %v880, %v949
      %v982 = vadd.f32 %v881, %v950
      %v983 = vadd.f32 %v882, %v951
      %v984 = vadd.f32 %v883, %v952
      %v985 = vadd.f32 %v884, %v953
      %v986 = vadd.f32 %v885, %v954
      %v987 = vld [vmem:[%s651 + $0x7] sm:$0xff]
      %v988 = vld [vmem:[%s651 + $0xf] sm:$0xff]
      %v989 = vld [vmem:[%s651 + $0x27] sm:$0xff]
      %v990 = vld [vmem:[%s651 + $0x2f] sm:$0xff]
      %v991 = vld [vmem:[%s651 + $0x47] sm:$0xff]
      %v992 = vld [vmem:[%s651 + $0x4f] sm:$0xff]
      %v993 = vld [vmem:[%s651 + $0x67] sm:$0xff]
      %v994 = vld [vmem:[%s651 + $0x6f] sm:$0xff]
      %v995 = vld [vmem:[%s651 + $0x87] sm:$0xff]
      %v996 = vld [vmem:[%s651 + $0x8f] sm:$0xff]
      %v997 = vld [vmem:[%s651 + $0xa7] sm:$0xff]
      %v998 = vld [vmem:[%s651 + $0xaf] sm:$0xff]
      %v999 = vld [vmem:[%s651 + $0xc7] sm:$0xff]
      %v1000 = vld [vmem:[%s651 + $0xcf] sm:$0xff]
      %v1001 = vld [vmem:[%s651 + $0xe7] sm:$0xff]
      %v1002 = vld [vmem:[%s651 + $0xef] sm:$0xff]
      %v1003 = vld [vmem:[%s651 + $0x107] sm:$0xff]
      %v1004 = vld [vmem:[%s651 + $0x10f] sm:$0xff]
      %v1005 = vld [vmem:[%s651 + $0x127] sm:$0xff]
      %v1006 = vld [vmem:[%s651 + $0x12f] sm:$0xff]
      %v1007 = vld [vmem:[%s651 + $0x147] sm:$0xff]
      %v1008 = vld [vmem:[%s651 + $0x14f] sm:$0xff]
      %v1009 = vld [vmem:[%s651 + $0x167] sm:$0xff]
      %v1010 = vld [vmem:[%s651 + $0x16f] sm:$0xff]
      %v1011 = vld [vmem:[%s651 + $0x187] sm:$0xff]
      %v1012 = vld [vmem:[%s651 + $0x18f] sm:$0xff]
      %v1013 = vld [vmem:[%s651 + $0x1a7] sm:$0xff]
      %v1014 = vld [vmem:[%s651 + $0x1af] sm:$0xff]
      %v1015 = vld [vmem:[%s651 + $0x1c7] sm:$0xff]
      %v1016 = vld [vmem:[%s651 + $0x1cf] sm:$0xff]
      %v1017 = vld [vmem:[%s651 + $0x1e7] sm:$0xff]
      %v1018 = vld [vmem:[%s651 + $0x1ef] sm:$0xff]
      %s1019 = scalar_lea.vmem %s4, 3
      %v1020 = vld [vmem:[%s1019] sm:$0x1]
      %v1022 = vperm.slane %v1020, 0
      %v1024 = vmul.f32 %v987, %v1022
      %v1025 = vmul.f32 %v988, %v1022
      %v1026 = vmul.f32 %v989, %v1022
      %v1027 = vmul.f32 %v990, %v1022
      %v1028 = vmul.f32 %v991, %v1022
      %v1029 = vmul.f32 %v992, %v1022
      %v1030 = vmul.f32 %v993, %v1022
      %v1031 = vmul.f32 %v994, %v1022
      %v1032 = vmul.f32 %v995, %v1022
      %v1033 = vmul.f32 %v996, %v1022
      %v1034 = vmul.f32 %v997, %v1022
      %v1035 = vmul.f32 %v998, %v1022
      %v1036 = vmul.f32 %v999, %v1022
      %v1037 = vmul.f32 %v1000, %v1022
      %v1038 = vmul.f32 %v1001, %v1022
      %v1039 = vmul.f32 %v1002, %v1022
      %v1040 = vmul.f32 %v1003, %v1022
      %v1041 = vmul.f32 %v1004, %v1022
      %v1042 = vmul.f32 %v1005, %v1022
      %v1043 = vmul.f32 %v1006, %v1022
      %v1044 = vmul.f32 %v1007, %v1022
      %v1045 = vmul.f32 %v1008, %v1022
      %v1046 = vmul.f32 %v1009, %v1022
      %v1047 = vmul.f32 %v1010, %v1022
      %v1048 = vmul.f32 %v1011, %v1022
      %v1049 = vmul.f32 %v1012, %v1022
      %v1050 = vmul.f32 %v1013, %v1022
      %v1051 = vmul.f32 %v1014, %v1022
      %v1052 = vmul.f32 %v1015, %v1022
      %v1053 = vmul.f32 %v1016, %v1022
      %v1054 = vmul.f32 %v1017, %v1022
      %v1055 = vmul.f32 %v1018, %v1022
      %v1056 = vadd.f32 %v955, %v1024
      %v1057 = vadd.f32 %v956, %v1025
      %v1058 = vadd.f32 %v957, %v1026
      %v1059 = vadd.f32 %v958, %v1027
      %v1060 = vadd.f32 %v959, %v1028
      %v1061 = vadd.f32 %v960, %v1029
      %v1062 = vadd.f32 %v961, %v1030
      %v1063 = vadd.f32 %v962, %v1031
      %v1064 = vadd.f32 %v963, %v1032
      %v1065 = vadd.f32 %v964, %v1033
      %v1066 = vadd.f32 %v965, %v1034
      %v1067 = vadd.f32 %v966, %v1035
      %v1068 = vadd.f32 %v967, %v1036
      %v1069 = vadd.f32 %v968, %v1037
      %v1070 = vadd.f32 %v969, %v1038
      %v1071 = vadd.f32 %v970, %v1039
      %v1072 = vadd.f32 %v971, %v1040
      %v1073 = vadd.f32 %v972, %v1041
      %v1074 = vadd.f32 %v973, %v1042
      %v1075 = vadd.f32 %v974, %v1043
      %v1076 = vadd.f32 %v975, %v1044
      %v1077 = vadd.f32 %v976, %v1045
      %v1078 = vadd.f32 %v977, %v1046
      %v1079 = vadd.f32 %v978, %v1047
      %v1080 = vadd.f32 %v979, %v1048
      %v1081 = vadd.f32 %v980, %v1049
      %v1082 = vadd.f32 %v981, %v1050
      %v1083 = vadd.f32 %v982, %v1051
      %v1084 = vadd.f32 %v983, %v1052
      %v1085 = vadd.f32 %v984, %v1053
      %v1086 = vadd.f32 %v985, %v1054
      %v1087 = vadd.f32 %v986, %v1055
      %v1088 = vld [vmem:[%s651 + $0x8] sm:$0xff]
      %v1089 = vld [vmem:[%s651 + $0x10] sm:$0xff]
      %v1090 = vld [vmem:[%s651 + $0x28] sm:$0xff]
      %v1091 = vld [vmem:[%s651 + $0x30] sm:$0xff]
      %v1092 = vld [vmem:[%s651 + $0x48] sm:$0xff]
      %v1093 = vld [vmem:[%s651 + $0x50] sm:$0xff]
      %v1094 = vld [vmem:[%s651 + $0x68] sm:$0xff]
      %v1095 = vld [vmem:[%s651 + $0x70] sm:$0xff]
      %v1096 = vld [vmem:[%s651 + $0x88] sm:$0xff]
      %v1097 = vld [vmem:[%s651 + $0x90] sm:$0xff]
      %v1098 = vld [vmem:[%s651 + $0xa8] sm:$0xff]
      %v1099 = vld [vmem:[%s651 + $0xb0] sm:$0xff]
      %v1100 = vld [vmem:[%s651 + $0xc8] sm:$0xff]
      %v1101 = vld [vmem:[%s651 + $0xd0] sm:$0xff]
      %v1102 = vld [vmem:[%s651 + $0xe8] sm:$0xff]
      %v1103 = vld [vmem:[%s651 + $0xf0] sm:$0xff]
      %v1104 = vld [vmem:[%s651 + $0x108] sm:$0xff]
      %v1105 = vld [vmem:[%s651 + $0x110] sm:$0xff]
      %v1106 = vld [vmem:[%s651 + $0x128] sm:$0xff]
      %v1107 = vld [vmem:[%s651 + $0x130] sm:$0xff]
      %v1108 = vld [vmem:[%s651 + $0x148] sm:$0xff]
      %v1109 = vld [vmem:[%s651 + $0x150] sm:$0xff]
      %v1110 = vld [vmem:[%s651 + $0x168] sm:$0xff]
      %v1111 = vld [vmem:[%s651 + $0x170] sm:$0xff]
      %v1112 = vld [vmem:[%s651 + $0x188] sm:$0xff]
      %v1113 = vld [vmem:[%s651 + $0x190] sm:$0xff]
      %v1114 = vld [vmem:[%s651 + $0x1a8] sm:$0xff]
      %v1115 = vld [vmem:[%s651 + $0x1b0] sm:$0xff]
      %v1116 = vld [vmem:[%s651 + $0x1c8] sm:$0xff]
      %v1117 = vld [vmem:[%s651 + $0x1d0] sm:$0xff]
      %v1118 = vld [vmem:[%s651 + $0x1e8] sm:$0xff]
      %v1119 = vld [vmem:[%s651 + $0x1f0] sm:$0xff]
      %s1120 = scalar_lea.vmem %s4, 4
      %v1121 = vld [vmem:[%s1120] sm:$0x1]
      %v1123 = vperm.slane %v1121, 0
      %v1125 = vmul.f32 %v1088, %v1123
      %v1126 = vmul.f32 %v1089, %v1123
      %v1127 = vmul.f32 %v1090, %v1123
      %v1128 = vmul.f32 %v1091, %v1123
      %v1129 = vmul.f32 %v1092, %v1123
      %v1130 = vmul.f32 %v1093, %v1123
      %v1131 = vmul.f32 %v1094, %v1123
      %v1132 = vmul.f32 %v1095, %v1123
      %v1133 = vmul.f32 %v1096, %v1123
      %v1134 = vmul.f32 %v1097, %v1123
      %v1135 = vmul.f32 %v1098, %v1123
      %v1136 = vmul.f32 %v1099, %v1123
      %v1137 = vmul.f32 %v1100, %v1123
      %v1138 = vmul.f32 %v1101, %v1123
      %v1139 = vmul.f32 %v1102, %v1123
      %v1140 = vmul.f32 %v1103, %v1123
      %v1141 = vmul.f32 %v1104, %v1123
      %v1142 = vmul.f32 %v1105, %v1123
      %v1143 = vmul.f32 %v1106, %v1123
      %v1144 = vmul.f32 %v1107, %v1123
      %v1145 = vmul.f32 %v1108, %v1123
      %v1146 = vmul.f32 %v1109, %v1123
      %v1147 = vmul.f32 %v1110, %v1123
      %v1148 = vmul.f32 %v1111, %v1123
      %v1149 = vmul.f32 %v1112, %v1123
      %v1150 = vmul.f32 %v1113, %v1123
      %v1151 = vmul.f32 %v1114, %v1123
      %v1152 = vmul.f32 %v1115, %v1123
      %v1153 = vmul.f32 %v1116, %v1123
      %v1154 = vmul.f32 %v1117, %v1123
      %v1155 = vmul.f32 %v1118, %v1123
      %v1156 = vmul.f32 %v1119, %v1123
      %v1157 = vadd.f32 %v1056, %v1125
      %v1158 = vadd.f32 %v1057, %v1126
      %v1159 = vadd.f32 %v1058, %v1127
      %v1160 = vadd.f32 %v1059, %v1128
      %v1161 = vadd.f32 %v1060, %v1129
      %v1162 = vadd.f32 %v1061, %v1130
      %v1163 = vadd.f32 %v1062, %v1131
      %v1164 = vadd.f32 %v1063, %v1132
      %v1165 = vadd.f32 %v1064, %v1133
      %v1166 = vadd.f32 %v1065, %v1134
      %v1167 = vadd.f32 %v1066, %v1135
      %v1168 = vadd.f32 %v1067, %v1136
      %v1169 = vadd.f32 %v1068, %v1137
      %v1170 = vadd.f32 %v1069, %v1138
      %v1171 = vadd.f32 %v1070, %v1139
      %v1172 = vadd.f32 %v1071, %v1140
      %v1173 = vadd.f32 %v1072, %v1141
      %v1174 = vadd.f32 %v1073, %v1142
      %v1175 = vadd.f32 %v1074, %v1143
      %v1176 = vadd.f32 %v1075, %v1144
      %v1177 = vadd.f32 %v1076, %v1145
      %v1178 = vadd.f32 %v1077, %v1146
      %v1179 = vadd.f32 %v1078, %v1147
      %v1180 = vadd.f32 %v1079, %v1148
      %v1181 = vadd.f32 %v1080, %v1149
      %v1182 = vadd.f32 %v1081, %v1150
      %v1183 = vadd.f32 %v1082, %v1151
      %v1184 = vadd.f32 %v1083, %v1152
      %v1185 = vadd.f32 %v1084, %v1153
      %v1186 = vadd.f32 %v1085, %v1154
      %v1187 = vadd.f32 %v1086, %v1155
      %v1188 = vadd.f32 %v1087, %v1156
      %v1189 = vld [vmem:[%s651 + $0x9] sm:$0xff]
      %v1190 = vld [vmem:[%s651 + $0x11] sm:$0xff]
      %v1191 = vld [vmem:[%s651 + $0x29] sm:$0xff]
      %v1192 = vld [vmem:[%s651 + $0x31] sm:$0xff]
      %v1193 = vld [vmem:[%s651 + $0x49] sm:$0xff]
      %v1194 = vld [vmem:[%s651 + $0x51] sm:$0xff]
      %v1195 = vld [vmem:[%s651 + $0x69] sm:$0xff]
      %v1196 = vld [vmem:[%s651 + $0x71] sm:$0xff]
      %v1197 = vld [vmem:[%s651 + $0x89] sm:$0xff]
      %v1198 = vld [vmem:[%s651 + $0x91] sm:$0xff]
      %v1199 = vld [vmem:[%s651 + $0xa9] sm:$0xff]
      %v1200 = vld [vmem:[%s651 + $0xb1] sm:$0xff]
      %v1201 = vld [vmem:[%s651 + $0xc9] sm:$0xff]
      %v1202 = vld [vmem:[%s651 + $0xd1] sm:$0xff]
      %v1203 = vld [vmem:[%s651 + $0xe9] sm:$0xff]
      %v1204 = vld [vmem:[%s651 + $0xf1] sm:$0xff]
      %v1205 = vld [vmem:[%s651 + $0x109] sm:$0xff]
      %v1206 = vld [vmem:[%s651 + $0x111] sm:$0xff]
      %v1207 = vld [vmem:[%s651 + $0x129] sm:$0xff]
      %v1208 = vld [vmem:[%s651 + $0x131] sm:$0xff]
      %v1209 = vld [vmem:[%s651 + $0x149] sm:$0xff]
      %v1210 = vld [vmem:[%s651 + $0x151] sm:$0xff]
      %v1211 = vld [vmem:[%s651 + $0x169] sm:$0xff]
      %v1212 = vld [vmem:[%s651 + $0x171] sm:$0xff]
      %v1213 = vld [vmem:[%s651 + $0x189] sm:$0xff]
      %v1214 = vld [vmem:[%s651 + $0x191] sm:$0xff]
      %v1215 = vld [vmem:[%s651 + $0x1a9] sm:$0xff]
      %v1216 = vld [vmem:[%s651 + $0x1b1] sm:$0xff]
      %v1217 = vld [vmem:[%s651 + $0x1c9] sm:$0xff]
      %v1218 = vld [vmem:[%s651 + $0x1d1] sm:$0xff]
      %v1219 = vld [vmem:[%s651 + $0x1e9] sm:$0xff]
      %v1220 = vld [vmem:[%s651 + $0x1f1] sm:$0xff]
      %s1221 = scalar_lea.vmem %s4, 5
      %v1222 = vld [vmem:[%s1221] sm:$0x1]
      %v1224 = vperm.slane %v1222, 0
      %v1226 = vmul.f32 %v1189, %v1224
      %v1227 = vmul.f32 %v1190, %v1224
      %v1228 = vmul.f32 %v1191, %v1224
      %v1229 = vmul.f32 %v1192, %v1224
      %v1230 = vmul.f32 %v1193, %v1224
      %v1231 = vmul.f32 %v1194, %v1224
      %v1232 = vmul.f32 %v1195, %v1224
      %v1233 = vmul.f32 %v1196, %v1224
      %v1234 = vmul.f32 %v1197, %v1224
      %v1235 = vmul.f32 %v1198, %v1224
      %v1236 = vmul.f32 %v1199, %v1224
      %v1237 = vmul.f32 %v1200, %v1224
      %v1238 = vmul.f32 %v1201, %v1224
      %v1239 = vmul.f32 %v1202, %v1224
      %v1240 = vmul.f32 %v1203, %v1224
      %v1241 = vmul.f32 %v1204, %v1224
      %v1242 = vmul.f32 %v1205, %v1224
      %v1243 = vmul.f32 %v1206, %v1224
      %v1244 = vmul.f32 %v1207, %v1224
      %v1245 = vmul.f32 %v1208, %v1224
      %v1246 = vmul.f32 %v1209, %v1224
      %v1247 = vmul.f32 %v1210, %v1224
      %v1248 = vmul.f32 %v1211, %v1224
      %v1249 = vmul.f32 %v1212, %v1224
      %v1250 = vmul.f32 %v1213, %v1224
      %v1251 = vmul.f32 %v1214, %v1224
      %v1252 = vmul.f32 %v1215, %v1224
      %v1253 = vmul.f32 %v1216, %v1224
      %v1254 = vmul.f32 %v1217, %v1224
      %v1255 = vmul.f32 %v1218, %v1224
      %v1256 = vmul.f32 %v1219, %v1224
      %v1257 = vmul.f32 %v1220, %v1224
      %v1258 = vadd.f32 %v1157, %v1226
      %v1259 = vadd.f32 %v1158, %v1227
      %v1260 = vadd.f32 %v1159, %v1228
      %v1261 = vadd.f32 %v1160, %v1229
      %v1262 = vadd.f32 %v1161, %v1230
      %v1263 = vadd.f32 %v1162, %v1231
      %v1264 = vadd.f32 %v1163, %v1232
      %v1265 = vadd.f32 %v1164, %v1233
      %v1266 = vadd.f32 %v1165, %v1234
      %v1267 = vadd.f32 %v1166, %v1235
      %v1268 = vadd.f32 %v1167, %v1236
      %v1269 = vadd.f32 %v1168, %v1237
      %v1270 = vadd.f32 %v1169, %v1238
      %v1271 = vadd.f32 %v1170, %v1239
      %v1272 = vadd.f32 %v1171, %v1240
      %v1273 = vadd.f32 %v1172, %v1241
      %v1274 = vadd.f32 %v1173, %v1242
      %v1275 = vadd.f32 %v1174, %v1243
      %v1276 = vadd.f32 %v1175, %v1244
      %v1277 = vadd.f32 %v1176, %v1245
      %v1278 = vadd.f32 %v1177, %v1246
      %v1279 = vadd.f32 %v1178, %v1247
      %v1280 = vadd.f32 %v1179, %v1248
      %v1281 = vadd.f32 %v1180, %v1249
      %v1282 = vadd.f32 %v1181, %v1250
      %v1283 = vadd.f32 %v1182, %v1251
      %v1284 = vadd.f32 %v1183, %v1252
      %v1285 = vadd.f32 %v1184, %v1253
      %v1286 = vadd.f32 %v1185, %v1254
      %v1287 = vadd.f32 %v1186, %v1255
      %v1288 = vadd.f32 %v1187, %v1256
      %v1289 = vadd.f32 %v1188, %v1257
      %s1290 = scalar_lea.vmem [#allocation2], 64
      %v1291 = vld [vmem:[%s1290 + $0x7] sm:$0xff]
      %v1292 = vld [vmem:[%s1290 + $0xf] sm:$0xff]
      %v1293 = vld [vmem:[%s1290 + $0x27] sm:$0xff]
      %v1294 = vld [vmem:[%s1290 + $0x2f] sm:$0xff]
      %v1295 = vld [vmem:[%s1290 + $0x47] sm:$0xff]
      %v1296 = vld [vmem:[%s1290 + $0x4f] sm:$0xff]
      %v1297 = vld [vmem:[%s1290 + $0x67] sm:$0xff]
      %v1298 = vld [vmem:[%s1290 + $0x6f] sm:$0xff]
      %v1299 = vld [vmem:[%s1290 + $0x87] sm:$0xff]
      %v1300 = vld [vmem:[%s1290 + $0x8f] sm:$0xff]
      %v1301 = vld [vmem:[%s1290 + $0xa7] sm:$0xff]
      %v1302 = vld [vmem:[%s1290 + $0xaf] sm:$0xff]
      %v1303 = vld [vmem:[%s1290 + $0xc7] sm:$0xff]
      %v1304 = vld [vmem:[%s1290 + $0xcf] sm:$0xff]
      %v1305 = vld [vmem:[%s1290 + $0xe7] sm:$0xff]
      %v1306 = vld [vmem:[%s1290 + $0xef] sm:$0xff]
      %v1307 = vld [vmem:[%s1290 + $0x107] sm:$0xff]
      %v1308 = vld [vmem:[%s1290 + $0x10f] sm:$0xff]
      %v1309 = vld [vmem:[%s1290 + $0x127] sm:$0xff]
      %v1310 = vld [vmem:[%s1290 + $0x12f] sm:$0xff]
      %v1311 = vld [vmem:[%s1290 + $0x147] sm:$0xff]
      %v1312 = vld [vmem:[%s1290 + $0x14f] sm:$0xff]
      %v1313 = vld [vmem:[%s1290 + $0x167] sm:$0xff]
      %v1314 = vld [vmem:[%s1290 + $0x16f] sm:$0xff]
      %v1315 = vld [vmem:[%s1290 + $0x187] sm:$0xff]
      %v1316 = vld [vmem:[%s1290 + $0x18f] sm:$0xff]
      %v1317 = vld [vmem:[%s1290 + $0x1a7] sm:$0xff]
      %v1318 = vld [vmem:[%s1290 + $0x1af] sm:$0xff]
      %v1319 = vld [vmem:[%s1290 + $0x1c7] sm:$0xff]
      %v1320 = vld [vmem:[%s1290 + $0x1cf] sm:$0xff]
      %v1321 = vld [vmem:[%s1290 + $0x1e7] sm:$0xff]
      %v1322 = vld [vmem:[%s1290 + $0x1ef] sm:$0xff]
      %s1323 = scalar_lea.vmem %s4, 6
      %v1324 = vld [vmem:[%s1323] sm:$0x1]
      %v1326 = vperm.slane %v1324, 0
      %v1328 = vmul.f32 %v1291, %v1326
      %v1329 = vmul.f32 %v1292, %v1326
      %v1330 = vmul.f32 %v1293, %v1326
      %v1331 = vmul.f32 %v1294, %v1326
      %v1332 = vmul.f32 %v1295, %v1326
      %v1333 = vmul.f32 %v1296, %v1326
      %v1334 = vmul.f32 %v1297, %v1326
      %v1335 = vmul.f32 %v1298, %v1326
      %v1336 = vmul.f32 %v1299, %v1326
      %v1337 = vmul.f32 %v1300, %v1326
      %v1338 = vmul.f32 %v1301, %v1326
      %v1339 = vmul.f32 %v1302, %v1326
      %v1340 = vmul.f32 %v1303, %v1326
      %v1341 = vmul.f32 %v1304, %v1326
      %v1342 = vmul.f32 %v1305, %v1326
      %v1343 = vmul.f32 %v1306, %v1326
      %v1344 = vmul.f32 %v1307, %v1326
      %v1345 = vmul.f32 %v1308, %v1326
      %v1346 = vmul.f32 %v1309, %v1326
      %v1347 = vmul.f32 %v1310, %v1326
      %v1348 = vmul.f32 %v1311, %v1326
      %v1349 = vmul.f32 %v1312, %v1326
      %v1350 = vmul.f32 %v1313, %v1326
      %v1351 = vmul.f32 %v1314, %v1326
      %v1352 = vmul.f32 %v1315, %v1326
      %v1353 = vmul.f32 %v1316, %v1326
      %v1354 = vmul.f32 %v1317, %v1326
      %v1355 = vmul.f32 %v1318, %v1326
      %v1356 = vmul.f32 %v1319, %v1326
      %v1357 = vmul.f32 %v1320, %v1326
      %v1358 = vmul.f32 %v1321, %v1326
      %v1359 = vmul.f32 %v1322, %v1326
      %v1360 = vadd.f32 %v1258, %v1328
      %v1361 = vadd.f32 %v1259, %v1329
      %v1362 = vadd.f32 %v1260, %v1330
      %v1363 = vadd.f32 %v1261, %v1331
      %v1364 = vadd.f32 %v1262, %v1332
      %v1365 = vadd.f32 %v1263, %v1333
      %v1366 = vadd.f32 %v1264, %v1334
      %v1367 = vadd.f32 %v1265, %v1335
      %v1368 = vadd.f32 %v1266, %v1336
      %v1369 = vadd.f32 %v1267, %v1337
      %v1370 = vadd.f32 %v1268, %v1338
      %v1371 = vadd.f32 %v1269, %v1339
      %v1372 = vadd.f32 %v1270, %v1340
      %v1373 = vadd.f32 %v1271, %v1341
      %v1374 = vadd.f32 %v1272, %v1342
      %v1375 = vadd.f32 %v1273, %v1343
      %v1376 = vadd.f32 %v1274, %v1344
      %v1377 = vadd.f32 %v1275, %v1345
      %v1378 = vadd.f32 %v1276, %v1346
      %v1379 = vadd.f32 %v1277, %v1347
      %v1380 = vadd.f32 %v1278, %v1348
      %v1381 = vadd.f32 %v1279, %v1349
      %v1382 = vadd.f32 %v1280, %v1350
      %v1383 = vadd.f32 %v1281, %v1351
      %v1384 = vadd.f32 %v1282, %v1352
      %v1385 = vadd.f32 %v1283, %v1353
      %v1386 = vadd.f32 %v1284, %v1354
      %v1387 = vadd.f32 %v1285, %v1355
      %v1388 = vadd.f32 %v1286, %v1356
      %v1389 = vadd.f32 %v1287, %v1357
      %v1390 = vadd.f32 %v1288, %v1358
      %v1391 = vadd.f32 %v1289, %v1359
      %v1392 = vld [vmem:[%s1290 + $0x8] sm:$0xff]
      %v1393 = vld [vmem:[%s1290 + $0x10] sm:$0xff]
      %v1394 = vld [vmem:[%s1290 + $0x28] sm:$0xff]
      %v1395 = vld [vmem:[%s1290 + $0x30] sm:$0xff]
      %v1396 = vld [vmem:[%s1290 + $0x48] sm:$0xff]
      %v1397 = vld [vmem:[%s1290 + $0x50] sm:$0xff]
      %v1398 = vld [vmem:[%s1290 + $0x68] sm:$0xff]
      %v1399 = vld [vmem:[%s1290 + $0x70] sm:$0xff]
      %v1400 = vld [vmem:[%s1290 + $0x88] sm:$0xff]
      %v1401 = vld [vmem:[%s1290 + $0x90] sm:$0xff]
      %v1402 = vld [vmem:[%s1290 + $0xa8] sm:$0xff]
      %v1403 = vld [vmem:[%s1290 + $0xb0] sm:$0xff]
      %v1404 = vld [vmem:[%s1290 + $0xc8] sm:$0xff]
      %v1405 = vld [vmem:[%s1290 + $0xd0] sm:$0xff]
      %v1406 = vld [vmem:[%s1290 + $0xe8] sm:$0xff]
      %v1407 = vld [vmem:[%s1290 + $0xf0] sm:$0xff]
      %v1408 = vld [vmem:[%s1290 + $0x108] sm:$0xff]
      %v1409 = vld [vmem:[%s1290 + $0x110] sm:$0xff]
      %v1410 = vld [vmem:[%s1290 + $0x128] sm:$0xff]
      %v1411 = vld [vmem:[%s1290 + $0x130] sm:$0xff]
      %v1412 = vld [vmem:[%s1290 + $0x148] sm:$0xff]
      %v1413 = vld [vmem:[%s1290 + $0x150] sm:$0xff]
      %v1414 = vld [vmem:[%s1290 + $0x168] sm:$0xff]
      %v1415 = vld [vmem:[%s1290 + $0x170] sm:$0xff]
      %v1416 = vld [vmem:[%s1290 + $0x188] sm:$0xff]
      %v1417 = vld [vmem:[%s1290 + $0x190] sm:$0xff]
      %v1418 = vld [vmem:[%s1290 + $0x1a8] sm:$0xff]
      %v1419 = vld [vmem:[%s1290 + $0x1b0] sm:$0xff]
      %v1420 = vld [vmem:[%s1290 + $0x1c8] sm:$0xff]
      %v1421 = vld [vmem:[%s1290 + $0x1d0] sm:$0xff]
      %v1422 = vld [vmem:[%s1290 + $0x1e8] sm:$0xff]
      %v1423 = vld [vmem:[%s1290 + $0x1f0] sm:$0xff]
      %s1424 = scalar_lea.vmem %s4, 7
      %v1425 = vld [vmem:[%s1424] sm:$0x1]
      %v1427 = vperm.slane %v1425, 0
      %v1429 = vmul.f32 %v1392, %v1427
      %v1430 = vmul.f32 %v1393, %v1427
      %v1431 = vmul.f32 %v1394, %v1427
      %v1432 = vmul.f32 %v1395, %v1427
      %v1433 = vmul.f32 %v1396, %v1427
      %v1434 = vmul.f32 %v1397, %v1427
      %v1435 = vmul.f32 %v1398, %v1427
      %v1436 = vmul.f32 %v1399, %v1427
      %v1437 = vmul.f32 %v1400, %v1427
      %v1438 = vmul.f32 %v1401, %v1427
      %v1439 = vmul.f32 %v1402, %v1427
      %v1440 = vmul.f32 %v1403, %v1427
      %v1441 = vmul.f32 %v1404, %v1427
      %v1442 = vmul.f32 %v1405, %v1427
      %v1443 = vmul.f32 %v1406, %v1427
      %v1444 = vmul.f32 %v1407, %v1427
      %v1445 = vmul.f32 %v1408, %v1427
      %v1446 = vmul.f32 %v1409, %v1427
      %v1447 = vmul.f32 %v1410, %v1427
      %v1448 = vmul.f32 %v1411, %v1427
      %v1449 = vmul.f32 %v1412, %v1427
      %v1450 = vmul.f32 %v1413, %v1427
      %v1451 = vmul.f32 %v1414, %v1427
      %v1452 = vmul.f32 %v1415, %v1427
      %v1453 = vmul.f32 %v1416, %v1427
      %v1454 = vmul.f32 %v1417, %v1427
      %v1455 = vmul.f32 %v1418, %v1427
      %v1456 = vmul.f32 %v1419, %v1427
      %v1457 = vmul.f32 %v1420, %v1427
      %v1458 = vmul.f32 %v1421, %v1427
      %v1459 = vmul.f32 %v1422, %v1427
      %v1460 = vmul.f32 %v1423, %v1427
      %v1461 = vadd.f32 %v1360, %v1429
      %v1462 = vadd.f32 %v1361, %v1430
      %v1463 = vadd.f32 %v1362, %v1431
      %v1464 = vadd.f32 %v1363, %v1432
      %v1465 = vadd.f32 %v1364, %v1433
      %v1466 = vadd.f32 %v1365, %v1434
      %v1467 = vadd.f32 %v1366, %v1435
      %v1468 = vadd.f32 %v1367, %v1436
      %v1469 = vadd.f32 %v1368, %v1437
      %v1470 = vadd.f32 %v1369, %v1438
      %v1471 = vadd.f32 %v1370, %v1439
      %v1472 = vadd.f32 %v1371, %v1440
      %v1473 = vadd.f32 %v1372, %v1441
      %v1474 = vadd.f32 %v1373, %v1442
      %v1475 = vadd.f32 %v1374, %v1443
      %v1476 = vadd.f32 %v1375, %v1444
      %v1477 = vadd.f32 %v1376, %v1445
      %v1478 = vadd.f32 %v1377, %v1446
      %v1479 = vadd.f32 %v1378, %v1447
      %v1480 = vadd.f32 %v1379, %v1448
      %v1481 = vadd.f32 %v1380, %v1449
      %v1482 = vadd.f32 %v1381, %v1450
      %v1483 = vadd.f32 %v1382, %v1451
      %v1484 = vadd.f32 %v1383, %v1452
      %v1485 = vadd.f32 %v1384, %v1453
      %v1486 = vadd.f32 %v1385, %v1454
      %v1487 = vadd.f32 %v1386, %v1455
      %v1488 = vadd.f32 %v1387, %v1456
      %v1489 = vadd.f32 %v1388, %v1457
      %v1490 = vadd.f32 %v1389, %v1458
      %v1491 = vadd.f32 %v1390, %v1459
      %v1492 = vadd.f32 %v1391, %v1460
      %v1493 = vld [vmem:[%s1290 + $0x9] sm:$0xff]
      %v1494 = vld [vmem:[%s1290 + $0x11] sm:$0xff]
      %v1495 = vld [vmem:[%s1290 + $0x29] sm:$0xff]
      %v1496 = vld [vmem:[%s1290 + $0x31] sm:$0xff]
      %v1497 = vld [vmem:[%s1290 + $0x49] sm:$0xff]
      %v1498 = vld [vmem:[%s1290 + $0x51] sm:$0xff]
      %v1499 = vld [vmem:[%s1290 + $0x69] sm:$0xff]
      %v1500 = vld [vmem:[%s1290 + $0x71] sm:$0xff]
      %v1501 = vld [vmem:[%s1290 + $0x89] sm:$0xff]
      %v1502 = vld [vmem:[%s1290 + $0x91] sm:$0xff]
      %v1503 = vld [vmem:[%s1290 + $0xa9] sm:$0xff]
      %v1504 = vld [vmem:[%s1290 + $0xb1] sm:$0xff]
      %v1505 = vld [vmem:[%s1290 + $0xc9] sm:$0xff]
      %v1506 = vld [vmem:[%s1290 + $0xd1] sm:$0xff]
      %v1507 = vld [vmem:[%s1290 + $0xe9] sm:$0xff]
      %v1508 = vld [vmem:[%s1290 + $0xf1] sm:$0xff]
      %v1509 = vld [vmem:[%s1290 + $0x109] sm:$0xff]
      %v1510 = vld [vmem:[%s1290 + $0x111] sm:$0xff]
      %v1511 = vld [vmem:[%s1290 + $0x129] sm:$0xff]
      %v1512 = vld [vmem:[%s1290 + $0x131] sm:$0xff]
      %v1513 = vld [vmem:[%s1290 + $0x149] sm:$0xff]
      %v1514 = vld [vmem:[%s1290 + $0x151] sm:$0xff]
      %v1515 = vld [vmem:[%s1290 + $0x169] sm:$0xff]
      %v1516 = vld [vmem:[%s1290 + $0x171] sm:$0xff]
      %v1517 = vld [vmem:[%s1290 + $0x189] sm:$0xff]
      %v1518 = vld [vmem:[%s1290 + $0x191] sm:$0xff]
      %v1519 = vld [vmem:[%s1290 + $0x1a9] sm:$0xff]
      %v1520 = vld [vmem:[%s1290 + $0x1b1] sm:$0xff]
      %v1521 = vld [vmem:[%s1290 + $0x1c9] sm:$0xff]
      %v1522 = vld [vmem:[%s1290 + $0x1d1] sm:$0xff]
      %v1523 = vld [vmem:[%s1290 + $0x1e9] sm:$0xff]
      %v1524 = vld [vmem:[%s1290 + $0x1f1] sm:$0xff]
      %s1525 = scalar_lea.vmem %s4, 8
      %v1526 = vld [vmem:[%s1525] sm:$0x1]
      %v1528 = vperm.slane %v1526, 0
      %v1530 = vmul.f32 %v1493, %v1528
      %v1531 = vmul.f32 %v1494, %v1528
      %v1532 = vmul.f32 %v1495, %v1528
      %v1533 = vmul.f32 %v1496, %v1528
      %v1534 = vmul.f32 %v1497, %v1528
      %v1535 = vmul.f32 %v1498, %v1528
      %v1536 = vmul.f32 %v1499, %v1528
      %v1537 = vmul.f32 %v1500, %v1528
      %v1538 = vmul.f32 %v1501, %v1528
      %v1539 = vmul.f32 %v1502, %v1528
      %v1540 = vmul.f32 %v1503, %v1528
      %v1541 = vmul.f32 %v1504, %v1528
      %v1542 = vmul.f32 %v1505, %v1528
      %v1543 = vmul.f32 %v1506, %v1528
      %v1544 = vmul.f32 %v1507, %v1528
      %v1545 = vmul.f32 %v1508, %v1528
      %v1546 = vmul.f32 %v1509, %v1528
      %v1547 = vmul.f32 %v1510, %v1528
      %v1548 = vmul.f32 %v1511, %v1528
      %v1549 = vmul.f32 %v1512, %v1528
      %v1550 = vmul.f32 %v1513, %v1528
      %v1551 = vmul.f32 %v1514, %v1528
      %v1552 = vmul.f32 %v1515, %v1528
      %v1553 = vmul.f32 %v1516, %v1528
      %v1554 = vmul.f32 %v1517, %v1528
      %v1555 = vmul.f32 %v1518, %v1528
      %v1556 = vmul.f32 %v1519, %v1528
      %v1557 = vmul.f32 %v1520, %v1528
      %v1558 = vmul.f32 %v1521, %v1528
      %v1559 = vmul.f32 %v1522, %v1528
      %v1560 = vmul.f32 %v1523, %v1528
      %v1561 = vmul.f32 %v1524, %v1528
      %v1562 = vadd.f32 %v1461, %v1530
      %v1563 = vadd.f32 %v1462, %v1531
      %v1564 = vadd.f32 %v1463, %v1532
      %v1565 = vadd.f32 %v1464, %v1533
      %v1566 = vadd.f32 %v1465, %v1534
      %v1567 = vadd.f32 %v1466, %v1535
      %v1568 = vadd.f32 %v1467, %v1536
      %v1569 = vadd.f32 %v1468, %v1537
      %v1570 = vadd.f32 %v1469, %v1538
      %v1571 = vadd.f32 %v1470, %v1539
      %v1572 = vadd.f32 %v1471, %v1540
      %v1573 = vadd.f32 %v1472, %v1541
      %v1574 = vadd.f32 %v1473, %v1542
      %v1575 = vadd.f32 %v1474, %v1543
      %v1576 = vadd.f32 %v1475, %v1544
      %v1577 = vadd.f32 %v1476, %v1545
      %v1578 = vadd.f32 %v1477, %v1546
      %v1579 = vadd.f32 %v1478, %v1547
      %v1580 = vadd.f32 %v1479, %v1548
      %v1581 = vadd.f32 %v1480, %v1549
      %v1582 = vadd.f32 %v1481, %v1550
      %v1583 = vadd.f32 %v1482, %v1551
      %v1584 = vadd.f32 %v1483, %v1552
      %v1585 = vadd.f32 %v1484, %v1553
      %v1586 = vadd.f32 %v1485, %v1554
      %v1587 = vadd.f32 %v1486, %v1555
      %v1588 = vadd.f32 %v1487, %v1556
      %v1589 = vadd.f32 %v1488, %v1557
      %v1590 = vadd.f32 %v1489, %v1558
      %v1591 = vadd.f32 %v1490, %v1559
      %v1592 = vadd.f32 %v1491, %v1560
      %v1593 = vadd.f32 %v1492, %v1561
      %v1594 = vld [vmem:[%s5] sm:$0x1]
      %v1596 = vperm.slane %v1594, 0
      %v1598 = vmul.f32 %v1562, %v1596
      %v1599 = vmul.f32 %v1563, %v1596
      %v1600 = vmul.f32 %v1564, %v1596
      %v1601 = vmul.f32 %v1565, %v1596
      %v1602 = vmul.f32 %v1566, %v1596
      %v1603 = vmul.f32 %v1567, %v1596
      %v1604 = vmul.f32 %v1568, %v1596
      %v1605 = vmul.f32 %v1569, %v1596
      %v1606 = vmul.f32 %v1570, %v1596
      %v1607 = vmul.f32 %v1571, %v1596
      %v1608 = vmul.f32 %v1572, %v1596
      %v1609 = vmul.f32 %v1573, %v1596
      %v1610 = vmul.f32 %v1574, %v1596
      %v1611 = vmul.f32 %v1575, %v1596
      %v1612 = vmul.f32 %v1576, %v1596
      %v1613 = vmul.f32 %v1577, %v1596
      %v1614 = vmul.f32 %v1578, %v1596
      %v1615 = vmul.f32 %v1579, %v1596
      %v1616 = vmul.f32 %v1580, %v1596
      %v1617 = vmul.f32 %v1581, %v1596
      %v1618 = vmul.f32 %v1582, %v1596
      %v1619 = vmul.f32 %v1583, %v1596
      %v1620 = vmul.f32 %v1584, %v1596
      %v1621 = vmul.f32 %v1585, %v1596
      %v1622 = vmul.f32 %v1586, %v1596
      %v1623 = vmul.f32 %v1587, %v1596
      %v1624 = vmul.f32 %v1588, %v1596
      %v1625 = vmul.f32 %v1589, %v1596
      %v1626 = vmul.f32 %v1590, %v1596
      %v1627 = vmul.f32 %v1591, %v1596
      %v1628 = vmul.f32 %v1592, %v1596
      %v1629 = vmul.f32 %v1593, %v1596
      %v1630 = vld [vmem:[%s6] sm:$0x1]
      %v1632 = vperm.slane %v1630, 0
      %v1634 = vadd.f32 %v1598, %v1632
      %v1635 = vadd.f32 %v1599, %v1632
      %v1636 = vadd.f32 %v1600, %v1632
      %v1637 = vadd.f32 %v1601, %v1632
      %v1638 = vadd.f32 %v1602, %v1632
      %v1639 = vadd.f32 %v1603, %v1632
      %v1640 = vadd.f32 %v1604, %v1632
      %v1641 = vadd.f32 %v1605, %v1632
      %v1642 = vadd.f32 %v1606, %v1632
      %v1643 = vadd.f32 %v1607, %v1632
      %v1644 = vadd.f32 %v1608, %v1632
      %v1645 = vadd.f32 %v1609, %v1632
      %v1646 = vadd.f32 %v1610, %v1632
      %v1647 = vadd.f32 %v1611, %v1632
      %v1648 = vadd.f32 %v1612, %v1632
      %v1649 = vadd.f32 %v1613, %v1632
      %v1650 = vadd.f32 %v1614, %v1632
      %v1651 = vadd.f32 %v1615, %v1632
      %v1652 = vadd.f32 %v1616, %v1632
      %v1653 = vadd.f32 %v1617, %v1632
      %v1654 = vadd.f32 %v1618, %v1632
      %v1655 = vadd.f32 %v1619, %v1632
      %v1656 = vadd.f32 %v1620, %v1632
      %v1657 = vadd.f32 %v1621, %v1632
      %v1658 = vadd.f32 %v1622, %v1632
      %v1659 = vadd.f32 %v1623, %v1632
      %v1660 = vadd.f32 %v1624, %v1632
      %v1661 = vadd.f32 %v1625, %v1632
      %v1662 = vadd.f32 %v1626, %v1632
      %v1663 = vadd.f32 %v1627, %v1632
      %v1664 = vadd.f32 %v1628, %v1632
      %v1665 = vadd.f32 %v1629, %v1632
      %1698 = vrot.lane.b32.xlu0 %v1634, 8
      %v1699 = vpop.permute.xlu0 %1698
      %1700 = vrot.lane.b32.xlu0 %v1635, 8
      %v1701 = vpop.permute.xlu0 %1700
      %1702 = vrot.lane.b32.xlu0 %v1636, 8
      %v1703 = vpop.permute.xlu0 %1702
      %1704 = vrot.lane.b32.xlu0 %v1637, 8
      %v1705 = vpop.permute.xlu0 %1704
      %1706 = vrot.lane.b32.xlu0 %v1638, 8
      %v1707 = vpop.permute.xlu0 %1706
      %1708 = vrot.lane.b32.xlu0 %v1639, 8
      %v1709 = vpop.permute.xlu0 %1708
      %1710 = vrot.lane.b32.xlu0 %v1640, 8
      %v1711 = vpop.permute.xlu0 %1710
      %1712 = vrot.lane.b32.xlu0 %v1641, 8
      %v1713 = vpop.permute.xlu0 %1712
      %1714 = vrot.lane.b32.xlu0 %v1642, 8
      %v1715 = vpop.permute.xlu0 %1714
      %1716 = vrot.lane.b32.xlu0 %v1643, 8
      %v1717 = vpop.permute.xlu0 %1716
      %1718 = vrot.lane.b32.xlu0 %v1644, 8
      %v1719 = vpop.permute.xlu0 %1718
      %1720 = vrot.lane.b32.xlu0 %v1645, 8
      %v1721 = vpop.permute.xlu0 %1720
      %1722 = vrot.lane.b32.xlu0 %v1646, 8
      %v1723 = vpop.permute.xlu0 %1722
      %1724 = vrot.lane.b32.xlu0 %v1647, 8
      %v1725 = vpop.permute.xlu0 %1724
      %1726 = vrot.lane.b32.xlu0 %v1648, 8
      %v1727 = vpop.permute.xlu0 %1726
      %1728 = vrot.lane.b32.xlu0 %v1649, 8
      %v1729 = vpop.permute.xlu0 %1728
      %1730 = vrot.lane.b32.xlu0 %v1650, 8
      %v1731 = vpop.permute.xlu0 %1730
      %1732 = vrot.lane.b32.xlu0 %v1651, 8
      %v1733 = vpop.permute.xlu0 %1732
      %1734 = vrot.lane.b32.xlu0 %v1652, 8
      %v1735 = vpop.permute.xlu0 %1734
      %1736 = vrot.lane.b32.xlu0 %v1653, 8
      %v1737 = vpop.permute.xlu0 %1736
      %1738 = vrot.lane.b32.xlu0 %v1654, 8
      %v1739 = vpop.permute.xlu0 %1738
      %1740 = vrot.lane.b32.xlu0 %v1655, 8
      %v1741 = vpop.permute.xlu0 %1740
      %1742 = vrot.lane.b32.xlu0 %v1656, 8
      %v1743 = vpop.permute.xlu0 %1742
      %1744 = vrot.lane.b32.xlu0 %v1657, 8
      %v1745 = vpop.permute.xlu0 %1744
      %1746 = vrot.lane.b32.xlu0 %v1658, 8
      %v1747 = vpop.permute.xlu0 %1746
      %1748 = vrot.lane.b32.xlu0 %v1659, 8
      %v1749 = vpop.permute.xlu0 %1748
      %1750 = vrot.lane.b32.xlu0 %v1660, 8
      %v1751 = vpop.permute.xlu0 %1750
      %1752 = vrot.lane.b32.xlu0 %v1661, 8
      %v1753 = vpop.permute.xlu0 %1752
      %1754 = vrot.lane.b32.xlu0 %v1662, 8
      %v1755 = vpop.permute.xlu0 %1754
      %1756 = vrot.lane.b32.xlu0 %v1663, 8
      %v1757 = vpop.permute.xlu0 %1756
      %1758 = vrot.lane.b32.xlu0 %v1664, 8
      %v1759 = vpop.permute.xlu0 %1758
      %1760 = vrot.lane.b32.xlu0 %v1665, 8
      %v1761 = vpop.permute.xlu0 %1760
      %v1794 = vsel %vm642, %v610, %v1699
      %v1795 = vsel %vm642, %v611, %v1701
      %v1796 = vsel %vm642, %v612, %v1703
      %v1797 = vsel %vm642, %v613, %v1705
      %v1798 = vsel %vm642, %v614, %v1707
      %v1799 = vsel %vm642, %v615, %v1709
      %v1800 = vsel %vm642, %v616, %v1711
      %v1801 = vsel %vm642, %v617, %v1713
      %v1802 = vsel %vm642, %v618, %v1715
      %v1803 = vsel %vm642, %v619, %v1717
      %v1804 = vsel %vm642, %v620, %v1719
      %v1805 = vsel %vm642, %v621, %v1721
      %v1806 = vsel %vm642, %v622, %v1723
      %v1807 = vsel %vm642, %v623, %v1725
      %v1808 = vsel %vm642, %v624, %v1727
      %v1809 = vsel %vm642, %v625, %v1729
      %v1810 = vsel %vm642, %v626, %v1731
      %v1811 = vsel %vm642, %v627, %v1733
      %v1812 = vsel %vm642, %v628, %v1735
      %v1813 = vsel %vm642, %v629, %v1737
      %v1814 = vsel %vm642, %v630, %v1739
      %v1815 = vsel %vm642, %v631, %v1741
      %v1816 = vsel %vm642, %v632, %v1743
      %v1817 = vsel %vm642, %v633, %v1745
      %v1818 = vsel %vm642, %v634, %v1747
      %v1819 = vsel %vm642, %v635, %v1749
      %v1820 = vsel %vm642, %v636, %v1751
      %v1821 = vsel %vm642, %v637, %v1753
      %v1822 = vsel %vm642, %v638, %v1755
      %v1823 = vsel %vm642, %v639, %v1757
      %v1824 = vsel %vm642, %v640, %v1759
      %v1825 = vsel %vm642, %v641, %v1761
      %v1826 = vld [vmem:[%s320] sm:$0xff]
      %v1827 = vld [vmem:[%s320 + $0x8] sm:$0xff]
      %v1828 = vld [vmem:[%s320 + $0x10] sm:$0xff]
      %v1829 = vld [vmem:[%s320 + $0x18] sm:$0xff]
      %v1830 = vld [vmem:[%s320 + $0x20] sm:$0xff]
      %v1831 = vld [vmem:[%s320 + $0x28] sm:$0xff]
      %v1832 = vld [vmem:[%s320 + $0x30] sm:$0xff]
      %v1833 = vld [vmem:[%s320 + $0x38] sm:$0xff]
      %v1834 = vld [vmem:[%s320 + $0x40] sm:$0xff]
      %v1835 = vld [vmem:[%s320 + $0x48] sm:$0xff]
      %v1836 = vld [vmem:[%s320 + $0x50] sm:$0xff]
      %v1837 = vld [vmem:[%s320 + $0x58] sm:$0xff]
      %v1838 = vld [vmem:[%s320 + $0x60] sm:$0xff]
      %v1839 = vld [vmem:[%s320 + $0x68] sm:$0xff]
      %v1840 = vld [vmem:[%s320 + $0x70] sm:$0xff]
      %v1841 = vld [vmem:[%s320 + $0x78] sm:$0xff]
      %v1842 = vld [vmem:[%s320 + $0x80] sm:$0xff]
      %v1843 = vld [vmem:[%s320 + $0x88] sm:$0xff]
      %v1844 = vld [vmem:[%s320 + $0x90] sm:$0xff]
      %v1845 = vld [vmem:[%s320 + $0x98] sm:$0xff]
      %v1846 = vld [vmem:[%s320 + $0xa0] sm:$0xff]
      %v1847 = vld [vmem:[%s320 + $0xa8] sm:$0xff]
      %v1848 = vld [vmem:[%s320 + $0xb0] sm:$0xff]
      %v1849 = vld [vmem:[%s320 + $0xb8] sm:$0xff]
      %v1850 = vld [vmem:[%s320 + $0xc0] sm:$0xff]
      %v1851 = vld [vmem:[%s320 + $0xc8] sm:$0xff]
      %v1852 = vld [vmem:[%s320 + $0xd0] sm:$0xff]
      %v1853 = vld [vmem:[%s320 + $0xd8] sm:$0xff]
      %v1854 = vld [vmem:[%s320 + $0xe0] sm:$0xff]
      %v1855 = vld [vmem:[%s320 + $0xe8] sm:$0xff]
      %v1856 = vld [vmem:[%s320 + $0xf0] sm:$0xff]
      %v1857 = vld [vmem:[%s320 + $0xf8] sm:$0xff]
      %v1858 = vadd.f32 %v1794, %v1826
      %v1859 = vadd.f32 %v1795, %v1827
      %v1860 = vadd.f32 %v1796, %v1828
      %v1861 = vadd.f32 %v1797, %v1829
      %v1862 = vadd.f32 %v1798, %v1830
      %v1863 = vadd.f32 %v1799, %v1831
      %v1864 = vadd.f32 %v1800, %v1832
      %v1865 = vadd.f32 %v1801, %v1833
      %v1866 = vadd.f32 %v1802, %v1834
      %v1867 = vadd.f32 %v1803, %v1835
      %v1868 = vadd.f32 %v1804, %v1836
      %v1869 = vadd.f32 %v1805, %v1837
      %v1870 = vadd.f32 %v1806, %v1838
      %v1871 = vadd.f32 %v1807, %v1839
      %v1872 = vadd.f32 %v1808, %v1840
      %v1873 = vadd.f32 %v1809, %v1841
      %v1874 = vadd.f32 %v1810, %v1842
      %v1875 = vadd.f32 %v1811, %v1843
      %v1876 = vadd.f32 %v1812, %v1844
      %v1877 = vadd.f32 %v1813, %v1845
      %v1878 = vadd.f32 %v1814, %v1846
      %v1879 = vadd.f32 %v1815, %v1847
      %v1880 = vadd.f32 %v1816, %v1848
      %v1881 = vadd.f32 %v1817, %v1849
      %v1882 = vadd.f32 %v1818, %v1850
      %v1883 = vadd.f32 %v1819, %v1851
      %v1884 = vadd.f32 %v1820, %v1852
      %v1885 = vadd.f32 %v1821, %v1853
      %v1886 = vadd.f32 %v1822, %v1854
      %v1887 = vadd.f32 %v1823, %v1855
      %v1888 = vadd.f32 %v1824, %v1856
      %v1889 = vadd.f32 %v1825, %v1857
      %1890 = vst.msk [vmem:[%s325] sm:$0xff] %vm360, %v1858
      %1891 = vst.msk [vmem:[%s325 + $0x8] sm:$0xff] %vm360, %v1859
      %1892 = vst.msk [vmem:[%s325 + $0x10] sm:$0xff] %vm360, %v1860
      %1893 = vst.msk [vmem:[%s325 + $0x18] sm:$0xff] %vm360, %v1861
      %1894 = vst.msk [vmem:[%s325 + $0x20] sm:$0xff] %vm360, %v1862
      %1895 = vst.msk [vmem:[%s325 + $0x28] sm:$0xff] %vm360, %v1863
      %1896 = vst.msk [vmem:[%s325 + $0x30] sm:$0xff] %vm360, %v1864
      %1897 = vst.msk [vmem:[%s325 + $0x38] sm:$0xff] %vm360, %v1865
      %1898 = vst.msk [vmem:[%s325 + $0x40] sm:$0xff] %vm360, %v1866
      %1899 = vst.msk [vmem:[%s325 + $0x48] sm:$0xff] %vm360, %v1867
      %1900 = vst.msk [vmem:[%s325 + $0x50] sm:$0xff] %vm360, %v1868
      %1901 = vst.msk [vmem:[%s325 + $0x58] sm:$0xff] %vm360, %v1869
      %1902 = vst.msk [vmem:[%s325 + $0x60] sm:$0xff] %vm360, %v1870
      %1903 = vst.msk [vmem:[%s325 + $0x68] sm:$0xff] %vm360, %v1871
      %1904 = vst.msk [vmem:[%s325 + $0x70] sm:$0xff] %vm360, %v1872
      %1905 = vst.msk [vmem:[%s325 + $0x78] sm:$0xff] %vm360, %v1873
      %1906 = vst.msk [vmem:[%s325 + $0x80] sm:$0xff] %vm360, %v1874
      %1907 = vst.msk [vmem:[%s325 + $0x88] sm:$0xff] %vm360, %v1875
      %1908 = vst.msk [vmem:[%s325 + $0x90] sm:$0xff] %vm360, %v1876
      %1909 = vst.msk [vmem:[%s325 + $0x98] sm:$0xff] %vm360, %v1877
      %1910 = vst.msk [vmem:[%s325 + $0xa0] sm:$0xff] %vm360, %v1878
      %1911 = vst.msk [vmem:[%s325 + $0xa8] sm:$0xff] %vm360, %v1879
      %1912 = vst.msk [vmem:[%s325 + $0xb0] sm:$0xff] %vm360, %v1880
      %1913 = vst.msk [vmem:[%s325 + $0xb8] sm:$0xff] %vm360, %v1881
      %1914 = vst.msk [vmem:[%s325 + $0xc0] sm:$0xff] %vm360, %v1882
      %1915 = vst.msk [vmem:[%s325 + $0xc8] sm:$0xff] %vm360, %v1883
      %1916 = vst.msk [vmem:[%s325 + $0xd0] sm:$0xff] %vm360, %v1884
      %1917 = vst.msk [vmem:[%s325 + $0xd8] sm:$0xff] %vm360, %v1885
      %1918 = vst.msk [vmem:[%s325 + $0xe0] sm:$0xff] %vm360, %v1886
      %1919 = vst.msk [vmem:[%s325 + $0xe8] sm:$0xff] %vm360, %v1887
      %1920 = vst.msk [vmem:[%s325 + $0xf0] sm:$0xff] %vm360, %v1888
      %1921 = vst.msk [vmem:[%s325 + $0xf8] sm:$0xff] %vm360, %v1889
      %p1922 = scmp.lt.s32.totalorder %s19, 1
      %s1923 = scalar_select %p1922, %s19, 1
      %s1924 = smul.addr %s1923, 32
      %s1925 = smul.addr %s1924, 8
      %s1926 = scalar_lea.vmem %s8, %s1925
      // Predicated region
      $region53: #{ghost_bottleneck_nchw.3} parent=51 // pred_check
        %p1927 = pneg %p215
      $region54: #{ghost_bottleneck_nchw.3} parent=51 // pred_check_branch
        %1929 = sbr.rel (%p1927) target = $region56
      $region55: #{ghost_bottleneck_nchw.3} parent=51 // pred_region
        _
      $region56: #{ghost_bottleneck_nchw.3} parent=51 // pred_fallthru
        _
    $region52: #{ghost_bottleneck_nchw.3} parent=5 // pred_fallthru
      _
    %p1930 = scmp.le.s32.totalorder 2, %s14
    // Predicated region
    $region57: #{ghost_bottleneck_nchw.3} parent=5 // pred_check
      %p1931 = pneg %p1930
    $region58: #{ghost_bottleneck_nchw.3} parent=5 // pred_check_branch
      %1933 = sbr.rel (%p1931) target = $region60
    $region59: #{ghost_bottleneck_nchw.3} parent=5 // pred_region
      %s1934 = ssub.s32 %s14, 2
      // Predicated region
      $region61: #{ghost_bottleneck_nchw.3} parent=59 // pred_check
        %p1935 = pneg %p221
      $region62: #{ghost_bottleneck_nchw.3} parent=59 // pred_check_branch
        %1937 = sbr.rel (%p1935) target = $region64
      $region63: #{ghost_bottleneck_nchw.3} parent=59 // pred_region
        %p1938 = scmp.lt.s32.totalorder %s20, 1
        %s1939 = scalar_select %p1938, %s20, 1
        %s1940 = smul.addr %s1939, 32
        %s1941 = smul.addr %s1940, 8
        %s1942 = scalar_lea.vmem %s8, %s1941
      $region64: #{ghost_bottleneck_nchw.3} parent=59 // pred_fallthru
        _
    $region60: #{ghost_bottleneck_nchw.3} parent=5 // pred_fallthru
      _
  $region6: #{ghost_bottleneck_nchw.3} parent=0 // loop_footer
    %s18 = sadd.s32 1, %s14
  $region7: #{ghost_bottleneck_nchw.3} parent=0 // loop_footer_branch
    %13 = sbr.rel target = $region3
  $region8: #{ghost_bottleneck_nchw.3} parent=0 // loop_exit
    _

</llo_original>
